<compile_context>
chip_gen: v5e
topology: v5e:2x2
jax: 0.10.0
libtpu: 0.0.40
codegen_flags: <defaults>
</compile_context>

<pallas_src>
import math

import jax
import jax.numpy as jnp
from jax.experimental import pallas as pl
from jax.experimental.pallas import tpu as pltpu

# ---------------------------------------------------------------------------
# Small synthetic BERT config (the real module loads a pretrained checkpoint;
# here the parameters are deterministically initialized in-script).
# ---------------------------------------------------------------------------
BATCH = 2
SEQ = 8
VOCAB = 100
HIDDEN = 32
NUM_LAYERS = 2
NUM_HEADS = 2
HEAD_DIM = HIDDEN // NUM_HEADS
INTERMEDIATE = 64
MAX_POS = 64
NUM_LABELS = 8
LN_EPS = 1e-12
ATTN_SCALE = 1.0 / math.sqrt(HEAD_DIM)


# ---------------------------------------------------------------------------
# In-kernel helpers (traced inside the Pallas kernels)
# ---------------------------------------------------------------------------
def _layernorm(x, g, b):
    mu = jnp.mean(x, axis=-1, keepdims=True)
    xc = x - mu
    var = jnp.mean(xc * xc, axis=-1, keepdims=True)
    return xc * jax.lax.rsqrt(var + LN_EPS) * g + b


def _gelu(x):
    # TODO(synk): HF BERT default is exact (erf) GELU; tanh approximation kept
    # here for robust Mosaic lowering.
    return 0.5 * x * (1.0 + jnp.tanh(0.7978845608028654 * (x + 0.044715 * x * x * x)))


def _bf16_dot(x, w_bf16, b_f32):
    """x(f32) @ w(bf16) with f32 accumulate, + f32 bias."""
    y = jnp.dot(x.astype(jnp.bfloat16), w_bf16, preferred_element_type=jnp.float32)
    return y + b_f32


# ---------------------------------------------------------------------------
# Fused encoder + classifier kernel (one grid step == one batch element)
# ---------------------------------------------------------------------------
def fused_encoder_kernel(emb_ref, bias_ref, eg_ref, eb_ref,
                         qkvw_ref, qkvb_ref, aow_ref, aob_ref, ag_ref, ab_ref,
                         iw_ref, ib_ref, ow_ref, ob_ref, og_ref, obb_ref,
                         cw_ref, cb_ref, logits_ref):
    bias = bias_ref[0]                                   # (1, S) additive mask
    x = _layernorm(emb_ref[0], eg_ref[...], eb_ref[...])  # (S, H), f32

    for l in range(NUM_LAYERS):                           # static unroll
        # ---- self-attention (fused QKV GEMM, per-head attention in-kernel) ----
        qkv = _bf16_dot(x, qkvw_ref[l], qkvb_ref[l])      # (S, 3H)
        ctx_heads = []
        for h in range(NUM_HEADS):                        # static unroll
            q = qkv[:, h * HEAD_DIM:(h + 1) * HEAD_DIM].astype(jnp.bfloat16)
            k = qkv[:, HIDDEN + h * HEAD_DIM:HIDDEN + (h + 1) * HEAD_DIM].astype(jnp.bfloat16)
            v = qkv[:, 2 * HIDDEN + h * HEAD_DIM:2 * HIDDEN + (h + 1) * HEAD_DIM].astype(jnp.bfloat16)
            # q @ k^T without materializing a transpose (NT dot on the MXU)
            s = jax.lax.dot_general(q, k, (((1,), (1,)), ((), ())),
                                    preferred_element_type=jnp.float32)
            s = s * ATTN_SCALE + bias                     # (S, S)
            s = s - jnp.max(s, axis=-1, keepdims=True)
            p = jnp.exp(s)
            p = p * pl.reciprocal(jnp.sum(p, axis=-1, keepdims=True), approx=True)
            ctx_heads.append(jnp.dot(p.astype(jnp.bfloat16), v,
                                     preferred_element_type=jnp.float32))
        ctx = jnp.concatenate(ctx_heads, axis=-1)         # (S, H)

        attn_out = _bf16_dot(ctx, aow_ref[l], aob_ref[l])
        x = _layernorm(attn_out + x, ag_ref[l], ab_ref[l])

        # ---- feed-forward ----
        inter = _gelu(_bf16_dot(x, iw_ref[l], ib_ref[l]))
        ffn = _bf16_dot(inter, ow_ref[l], ob_ref[l])
        x = _layernorm(ffn + x, og_ref[l], obb_ref[l])

    # classifier (dropout is identity in eval)
    logits_ref[0] = _bf16_dot(x, cw_ref[...], cb_ref[...])


def fused_encoder(emb, att_bias, p):
    """emb:(B,S,H) f32, att_bias:(B,1,S) f32 -> logits:(B,S,NUM_LABELS) f32."""
    B = emb.shape[0]

    def ib(b):
        return (b, 0, 0)

    def z2(b):
        return (0, 0)

    def z3(b):
        return (0, 0, 0)

    in_specs = [
        pl.BlockSpec((1, SEQ, HIDDEN), ib),                      # emb
        pl.BlockSpec((1, 1, SEQ), ib),                           # attention bias
        pl.BlockSpec((1, HIDDEN), z2),                           # emb LN gamma
        pl.BlockSpec((1, HIDDEN), z2),                           # emb LN beta
        pl.BlockSpec((NUM_LAYERS, HIDDEN, 3 * HIDDEN), z3),      # qkv_w (bf16)
        pl.BlockSpec((NUM_LAYERS, 1, 3 * HIDDEN), z3),           # qkv_b
        pl.BlockSpec((NUM_LAYERS, HIDDEN, HIDDEN), z3),          # ao_w (bf16)
        pl.BlockSpec((NUM_LAYERS, 1, HIDDEN), z3),               # ao_b
        pl.BlockSpec((NUM_LAYERS, 1, HIDDEN), z3),               # attn LN gamma
        pl.BlockSpec((NUM_LAYERS, 1, HIDDEN), z3),               # attn LN beta
        pl.BlockSpec((NUM_LAYERS, HIDDEN, INTERMEDIATE), z3),    # i_w (bf16)
        pl.BlockSpec((NUM_LAYERS, 1, INTERMEDIATE), z3),         # i_b
        pl.BlockSpec((NUM_LAYERS, INTERMEDIATE, HIDDEN), z3),    # o_w (bf16)
        pl.BlockSpec((NUM_LAYERS, 1, HIDDEN), z3),               # o_b
        pl.BlockSpec((NUM_LAYERS, 1, HIDDEN), z3),               # out LN gamma
        pl.BlockSpec((NUM_LAYERS, 1, HIDDEN), z3),               # out LN beta
        pl.BlockSpec((HIDDEN, NUM_LABELS), z2),                  # cls_w (bf16)
        pl.BlockSpec((1, NUM_LABELS), z2),                       # cls_b
    ]
    return pl.pallas_call(
        fused_encoder_kernel,
        out_shape=jax.ShapeDtypeStruct((B, SEQ, NUM_LABELS), jnp.float32),
        grid=(B,),
        in_specs=in_specs,
        out_specs=pl.BlockSpec((1, SEQ, NUM_LABELS), ib),
        compiler_params=pltpu.CompilerParams(dimension_semantics=("parallel",)),
    )(emb, att_bias, p["emb_ln_g"], p["emb_ln_b"],
      p["qkv_w"], p["qkv_b"], p["ao_w"], p["ao_b"], p["aln_g"], p["aln_b"],
      p["i_w"], p["i_b"], p["o_w"], p["o_b"], p["oln_g"], p["oln_b"],
      p["cls_w"], p["cls_b"])


# ---------------------------------------------------------------------------
# CRF log-likelihood kernel (torchcrf semantics, batch_first, reduction='sum')
# ---------------------------------------------------------------------------
def crf_kernel(em_ref, tags_ref, mask_ref, start_ref, trans_ref, end_ref, llh_ref):
    """em:(B,S,L) tags:(B,S)i32 mask:(B,S)f32 start,end:(1,L) trans:(L,L) -> (B,1)."""
    B, S, L = em_ref.shape
    start = start_ref[...]
    trans = trans_ref[...]
    end = end_ref[...]
    trans_b = trans[None, :, :]                                   # hoisted broadcast

    lane = jax.lax.broadcasted_iota(jnp.int32, (B, L), 1)         # (B, L)

    def onehot(idx_b1):                                           # (B,1)i32 -> (B,L)f32
        return (lane == idx_b1).astype(jnp.float32)

    # t = 0 (torchcrf requires mask[:, 0] == 1)
    em0 = em_ref[:, 0, :]                                         # (B, L)
    oh0 = onehot(tags_ref[:, 0:1])
    alpha = start + em0                                           # (B, L)
    num = jnp.sum(alpha * oh0, axis=-1, keepdims=True)            # (B, 1)

    for i in range(1, S):                                         # static unroll, S=8
        em_i = em_ref[:, i, :]                                    # (B, L)
        oh_i = onehot(tags_ref[:, i:i + 1])
        oh_p = onehot(tags_ref[:, i - 1:i])
        m_i = mask_ref[:, i:i + 1]                                # (B, 1)

        # numerator: transition + emission score at the gold tags
        trans_row = jnp.dot(oh_p, trans, preferred_element_type=jnp.float32)
        t_score = jnp.sum(trans_row * oh_i, axis=-1, keepdims=True)
        e_score = jnp.sum(em_i * oh_i, axis=-1, keepdims=True)
        num = num + (t_score + e_score) * m_i

        # denominator: forward algorithm (logsumexp over previous tag)
        nxt = alpha[:, :, None] + trans_b + em_i[:, None, :]      # (B, L, L)
        m = jnp.max(nxt, axis=1, keepdims=True)                   # (B, 1, L)
        nxt = jnp.log(jnp.sum(jnp.exp(nxt - m), axis=1)) + m[:, 0, :]
        alpha = jnp.where(m_i > 0.0, nxt, alpha)

    # end transitions at the last valid position
    mask = mask_ref[...]
    tags = tags_ref[...]
    seq_len = jnp.sum(mask, axis=1, keepdims=True)
    last_idx = (seq_len - 1.0).astype(jnp.int32)                  # (B, 1)
    s_iota = jax.lax.broadcasted_iota(jnp.int32, (B, S), 1)
    sel = (s_iota == last_idx).astype(jnp.int32)
    last_tags = jnp.sum(tags * sel, axis=1, keepdims=True)        # (B, 1)
    num = num + jnp.sum(end * onehot(last_tags), axis=-1, keepdims=True)

    alpha = alpha + end
    m = jnp.max(alpha, axis=-1, keepdims=True)
    denom = jnp.log(jnp.sum(jnp.exp(alpha - m), axis=-1, keepdims=True)) + m

    llh_ref[...] = num - denom


def crf_log_likelihood(emissions, tags, mask_f, start, trans, end):
    vmem = pl.BlockSpec(memory_space=pltpu.MemorySpace.VMEM)
    return pl.pallas_call(
        crf_kernel,
        out_shape=jax.ShapeDtypeStruct((emissions.shape[0], 1), jnp.float32),
        in_specs=[vmem] * 6,
        out_specs=vmem,
    )(emissions, tags, mask_f, start.reshape(1, NUM_LABELS), trans,
      end.reshape(1, NUM_LABELS))


# ---------------------------------------------------------------------------
# Parameters (deterministic synthetic init; per-layer weights stacked)
# ---------------------------------------------------------------------------
def init_params(key):
    ks = iter(jax.random.split(key, 64))

    def nrm(shape, scale=0.02):
        return jax.random.normal(next(ks), shape, jnp.float32) * scale

    def uni(shape, lim=0.1):
        return jax.random.uniform(next(ks), shape, jnp.float32, -lim, lim)

    return {
        "word_emb": nrm((VOCAB, HIDDEN)),
        "pos_emb": nrm((MAX_POS, HIDDEN)),
        "type_emb": nrm((2, HIDDEN)),
        "emb_ln_g": jnp.ones((1, HIDDEN), jnp.float32),
        "emb_ln_b": jnp.zeros((1, HIDDEN), jnp.float32),
        # matmul weights stored bf16 (f32 accumulation in-kernel); fused QKV.
        "qkv_w": nrm((NUM_LAYERS, HIDDEN, 3 * HIDDEN)).astype(jnp.bfloat16),
        "qkv_b": jnp.zeros((NUM_LAYERS, 1, 3 * HIDDEN), jnp.float32),
        "ao_w": nrm((NUM_LAYERS, HIDDEN, HIDDEN)).astype(jnp.bfloat16),
        "ao_b": jnp.zeros((NUM_LAYERS, 1, HIDDEN), jnp.float32),
        "aln_g": jnp.ones((NUM_LAYERS, 1, HIDDEN), jnp.float32),
        "aln_b": jnp.zeros((NUM_LAYERS, 1, HIDDEN), jnp.float32),
        "i_w": nrm((NUM_LAYERS, HIDDEN, INTERMEDIATE)).astype(jnp.bfloat16),
        "i_b": jnp.zeros((NUM_LAYERS, 1, INTERMEDIATE), jnp.float32),
        "o_w": nrm((NUM_LAYERS, INTERMEDIATE, HIDDEN)).astype(jnp.bfloat16),
        "o_b": jnp.zeros((NUM_LAYERS, 1, HIDDEN), jnp.float32),
        "oln_g": jnp.ones((NUM_LAYERS, 1, HIDDEN), jnp.float32),
        "oln_b": jnp.zeros((NUM_LAYERS, 1, HIDDEN), jnp.float32),
        "cls_w": nrm((HIDDEN, NUM_LABELS)).astype(jnp.bfloat16),
        "cls_b": jnp.zeros((1, NUM_LABELS), jnp.float32),
        "crf_start": uni((NUM_LABELS,)),
        "crf_end": uni((NUM_LABELS,)),
        "crf_trans": uni((NUM_LABELS, NUM_LABELS)),
    }


# ---------------------------------------------------------------------------
# Forward pass (mirrors BertCrfForNer.forward)
# ---------------------------------------------------------------------------
def bert_crf_forward(params, input_ids, labels=None):
    # attention_mask = torch.ne(input_ids, 0)
    mask_f = (input_ids != 0).astype(jnp.float32)                  # (B, S)
    att_bias = ((1.0 - mask_f) * -10000.0)[:, None, :]             # (B, 1, S)

    # Embeddings: word + position + token_type(=0). Gather done at XLA level.
    emb = (jnp.take(params["word_emb"], input_ids, axis=0)
           + params["pos_emb"][:SEQ][None, :, :]
           + params["type_emb"][0][None, None, :]).astype(jnp.float32)

    # Fused: embedding LayerNorm -> all encoder layers -> classifier.
    logits = fused_encoder(emb, att_bias, params)                  # (B, S, L)

    outputs = (logits,)
    if labels is not None:
        llh = crf_log_likelihood(logits, labels.astype(jnp.int32), mask_f,
                                 params["crf_start"], params["crf_trans"],
                                 params["crf_end"])
        loss = jnp.sum(llh)            # torchcrf default reduction='sum'
        outputs = (-1.0 * loss,) + outputs
    return outputs


# ---------------------------------------------------------------------------
if __name__ == "__main__":
    key = jax.random.PRNGKey(0)
    k_param, k_ids, k_lab = jax.random.split(key, 3)

    params = init_params(k_param)

    # input_ids: token 0 is padding; keep position 0 non-pad (CRF requirement).
    input_ids = jax.random.randint(k_ids, (BATCH, SEQ), 1, VOCAB).astype(jnp.int32)
    input_ids = input_ids.at[1, 6:].set(0)   # trailing padding in second sequence
    labels = jax.random.randint(k_lab, (BATCH, SEQ), 0, NUM_LABELS).astype(jnp.int32)

    fwd = jax.jit(bert_crf_forward)
    neg_loss, logits = fwd(params, input_ids, labels)
    jax.block_until_ready((neg_loss, logits))

    assert logits.shape == (BATCH, SEQ, NUM_LABELS)
    assert bool(jnp.isfinite(neg_loss)) and bool(jnp.all(jnp.isfinite(logits)))
    print("KERNEL_OK")
</pallas_src>

<mosaic_0001>
module attributes {stable_mosaic.version = 11 : i64} {
  func.func @crf_kernel(%arg0: memref<2x8x8xf32, #tpu.memory_space<vmem>>, %arg1: memref<2x8xi32, #tpu.memory_space<vmem>>, %arg2: memref<2x8xf32, #tpu.memory_space<vmem>>, %arg3: memref<1x8xf32, #tpu.memory_space<vmem>>, %arg4: memref<8x8xf32, #tpu.memory_space<vmem>>, %arg5: memref<1x8xf32, #tpu.memory_space<vmem>>, %arg6: memref<2x1xf32, #tpu.memory_space<vmem>>) attributes {dimension_semantics = [], scalar_prefetch = 0 : i64, scratch_operands = 0 : i64, tpu.core_type = #tpu.core_type<tc>} {
    %c0 = arith.constant 0 : index
    %c0_0 = arith.constant 0 : index
    %0 = vector.load %arg3[%c0, %c0_0] : memref<1x8xf32, #tpu.memory_space<vmem>>, vector<1x8xf32>
    %c0_1 = arith.constant 0 : index
    %c0_2 = arith.constant 0 : index
    %1 = vector.load %arg4[%c0_1, %c0_2] : memref<8x8xf32, #tpu.memory_space<vmem>>, vector<8x8xf32>
    %c0_3 = arith.constant 0 : index
    %c0_4 = arith.constant 0 : index
    %2 = vector.load %arg5[%c0_3, %c0_4] : memref<1x8xf32, #tpu.memory_space<vmem>>, vector<1x8xf32>
    %3 = vector.shape_cast %1 : vector<8x8xf32> to vector<1x8x8xf32>
    %4 = tpu.iota {dimensions = array<i32: 1>} : vector<2x8xi32>
    %c0_5 = arith.constant 0 : index
    %c0_6 = arith.constant 0 : index
    %c0_7 = arith.constant 0 : index
    %5 = vector.load %arg0[%c0_5, %c0_6, %c0_7] : memref<2x8x8xf32, #tpu.memory_space<vmem>>, vector<2x1x8xf32>
    %6 = vector.shape_cast %5 : vector<2x1x8xf32> to vector<2x8xf32>
    %c0_8 = arith.constant 0 : index
    %c0_9 = arith.constant 0 : index
    %7 = vector.load %arg1[%c0_8, %c0_9] : memref<2x8xi32, #tpu.memory_space<vmem>>, vector<2x1xi32>
    %8 = vector.broadcast %7 : vector<2x1xi32> to vector<2x8xi32>
    %9 = arith.cmpi eq, %4, %8 : vector<2x8xi32>
    %10 = arith.extui %9 : vector<2x8xi1> to vector<2x8xi32>
    %11 = arith.sitofp %10 : vector<2x8xi32> to vector<2x8xf32>
    %12 = vector.broadcast %0 : vector<1x8xf32> to vector<2x8xf32>
    %13 = arith.addf %12, %6 : vector<2x8xf32>
    %14 = arith.mulf %13, %11 : vector<2x8xf32>
    %cst = arith.constant dense<0.000000e+00> : vector<2xf32>
    %15 = vector.multi_reduction <add>, %14, %cst [1] : vector<2x8xf32> to vector<2xf32>
    %16 = vector.shape_cast %15 : vector<2xf32> to vector<2x1xf32>
    %c0_10 = arith.constant 0 : index
    %c1 = arith.constant 1 : index
    %c0_11 = arith.constant 0 : index
    %17 = vector.load %arg0[%c0_10, %c1, %c0_11] : memref<2x8x8xf32, #tpu.memory_space<vmem>>, vector<2x1x8xf32>
    %18 = vector.shape_cast %17 : vector<2x1x8xf32> to vector<2x8xf32>
    %c0_12 = arith.constant 0 : index
    %c1_13 = arith.constant 1 : index
    %19 = vector.load %arg1[%c0_12, %c1_13] : memref<2x8xi32, #tpu.memory_space<vmem>>, vector<2x1xi32>
    %20 = vector.broadcast %19 : vector<2x1xi32> to vector<2x8xi32>
    %21 = arith.cmpi eq, %4, %20 : vector<2x8xi32>
    %22 = arith.extui %21 : vector<2x8xi1> to vector<2x8xi32>
    %23 = arith.sitofp %22 : vector<2x8xi32> to vector<2x8xf32>
    %c0_14 = arith.constant 0 : index
    %c0_15 = arith.constant 0 : index
    %24 = vector.load %arg1[%c0_14, %c0_15] : memref<2x8xi32, #tpu.memory_space<vmem>>, vector<2x1xi32>
    %25 = vector.broadcast %24 : vector<2x1xi32> to vector<2x8xi32>
    %26 = arith.cmpi eq, %4, %25 : vector<2x8xi32>
    %27 = arith.extui %26 : vector<2x8xi1> to vector<2x8xi32>
    %28 = arith.sitofp %27 : vector<2x8xi32> to vector<2x8xf32>
    %c0_16 = arith.constant 0 : index
    %c1_17 = arith.constant 1 : index
    %29 = vector.load %arg2[%c0_16, %c1_17] : memref<2x8xf32, #tpu.memory_space<vmem>>, vector<2x1xf32>
    %cst_18 = arith.constant dense<0.000000e+00> : vector<2x8xf32>
    %30 = tpu.matmul %28, %1, %cst_18 {dimension_numbers = #tpu.dot_dimension_numbers<[1], [0], [0], [1], [0, 0, 1, 1], [], []>} : vector<2x8xf32>, vector<8x8xf32>, vector<2x8xf32> -> vector<2x8xf32>
    %31 = arith.mulf %30, %23 : vector<2x8xf32>
    %cst_19 = arith.constant dense<0.000000e+00> : vector<2xf32>
    %32 = vector.multi_reduction <add>, %31, %cst_19 [1] : vector<2x8xf32> to vector<2xf32>
    %33 = vector.shape_cast %32 : vector<2xf32> to vector<2x1xf32>
    %34 = arith.mulf %18, %23 : vector<2x8xf32>
    %cst_20 = arith.constant dense<0.000000e+00> : vector<2xf32>
    %35 = vector.multi_reduction <add>, %34, %cst_20 [1] : vector<2x8xf32> to vector<2xf32>
    %36 = vector.shape_cast %35 : vector<2xf32> to vector<2x1xf32>
    %37 = arith.addf %33, %36 : vector<2x1xf32>
    %38 = arith.mulf %37, %29 : vector<2x1xf32>
    %39 = arith.addf %16, %38 : vector<2x1xf32>
    %40 = vector.shape_cast %13 : vector<2x8xf32> to vector<2x8x1xf32>
    %41 = vector.broadcast %40 : vector<2x8x1xf32> to vector<2x8x8xf32>
    %42 = vector.broadcast %3 : vector<1x8x8xf32> to vector<2x8x8xf32>
    %43 = arith.addf %41, %42 : vector<2x8x8xf32>
    %44 = vector.shape_cast %18 : vector<2x8xf32> to vector<2x1x8xf32>
    %45 = vector.broadcast %44 : vector<2x1x8xf32> to vector<2x8x8xf32>
    %46 = arith.addf %43, %45 : vector<2x8x8xf32>
    %cst_21 = arith.constant dense<0xFF800000> : vector<2x8xf32>
    %47 = vector.multi_reduction <maximumf>, %46, %cst_21 [1] : vector<2x8x8xf32> to vector<2x8xf32>
    %48 = vector.shape_cast %47 : vector<2x8xf32> to vector<2x1x8xf32>
    %49 = vector.broadcast %48 : vector<2x1x8xf32> to vector<2x8x8xf32>
    %50 = arith.subf %46, %49 : vector<2x8x8xf32>
    %51 = math.exp %50 : vector<2x8x8xf32>
    %cst_22 = arith.constant dense<0.000000e+00> : vector<2x8xf32>
    %52 = vector.multi_reduction <add>, %51, %cst_22 [1] : vector<2x8x8xf32> to vector<2x8xf32>
    %53 = math.log %52 : vector<2x8xf32>
    %54 = vector.shape_cast %48 : vector<2x1x8xf32> to vector<2x8xf32>
    %55 = arith.addf %53, %54 : vector<2x8xf32>
    %cst_23 = arith.constant 0.000000e+00 : f32
    %56 = vector.broadcast %cst_23 : f32 to vector<2x1xf32>
    %57 = arith.cmpf ogt, %29, %56 : vector<2x1xf32>
    %58 = vector.shape_cast %57 : vector<2x1xi1> to vector<2x1xi1>
    %59 = vector.broadcast %58 : vector<2x1xi1> to vector<2x8xi1>
    %60 = arith.select %59, %55, %13 : vector<2x8xi1>, vector<2x8xf32>
    %c0_24 = arith.constant 0 : index
    %c2 = arith.constant 2 : index
    %c0_25 = arith.constant 0 : index
    %61 = vector.load %arg0[%c0_24, %c2, %c0_25] : memref<2x8x8xf32, #tpu.memory_space<vmem>>, vector<2x1x8xf32>
    %62 = vector.shape_cast %61 : vector<2x1x8xf32> to vector<2x8xf32>
    %c0_26 = arith.constant 0 : index
    %c2_27 = arith.constant 2 : index
    %63 = vector.load %arg1[%c0_26, %c2_27] : memref<2x8xi32, #tpu.memory_space<vmem>>, vector<2x1xi32>
    %64 = vector.broadcast %63 : vector<2x1xi32> to vector<2x8xi32>
    %65 = arith.cmpi eq, %4, %64 : vector<2x8xi32>
    %66 = arith.extui %65 : vector<2x8xi1> to vector<2x8xi32>
    %67 = arith.sitofp %66 : vector<2x8xi32> to vector<2x8xf32>
    %c0_28 = arith.constant 0 : index
    %c1_29 = arith.constant 1 : index
    %68 = vector.load %arg1[%c0_28, %c1_29] : memref<2x8xi32, #tpu.memory_space<vmem>>, vector<2x1xi32>
    %69 = vector.broadcast %68 : vector<2x1xi32> to vector<2x8xi32>
    %70 = arith.cmpi eq, %4, %69 : vector<2x8xi32>
    %71 = arith.extui %70 : vector<2x8xi1> to vector<2x8xi32>
    %72 = arith.sitofp %71 : vector<2x8xi32> to vector<2x8xf32>
    %c0_30 = arith.constant 0 : index
    %c2_31 = arith.constant 2 : index
    %73 = vector.load %arg2[%c0_30, %c2_31] : memref<2x8xf32, #tpu.memory_space<vmem>>, vector<2x1xf32>
    %cst_32 = arith.constant dense<0.000000e+00> : vector<2x8xf32>
    %74 = tpu.matmul %72, %1, %cst_32 {dimension_numbers = #tpu.dot_dimension_numbers<[1], [0], [0], [1], [0, 0, 1, 1], [], []>} : vector<2x8xf32>, vector<8x8xf32>, vector<2x8xf32> -> vector<2x8xf32>
    %75 = arith.mulf %74, %67 : vector<2x8xf32>
    %cst_33 = arith.constant dense<0.000000e+00> : vector<2xf32>
    %76 = vector.multi_reduction <add>, %75, %cst_33 [1] : vector<2x8xf32> to vector<2xf32>
    %77 = vector.shape_cast %76 : vector<2xf32> to vector<2x1xf32>
    %78 = arith.mulf %62, %67 : vector<2x8xf32>
    %cst_34 = arith.constant dense<0.000000e+00> : vector<2xf32>
    %79 = vector.multi_reduction <add>, %78, %cst_34 [1] : vector<2x8xf32> to vector<2xf32>
    %80 = vector.shape_cast %79 : vector<2xf32> to vector<2x1xf32>
    %81 = arith.addf %77, %80 : vector<2x1xf32>
    %82 = arith.mulf %81, %73 : vector<2x1xf32>
    %83 = arith.addf %39, %82 : vector<2x1xf32>
    %84 = vector.shape_cast %60 : vector<2x8xf32> to vector<2x8x1xf32>
    %85 = vector.broadcast %84 : vector<2x8x1xf32> to vector<2x8x8xf32>
    %86 = vector.broadcast %3 : vector<1x8x8xf32> to vector<2x8x8xf32>
    %87 = arith.addf %85, %86 : vector<2x8x8xf32>
    %88 = vector.shape_cast %62 : vector<2x8xf32> to vector<2x1x8xf32>
    %89 = vector.broadcast %88 : vector<2x1x8xf32> to vector<2x8x8xf32>
    %90 = arith.addf %87, %89 : vector<2x8x8xf32>
    %cst_35 = arith.constant dense<0xFF800000> : vector<2x8xf32>
    %91 = vector.multi_reduction <maximumf>, %90, %cst_35 [1] : vector<2x8x8xf32> to vector<2x8xf32>
    %92 = vector.shape_cast %91 : vector<2x8xf32> to vector<2x1x8xf32>
    %93 = vector.broadcast %92 : vector<2x1x8xf32> to vector<2x8x8xf32>
    %94 = arith.subf %90, %93 : vector<2x8x8xf32>
    %95 = math.exp %94 : vector<2x8x8xf32>
    %cst_36 = arith.constant dense<0.000000e+00> : vector<2x8xf32>
    %96 = vector.multi_reduction <add>, %95, %cst_36 [1] : vector<2x8x8xf32> to vector<2x8xf32>
    %97 = math.log %96 : vector<2x8xf32>
    %98 = vector.shape_cast %92 : vector<2x1x8xf32> to vector<2x8xf32>
    %99 = arith.addf %97, %98 : vector<2x8xf32>
    %cst_37 = arith.constant 0.000000e+00 : f32
    %100 = vector.broadcast %cst_37 : f32 to vector<2x1xf32>
    %101 = arith.cmpf ogt, %73, %100 : vector<2x1xf32>
    %102 = vector.shape_cast %101 : vector<2x1xi1> to vector<2x1xi1>
    %103 = vector.broadcast %102 : vector<2x1xi1> to vector<2x8xi1>
    %104 = arith.select %103, %99, %60 : vector<2x8xi1>, vector<2x8xf32>
    %c0_38 = arith.constant 0 : index
    %c3 = arith.constant 3 : index
    %c0_39 = arith.constant 0 : index
    %105 = vector.load %arg0[%c0_38, %c3, %c0_39] : memref<2x8x8xf32, #tpu.memory_space<vmem>>, vector<2x1x8xf32>
    %106 = vector.shape_cast %105 : vector<2x1x8xf32> to vector<2x8xf32>
    %c0_40 = arith.constant 0 : index
    %c3_41 = arith.constant 3 : index
    %107 = vector.load %arg1[%c0_40, %c3_41] : memref<2x8xi32, #tpu.memory_space<vmem>>, vector<2x1xi32>
    %108 = vector.broadcast %107 : vector<2x1xi32> to vector<2x8xi32>
    %109 = arith.cmpi eq, %4, %108 : vector<2x8xi32>
    %110 = arith.extui %109 : vector<2x8xi1> to vector<2x8xi32>
    %111 = arith.sitofp %110 : vector<2x8xi32> to vector<2x8xf32>
    %c0_42 = arith.constant 0 : index
    %c2_43 = arith.constant 2 : index
    %112 = vector.load %arg1[%c0_42, %c2_43] : memref<2x8xi32, #tpu.memory_space<vmem>>, vector<2x1xi32>
    %113 = vector.broadcast %112 : vector<2x1xi32> to vector<2x8xi32>
    %114 = arith.cmpi eq, %4, %113 : vector<2x8xi32>
    %115 = arith.extui %114 : vector<2x8xi1> to vector<2x8xi32>
    %116 = arith.sitofp %115 : vector<2x8xi32> to vector<2x8xf32>
    %c0_44 = arith.constant 0 : index
    %c3_45 = arith.constant 3 : index
    %117 = vector.load %arg2[%c0_44, %c3_45] : memref<2x8xf32, #tpu.memory_space<vmem>>, vector<2x1xf32>
    %cst_46 = arith.constant dense<0.000000e+00> : vector<2x8xf32>
    %118 = tpu.matmul %116, %1, %cst_46 {dimension_numbers = #tpu.dot_dimension_numbers<[1], [0], [0], [1], [0, 0, 1, 1], [], []>} : vector<2x8xf32>, vector<8x8xf32>, vector<2x8xf32> -> vector<2x8xf32>
    %119 = arith.mulf %118, %111 : vector<2x8xf32>
    %cst_47 = arith.constant dense<0.000000e+00> : vector<2xf32>
    %120 = vector.multi_reduction <add>, %119, %cst_47 [1] : vector<2x8xf32> to vector<2xf32>
    %121 = vector.shape_cast %120 : vector<2xf32> to vector<2x1xf32>
    %122 = arith.mulf %106, %111 : vector<2x8xf32>
    %cst_48 = arith.constant dense<0.000000e+00> : vector<2xf32>
    %123 = vector.multi_reduction <add>, %122, %cst_48 [1] : vector<2x8xf32> to vector<2xf32>
    %124 = vector.shape_cast %123 : vector<2xf32> to vector<2x1xf32>
    %125 = arith.addf %121, %124 : vector<2x1xf32>
    %126 = arith.mulf %125, %117 : vector<2x1xf32>
    %127 = arith.addf %83, %126 : vector<2x1xf32>
    %128 = vector.shape_cast %104 : vector<2x8xf32> to vector<2x8x1xf32>
    %129 = vector.broadcast %128 : vector<2x8x1xf32> to vector<2x8x8xf32>
    %130 = vector.broadcast %3 : vector<1x8x8xf32> to vector<2x8x8xf32>
    %131 = arith.addf %129, %130 : vector<2x8x8xf32>
    %132 = vector.shape_cast %106 : vector<2x8xf32> to vector<2x1x8xf32>
    %133 = vector.broadcast %132 : vector<2x1x8xf32> to vector<2x8x8xf32>
    %134 = arith.addf %131, %133 : vector<2x8x8xf32>
    %cst_49 = arith.constant dense<0xFF800000> : vector<2x8xf32>
    %135 = vector.multi_reduction <maximumf>, %134, %cst_49 [1] : vector<2x8x8xf32> to vector<2x8xf32>
    %136 = vector.shape_cast %135 : vector<2x8xf32> to vector<2x1x8xf32>
    %137 = vector.broadcast %136 : vector<2x1x8xf32> to vector<2x8x8xf32>
    %138 = arith.subf %134, %137 : vector<2x8x8xf32>
    %139 = math.exp %138 : vector<2x8x8xf32>
    %cst_50 = arith.constant dense<0.000000e+00> : vector<2x8xf32>
    %140 = vector.multi_reduction <add>, %139, %cst_50 [1] : vector<2x8x8xf32> to vector<2x8xf32>
    %141 = math.log %140 : vector<2x8xf32>
    %142 = vector.shape_cast %136 : vector<2x1x8xf32> to vector<2x8xf32>
    %143 = arith.addf %141, %142 : vector<2x8xf32>
    %cst_51 = arith.constant 0.000000e+00 : f32
    %144 = vector.broadcast %cst_51 : f32 to vector<2x1xf32>
    %145 = arith.cmpf ogt, %117, %144 : vector<2x1xf32>
    %146 = vector.shape_cast %145 : vector<2x1xi1> to vector<2x1xi1>
    %147 = vector.broadcast %146 : vector<2x1xi1> to vector<2x8xi1>
    %148 = arith.select %147, %143, %104 : vector<2x8xi1>, vector<2x8xf32>
    %c0_52 = arith.constant 0 : index
    %c4 = arith.constant 4 : index
    %c0_53 = arith.constant 0 : index
    %149 = vector.load %arg0[%c0_52, %c4, %c0_53] : memref<2x8x8xf32, #tpu.memory_space<vmem>>, vector<2x1x8xf32>
    %150 = vector.shape_cast %149 : vector<2x1x8xf32> to vector<2x8xf32>
    %c0_54 = arith.constant 0 : index
    %c4_55 = arith.constant 4 : index
    %151 = vector.load %arg1[%c0_54, %c4_55] : memref<2x8xi32, #tpu.memory_space<vmem>>, vector<2x1xi32>
    %152 = vector.broadcast %151 : vector<2x1xi32> to vector<2x8xi32>
    %153 = arith.cmpi eq, %4, %152 : vector<2x8xi32>
    %154 = arith.extui %153 : vector<2x8xi1> to vector<2x8xi32>
    %155 = arith.sitofp %154 : vector<2x8xi32> to vector<2x8xf32>
    %c0_56 = arith.constant 0 : index
    %c3_57 = arith.constant 3 : index
    %156 = vector.load %arg1[%c0_56, %c3_57] : memref<2x8xi32, #tpu.memory_space<vmem>>, vector<2x1xi32>
    %157 = vector.broadcast %156 : vector<2x1xi32> to vector<2x8xi32>
    %158 = arith.cmpi eq, %4, %157 : vector<2x8xi32>
    %159 = arith.extui %158 : vector<2x8xi1> to vector<2x8xi32>
    %160 = arith.sitofp %159 : vector<2x8xi32> to vector<2x8xf32>
    %c0_58 = arith.constant 0 : index
    %c4_59 = arith.constant 4 : index
    %161 = vector.load %arg2[%c0_58, %c4_59] : memref<2x8xf32, #tpu.memory_space<vmem>>, vector<2x1xf32>
    %cst_60 = arith.constant dense<0.000000e+00> : vector<2x8xf32>
    %162 = tpu.matmul %160, %1, %cst_60 {dimension_numbers = #tpu.dot_dimension_numbers<[1], [0], [0], [1], [0, 0, 1, 1], [], []>} : vector<2x8xf32>, vector<8x8xf32>, vector<2x8xf32> -> vector<2x8xf32>
    %163 = arith.mulf %162, %155 : vector<2x8xf32>
    %cst_61 = arith.constant dense<0.000000e+00> : vector<2xf32>
    %164 = vector.multi_reduction <add>, %163, %cst_61 [1] : vector<2x8xf32> to vector<2xf32>
    %165 = vector.shape_cast %164 : vector<2xf32> to vector<2x1xf32>
    %166 = arith.mulf %150, %155 : vector<2x8xf32>
    %cst_62 = arith.constant dense<0.000000e+00> : vector<2xf32>
    %167 = vector.multi_reduction <add>, %166, %cst_62 [1] : vector<2x8xf32> to vector<2xf32>
    %168 = vector.shape_cast %167 : vector<2xf32> to vector<2x1xf32>
    %169 = arith.addf %165, %168 : vector<2x1xf32>
    %170 = arith.mulf %169, %161 : vector<2x1xf32>
    %171 = arith.addf %127, %170 : vector<2x1xf32>
    %172 = vector.shape_cast %148 : vector<2x8xf32> to vector<2x8x1xf32>
    %173 = vector.broadcast %172 : vector<2x8x1xf32> to vector<2x8x8xf32>
    %174 = vector.broadcast %3 : vector<1x8x8xf32> to vector<2x8x8xf32>
    %175 = arith.addf %173, %174 : vector<2x8x8xf32>
    %176 = vector.shape_cast %150 : vector<2x8xf32> to vector<2x1x8xf32>
    %177 = vector.broadcast %176 : vector<2x1x8xf32> to vector<2x8x8xf32>
    %178 = arith.addf %175, %177 : vector<2x8x8xf32>
    %cst_63 = arith.constant dense<0xFF800000> : vector<2x8xf32>
    %179 = vector.multi_reduction <maximumf>, %178, %cst_63 [1] : vector<2x8x8xf32> to vector<2x8xf32>
    %180 = vector.shape_cast %179 : vector<2x8xf32> to vector<2x1x8xf32>
    %181 = vector.broadcast %180 : vector<2x1x8xf32> to vector<2x8x8xf32>
    %182 = arith.subf %178, %181 : vector<2x8x8xf32>
    %183 = math.exp %182 : vector<2x8x8xf32>
    %cst_64 = arith.constant dense<0.000000e+00> : vector<2x8xf32>
    %184 = vector.multi_reduction <add>, %183, %cst_64 [1] : vector<2x8x8xf32> to vector<2x8xf32>
    %185 = math.log %184 : vector<2x8xf32>
    %186 = vector.shape_cast %180 : vector<2x1x8xf32> to vector<2x8xf32>
    %187 = arith.addf %185, %186 : vector<2x8xf32>
    %cst_65 = arith.constant 0.000000e+00 : f32
    %188 = vector.broadcast %cst_65 : f32 to vector<2x1xf32>
    %189 = arith.cmpf ogt, %161, %188 : vector<2x1xf32>
    %190 = vector.shape_cast %189 : vector<2x1xi1> to vector<2x1xi1>
    %191 = vector.broadcast %190 : vector<2x1xi1> to vector<2x8xi1>
    %192 = arith.select %191, %187, %148 : vector<2x8xi1>, vector<2x8xf32>
    %c0_66 = arith.constant 0 : index
    %c5 = arith.constant 5 : index
    %c0_67 = arith.constant 0 : index
    %193 = vector.load %arg0[%c0_66, %c5, %c0_67] : memref<2x8x8xf32, #tpu.memory_space<vmem>>, vector<2x1x8xf32>
    %194 = vector.shape_cast %193 : vector<2x1x8xf32> to vector<2x8xf32>
    %c0_68 = arith.constant 0 : index
    %c5_69 = arith.constant 5 : index
    %195 = vector.load %arg1[%c0_68, %c5_69] : memref<2x8xi32, #tpu.memory_space<vmem>>, vector<2x1xi32>
    %196 = vector.broadcast %195 : vector<2x1xi32> to vector<2x8xi32>
    %197 = arith.cmpi eq, %4, %196 : vector<2x8xi32>
    %198 = arith.extui %197 : vector<2x8xi1> to vector<2x8xi32>
    %199 = arith.sitofp %198 : vector<2x8xi32> to vector<2x8xf32>
    %c0_70 = arith.constant 0 : index
    %c4_71 = arith.constant 4 : index
    %200 = vector.load %arg1[%c0_70, %c4_71] : memref<2x8xi32, #tpu.memory_space<vmem>>, vector<2x1xi32>
    %201 = vector.broadcast %200 : vector<2x1xi32> to vector<2x8xi32>
    %202 = arith.cmpi eq, %4, %201 : vector<2x8xi32>
    %203 = arith.extui %202 : vector<2x8xi1> to vector<2x8xi32>
    %204 = arith.sitofp %203 : vector<2x8xi32> to vector<2x8xf32>
    %c0_72 = arith.constant 0 : index
    %c5_73 = arith.constant 5 : index
    %205 = vector.load %arg2[%c0_72, %c5_73] : memref<2x8xf32, #tpu.memory_space<vmem>>, vector<2x1xf32>
    %cst_74 = arith.constant dense<0.000000e+00> : vector<2x8xf32>
    %206 = tpu.matmul %204, %1, %cst_74 {dimension_numbers = #tpu.dot_dimension_numbers<[1], [0], [0], [1], [0, 0, 1, 1], [], []>} : vector<2x8xf32>, vector<8x8xf32>, vector<2x8xf32> -> vector<2x8xf32>
    %207 = arith.mulf %206, %199 : vector<2x8xf32>
    %cst_75 = arith.constant dense<0.000000e+00> : vector<2xf32>
    %208 = vector.multi_reduction <add>, %207, %cst_75 [1] : vector<2x8xf32> to vector<2xf32>
    %209 = vector.shape_cast %208 : vector<2xf32> to vector<2x1xf32>
    %210 = arith.mulf %194, %199 : vector<2x8xf32>
    %cst_76 = arith.constant dense<0.000000e+00> : vector<2xf32>
    %211 = vector.multi_reduction <add>, %210, %cst_76 [1] : vector<2x8xf32> to vector<2xf32>
    %212 = vector.shape_cast %211 : vector<2xf32> to vector<2x1xf32>
    %213 = arith.addf %209, %212 : vector<2x1xf32>
    %214 = arith.mulf %213, %205 : vector<2x1xf32>
    %215 = arith.addf %171, %214 : vector<2x1xf32>
    %216 = vector.shape_cast %192 : vector<2x8xf32> to vector<2x8x1xf32>
    %217 = vector.broadcast %216 : vector<2x8x1xf32> to vector<2x8x8xf32>
    %218 = vector.broadcast %3 : vector<1x8x8xf32> to vector<2x8x8xf32>
    %219 = arith.addf %217, %218 : vector<2x8x8xf32>
    %220 = vector.shape_cast %194 : vector<2x8xf32> to vector<2x1x8xf32>
    %221 = vector.broadcast %220 : vector<2x1x8xf32> to vector<2x8x8xf32>
    %222 = arith.addf %219, %221 : vector<2x8x8xf32>
    %cst_77 = arith.constant dense<0xFF800000> : vector<2x8xf32>
    %223 = vector.multi_reduction <maximumf>, %222, %cst_77 [1] : vector<2x8x8xf32> to vector<2x8xf32>
    %224 = vector.shape_cast %223 : vector<2x8xf32> to vector<2x1x8xf32>
    %225 = vector.broadcast %224 : vector<2x1x8xf32> to vector<2x8x8xf32>
    %226 = arith.subf %222, %225 : vector<2x8x8xf32>
    %227 = math.exp %226 : vector<2x8x8xf32>
    %cst_78 = arith.constant dense<0.000000e+00> : vector<2x8xf32>
    %228 = vector.multi_reduction <add>, %227, %cst_78 [1] : vector<2x8x8xf32> to vector<2x8xf32>
    %229 = math.log %228 : vector<2x8xf32>
    %230 = vector.shape_cast %224 : vector<2x1x8xf32> to vector<2x8xf32>
    %231 = arith.addf %229, %230 : vector<2x8xf32>
    %cst_79 = arith.constant 0.000000e+00 : f32
    %232 = vector.broadcast %cst_79 : f32 to vector<2x1xf32>
    %233 = arith.cmpf ogt, %205, %232 : vector<2x1xf32>
    %234 = vector.shape_cast %233 : vector<2x1xi1> to vector<2x1xi1>
    %235 = vector.broadcast %234 : vector<2x1xi1> to vector<2x8xi1>
    %236 = arith.select %235, %231, %192 : vector<2x8xi1>, vector<2x8xf32>
    %c0_80 = arith.constant 0 : index
    %c6 = arith.constant 6 : index
    %c0_81 = arith.constant 0 : index
    %237 = vector.load %arg0[%c0_80, %c6, %c0_81] : memref<2x8x8xf32, #tpu.memory_space<vmem>>, vector<2x1x8xf32>
    %238 = vector.shape_cast %237 : vector<2x1x8xf32> to vector<2x8xf32>
    %c0_82 = arith.constant 0 : index
    %c6_83 = arith.constant 6 : index
    %239 = vector.load %arg1[%c0_82, %c6_83] : memref<2x8xi32, #tpu.memory_space<vmem>>, vector<2x1xi32>
    %240 = vector.broadcast %239 : vector<2x1xi32> to vector<2x8xi32>
    %241 = arith.cmpi eq, %4, %240 : vector<2x8xi32>
    %242 = arith.extui %241 : vector<2x8xi1> to vector<2x8xi32>
    %243 = arith.sitofp %242 : vector<2x8xi32> to vector<2x8xf32>
    %c0_84 = arith.constant 0 : index
    %c5_85 = arith.constant 5 : index
    %244 = vector.load %arg1[%c0_84, %c5_85] : memref<2x8xi32, #tpu.memory_space<vmem>>, vector<2x1xi32>
    %245 = vector.broadcast %244 : vector<2x1xi32> to vector<2x8xi32>
    %246 = arith.cmpi eq, %4, %245 : vector<2x8xi32>
    %247 = arith.extui %246 : vector<2x8xi1> to vector<2x8xi32>
    %248 = arith.sitofp %247 : vector<2x8xi32> to vector<2x8xf32>
    %c0_86 = arith.constant 0 : index
    %c6_87 = arith.constant 6 : index
    %249 = vector.load %arg2[%c0_86, %c6_87] : memref<2x8xf32, #tpu.memory_space<vmem>>, vector<2x1xf32>
    %cst_88 = arith.constant dense<0.000000e+00> : vector<2x8xf32>
    %250 = tpu.matmul %248, %1, %cst_88 {dimension_numbers = #tpu.dot_dimension_numbers<[1], [0], [0], [1], [0, 0, 1, 1], [], []>} : vector<2x8xf32>, vector<8x8xf32>, vector<2x8xf32> -> vector<2x8xf32>
    %251 = arith.mulf %250, %243 : vector<2x8xf32>
    %cst_89 = arith.constant dense<0.000000e+00> : vector<2xf32>
    %252 = vector.multi_reduction <add>, %251, %cst_89 [1] : vector<2x8xf32> to vector<2xf32>
    %253 = vector.shape_cast %252 : vector<2xf32> to vector<2x1xf32>
    %254 = arith.mulf %238, %243 : vector<2x8xf32>
    %cst_90 = arith.constant dense<0.000000e+00> : vector<2xf32>
    %255 = vector.multi_reduction <add>, %254, %cst_90 [1] : vector<2x8xf32> to vector<2xf32>
    %256 = vector.shape_cast %255 : vector<2xf32> to vector<2x1xf32>
    %257 = arith.addf %253, %256 : vector<2x1xf32>
    %258 = arith.mulf %257, %249 : vector<2x1xf32>
    %259 = arith.addf %215, %258 : vector<2x1xf32>
    %260 = vector.shape_cast %236 : vector<2x8xf32> to vector<2x8x1xf32>
    %261 = vector.broadcast %260 : vector<2x8x1xf32> to vector<2x8x8xf32>
    %262 = vector.broadcast %3 : vector<1x8x8xf32> to vector<2x8x8xf32>
    %263 = arith.addf %261, %262 : vector<2x8x8xf32>
    %264 = vector.shape_cast %238 : vector<2x8xf32> to vector<2x1x8xf32>
    %265 = vector.broadcast %264 : vector<2x1x8xf32> to vector<2x8x8xf32>
    %266 = arith.addf %263, %265 : vector<2x8x8xf32>
    %cst_91 = arith.constant dense<0xFF800000> : vector<2x8xf32>
    %267 = vector.multi_reduction <maximumf>, %266, %cst_91 [1] : vector<2x8x8xf32> to vector<2x8xf32>
    %268 = vector.shape_cast %267 : vector<2x8xf32> to vector<2x1x8xf32>
    %269 = vector.broadcast %268 : vector<2x1x8xf32> to vector<2x8x8xf32>
    %270 = arith.subf %266, %269 : vector<2x8x8xf32>
    %271 = math.exp %270 : vector<2x8x8xf32>
    %cst_92 = arith.constant dense<0.000000e+00> : vector<2x8xf32>
    %272 = vector.multi_reduction <add>, %271, %cst_92 [1] : vector<2x8x8xf32> to vector<2x8xf32>
    %273 = math.log %272 : vector<2x8xf32>
    %274 = vector.shape_cast %268 : vector<2x1x8xf32> to vector<2x8xf32>
    %275 = arith.addf %273, %274 : vector<2x8xf32>
    %cst_93 = arith.constant 0.000000e+00 : f32
    %276 = vector.broadcast %cst_93 : f32 to vector<2x1xf32>
    %277 = arith.cmpf ogt, %249, %276 : vector<2x1xf32>
    %278 = vector.shape_cast %277 : vector<2x1xi1> to vector<2x1xi1>
    %279 = vector.broadcast %278 : vector<2x1xi1> to vector<2x8xi1>
    %280 = arith.select %279, %275, %236 : vector<2x8xi1>, vector<2x8xf32>
    %c0_94 = arith.constant 0 : index
    %c7 = arith.constant 7 : index
    %c0_95 = arith.constant 0 : index
    %281 = vector.load %arg0[%c0_94, %c7, %c0_95] : memref<2x8x8xf32, #tpu.memory_space<vmem>>, vector<2x1x8xf32>
    %282 = vector.shape_cast %281 : vector<2x1x8xf32> to vector<2x8xf32>
    %c0_96 = arith.constant 0 : index
    %c7_97 = arith.constant 7 : index
    %283 = vector.load %arg1[%c0_96, %c7_97] : memref<2x8xi32, #tpu.memory_space<vmem>>, vector<2x1xi32>
    %284 = vector.broadcast %283 : vector<2x1xi32> to vector<2x8xi32>
    %285 = arith.cmpi eq, %4, %284 : vector<2x8xi32>
    %286 = arith.extui %285 : vector<2x8xi1> to vector<2x8xi32>
    %287 = arith.sitofp %286 : vector<2x8xi32> to vector<2x8xf32>
    %c0_98 = arith.constant 0 : index
    %c6_99 = arith.constant 6 : index
    %288 = vector.load %arg1[%c0_98, %c6_99] : memref<2x8xi32, #tpu.memory_space<vmem>>, vector<2x1xi32>
    %289 = vector.broadcast %288 : vector<2x1xi32> to vector<2x8xi32>
    %290 = arith.cmpi eq, %4, %289 : vector<2x8xi32>
    %291 = arith.extui %290 : vector<2x8xi1> to vector<2x8xi32>
    %292 = arith.sitofp %291 : vector<2x8xi32> to vector<2x8xf32>
    %c0_100 = arith.constant 0 : index
    %c7_101 = arith.constant 7 : index
    %293 = vector.load %arg2[%c0_100, %c7_101] : memref<2x8xf32, #tpu.memory_space<vmem>>, vector<2x1xf32>
    %cst_102 = arith.constant dense<0.000000e+00> : vector<2x8xf32>
    %294 = tpu.matmul %292, %1, %cst_102 {dimension_numbers = #tpu.dot_dimension_numbers<[1], [0], [0], [1], [0, 0, 1, 1], [], []>} : vector<2x8xf32>, vector<8x8xf32>, vector<2x8xf32> -> vector<2x8xf32>
    %295 = arith.mulf %294, %287 : vector<2x8xf32>
    %cst_103 = arith.constant dense<0.000000e+00> : vector<2xf32>
    %296 = vector.multi_reduction <add>, %295, %cst_103 [1] : vector<2x8xf32> to vector<2xf32>
    %297 = vector.shape_cast %296 : vector<2xf32> to vector<2x1xf32>
    %298 = arith.mulf %282, %287 : vector<2x8xf32>
    %cst_104 = arith.constant dense<0.000000e+00> : vector<2xf32>
    %299 = vector.multi_reduction <add>, %298, %cst_104 [1] : vector<2x8xf32> to vector<2xf32>
    %300 = vector.shape_cast %299 : vector<2xf32> to vector<2x1xf32>
    %301 = arith.addf %297, %300 : vector<2x1xf32>
    %302 = arith.mulf %301, %293 : vector<2x1xf32>
    %303 = arith.addf %259, %302 : vector<2x1xf32>
    %304 = vector.shape_cast %280 : vector<2x8xf32> to vector<2x8x1xf32>
    %305 = vector.broadcast %304 : vector<2x8x1xf32> to vector<2x8x8xf32>
    %306 = vector.broadcast %3 : vector<1x8x8xf32> to vector<2x8x8xf32>
    %307 = arith.addf %305, %306 : vector<2x8x8xf32>
    %308 = vector.shape_cast %282 : vector<2x8xf32> to vector<2x1x8xf32>
    %309 = vector.broadcast %308 : vector<2x1x8xf32> to vector<2x8x8xf32>
    %310 = arith.addf %307, %309 : vector<2x8x8xf32>
    %cst_105 = arith.constant dense<0xFF800000> : vector<2x8xf32>
    %311 = vector.multi_reduction <maximumf>, %310, %cst_105 [1] : vector<2x8x8xf32> to vector<2x8xf32>
    %312 = vector.shape_cast %311 : vector<2x8xf32> to vector<2x1x8xf32>
    %313 = vector.broadcast %312 : vector<2x1x8xf32> to vector<2x8x8xf32>
    %314 = arith.subf %310, %313 : vector<2x8x8xf32>
    %315 = math.exp %314 : vector<2x8x8xf32>
    %cst_106 = arith.constant dense<0.000000e+00> : vector<2x8xf32>
    %316 = vector.multi_reduction <add>, %315, %cst_106 [1] : vector<2x8x8xf32> to vector<2x8xf32>
    %317 = math.log %316 : vector<2x8xf32>
    %318 = vector.shape_cast %312 : vector<2x1x8xf32> to vector<2x8xf32>
    %319 = arith.addf %317, %318 : vector<2x8xf32>
    %cst_107 = arith.constant 0.000000e+00 : f32
    %320 = vector.broadcast %cst_107 : f32 to vector<2x1xf32>
    %321 = arith.cmpf ogt, %293, %320 : vector<2x1xf32>
    %322 = vector.shape_cast %321 : vector<2x1xi1> to vector<2x1xi1>
    %323 = vector.broadcast %322 : vector<2x1xi1> to vector<2x8xi1>
    %324 = arith.select %323, %319, %280 : vector<2x8xi1>, vector<2x8xf32>
    %c0_108 = arith.constant 0 : index
    %c0_109 = arith.constant 0 : index
    %325 = vector.load %arg2[%c0_108, %c0_109] : memref<2x8xf32, #tpu.memory_space<vmem>>, vector<2x8xf32>
    %c0_110 = arith.constant 0 : index
    %c0_111 = arith.constant 0 : index
    %326 = vector.load %arg1[%c0_110, %c0_111] : memref<2x8xi32, #tpu.memory_space<vmem>>, vector<2x8xi32>
    %cst_112 = arith.constant dense<0.000000e+00> : vector<2xf32>
    %327 = vector.multi_reduction <add>, %325, %cst_112 [1] : vector<2x8xf32> to vector<2xf32>
    %328 = vector.shape_cast %327 : vector<2xf32> to vector<2x1xf32>
    %cst_113 = arith.constant 1.000000e+00 : f32
    %329 = vector.broadcast %cst_113 : f32 to vector<2x1xf32>
    %330 = arith.subf %328, %329 : vector<2x1xf32>
    %331 = arith.fptosi %330 : vector<2x1xf32> to vector<2x1xi32>
    %332 = tpu.iota {dimensions = array<i32: 1>} : vector<2x8xi32>
    %333 = vector.broadcast %331 : vector<2x1xi32> to vector<2x8xi32>
    %334 = arith.cmpi eq, %332, %333 : vector<2x8xi32>
    %335 = arith.extui %334 : vector<2x8xi1> to vector<2x8xi32>
    %336 = arith.muli %326, %335 : vector<2x8xi32>
    %cst_114 = arith.constant dense<0> : vector<2xi32>
    %337 = vector.multi_reduction <add>, %336, %cst_114 [1] : vector<2x8xi32> to vector<2xi32>
    %338 = vector.shape_cast %337 : vector<2xi32> to vector<2x1xi32>
    %339 = vector.broadcast %338 : vector<2x1xi32> to vector<2x8xi32>
    %340 = arith.cmpi eq, %4, %339 : vector<2x8xi32>
    %341 = arith.extui %340 : vector<2x8xi1> to vector<2x8xi32>
    %342 = arith.sitofp %341 : vector<2x8xi32> to vector<2x8xf32>
    %343 = vector.broadcast %2 : vector<1x8xf32> to vector<2x8xf32>
    %344 = arith.mulf %343, %342 : vector<2x8xf32>
    %cst_115 = arith.constant dense<0.000000e+00> : vector<2xf32>
    %345 = vector.multi_reduction <add>, %344, %cst_115 [1] : vector<2x8xf32> to vector<2xf32>
    %346 = vector.shape_cast %345 : vector<2xf32> to vector<2x1xf32>
    %347 = arith.addf %303, %346 : vector<2x1xf32>
    %348 = vector.broadcast %2 : vector<1x8xf32> to vector<2x8xf32>
    %349 = arith.addf %324, %348 : vector<2x8xf32>
    %cst_116 = arith.constant dense<0xFF800000> : vector<2xf32>
    %350 = vector.multi_reduction <maximumf>, %349, %cst_116 [1] : vector<2x8xf32> to vector<2xf32>
    %351 = vector.shape_cast %350 : vector<2xf32> to vector<2x1xf32>
    %352 = vector.broadcast %351 : vector<2x1xf32> to vector<2x8xf32>
    %353 = arith.subf %349, %352 : vector<2x8xf32>
    %354 = math.exp %353 : vector<2x8xf32>
    %cst_117 = arith.constant dense<0.000000e+00> : vector<2xf32>
    %355 = vector.multi_reduction <add>, %354, %cst_117 [1] : vector<2x8xf32> to vector<2xf32>
    %356 = vector.shape_cast %355 : vector<2xf32> to vector<2x1xf32>
    %357 = math.log %356 : vector<2x1xf32>
    %358 = arith.addf %357, %351 : vector<2x1xf32>
    %359 = arith.subf %347, %358 : vector<2x1xf32>
    %c0_118 = arith.constant 0 : index
    %c0_119 = arith.constant 0 : index
    %360 = vector.load %arg6[%c0_118, %c0_119] : memref<2x1xf32, #tpu.memory_space<vmem>>, vector<2x1xf32>
    tpu.vector_store %arg6[%c0_118, %c0_119], %359 {strides = array<i32>} : memref<2x1xf32, #tpu.memory_space<vmem>>, vector<2x1xf32>,
    return
  }
}

module attributes {stable_mosaic.version = 11 : i64} {
  func.func @fused_encoder_kernel(%arg0: i32, %arg1: memref<1x8x32xf32, #tpu.memory_space<vmem>>, %arg2: memref<1x1x8xf32, #tpu.memory_space<vmem>>, %arg3: memref<1x32xf32, #tpu.memory_space<vmem>>, %arg4: memref<1x32xf32, #tpu.memory_space<vmem>>, %arg5: memref<2x32x96xbf16, #tpu.memory_space<vmem>>, %arg6: memref<2x1x96xf32, #tpu.memory_space<vmem>>, %arg7: memref<2x32x32xbf16, #tpu.memory_space<vmem>>, %arg8: memref<2x1x32xf32, #tpu.memory_space<vmem>>, %arg9: memref<2x1x32xf32, #tpu.memory_space<vmem>>, %arg10: memref<2x1x32xf32, #tpu.memory_space<vmem>>, %arg11: memref<2x32x64xbf16, #tpu.memory_space<vmem>>, %arg12: memref<2x1x64xf32, #tpu.memory_space<vmem>>, %arg13: memref<2x64x32xbf16, #tpu.memory_space<vmem>>, %arg14: memref<2x1x32xf32, #tpu.memory_space<vmem>>, %arg15: memref<2x1x32xf32, #tpu.memory_space<vmem>>, %arg16: memref<2x1x32xf32, #tpu.memory_space<vmem>>, %arg17: memref<32x8xbf16, #tpu.memory_space<vmem>>, %arg18: memref<1x8xf32, #tpu.memory_space<vmem>>, %arg19: memref<1x8x8xf32, #tpu.memory_space<vmem>>) attributes {dimension_semantics = [#tpu.dimension_semantics<parallel>], iteration_bounds = array<i64: 2>, scalar_prefetch = 0 : i64, scratch_operands = 0 : i64, tpu.core_type = #tpu.core_type<tc>, window_params = [{transform_indices = @transform_0, window_bounds = array<i64: 1, 8, 32>}, {transform_indices = @transform_1, window_bounds = array<i64: 1, 1, 8>}, {pipeline_mode = #tpu.pipeline_mode<synchronous>, transform_indices = @transform_2, window_bounds = array<i64: 1, 32>}, {pipeline_mode = #tpu.pipeline_mode<synchronous>, transform_indices = @transform_3, window_bounds = array<i64: 1, 32>}, {pipeline_mode = #tpu.pipeline_mode<synchronous>, transform_indices = @transform_4, window_bounds = array<i64: 2, 32, 96>}, {pipeline_mode = #tpu.pipeline_mode<synchronous>, transform_indices = @transform_5, window_bounds = array<i64: 2, 1, 96>}, {pipeline_mode = #tpu.pipeline_mode<synchronous>, transform_indices = @transform_6, window_bounds = array<i64: 2, 32, 32>}, {pipeline_mode = #tpu.pipeline_mode<synchronous>, transform_indices = @transform_7, window_bounds = array<i64: 2, 1, 32>}, {pipeline_mode = #tpu.pipeline_mode<synchronous>, transform_indices = @transform_8, window_bounds = array<i64: 2, 1, 32>}, {pipeline_mode = #tpu.pipeline_mode<synchronous>, transform_indices = @transform_9, window_bounds = array<i64: 2, 1, 32>}, {pipeline_mode = #tpu.pipeline_mode<synchronous>, transform_indices = @transform_10, window_bounds = array<i64: 2, 32, 64>}, {pipeline_mode = #tpu.pipeline_mode<synchronous>, transform_indices = @transform_11, window_bounds = array<i64: 2, 1, 64>}, {pipeline_mode = #tpu.pipeline_mode<synchronous>, transform_indices = @transform_12, window_bounds = array<i64: 2, 64, 32>}, {pipeline_mode = #tpu.pipeline_mode<synchronous>, transform_indices = @transform_13, window_bounds = array<i64: 2, 1, 32>}, {pipeline_mode = #tpu.pipeline_mode<synchronous>, transform_indices = @transform_14, window_bounds = array<i64: 2, 1, 32>}, {pipeline_mode = #tpu.pipeline_mode<synchronous>, transform_indices = @transform_15, window_bounds = array<i64: 2, 1, 32>}, {pipeline_mode = #tpu.pipeline_mode<synchronous>, transform_indices = @transform_16, window_bounds = array<i64: 32, 8>}, {pipeline_mode = #tpu.pipeline_mode<synchronous>, transform_indices = @transform_17, window_bounds = array<i64: 1, 8>}, {transform_indices = @transform_18, window_bounds = array<i64: 1, 8, 8>}]} {
    %c0 = arith.constant 0 : index
    %c0_0 = arith.constant 0 : index
    %c0_1 = arith.constant 0 : index
    %0 = vector.load %arg2[%c0, %c0_0, %c0_1] : memref<1x1x8xf32, #tpu.memory_space<vmem>>, vector<1x1x8xf32>
    %1 = vector.shape_cast %0 : vector<1x1x8xf32> to vector<1x8xf32>
    %c0_2 = arith.constant 0 : index
    %c0_3 = arith.constant 0 : index
    %c0_4 = arith.constant 0 : index
    %2 = vector.load %arg1[%c0_2, %c0_3, %c0_4] : memref<1x8x32xf32, #tpu.memory_space<vmem>>, vector<1x8x32xf32>
    %3 = vector.shape_cast %2 : vector<1x8x32xf32> to vector<8x32xf32>
    %c0_5 = arith.constant 0 : index
    %c0_6 = arith.constant 0 : index
    %4 = vector.load %arg3[%c0_5, %c0_6] : memref<1x32xf32, #tpu.memory_space<vmem>>, vector<1x32xf32>
    %c0_7 = arith.constant 0 : index
    %c0_8 = arith.constant 0 : index
    %5 = vector.load %arg4[%c0_7, %c0_8] : memref<1x32xf32, #tpu.memory_space<vmem>>, vector<1x32xf32>
    %cst = arith.constant dense<0.000000e+00> : vector<8xf32>
    %6 = vector.multi_reduction <add>, %3, %cst [1] : vector<8x32xf32> to vector<8xf32>
    %7 = vector.shape_cast %6 : vector<8xf32> to vector<8x1xf32>
    %cst_9 = arith.constant 3.200000e+01 : f32
    %8 = vector.broadcast %cst_9 : f32 to vector<8x1xf32>
    %9 = arith.divf %7, %8 : vector<8x1xf32>
    %10 = vector.broadcast %9 : vector<8x1xf32> to vector<8x32xf32>
    %11 = arith.subf %3, %10 : vector<8x32xf32>
    %12 = arith.mulf %11, %11 : vector<8x32xf32>
    %cst_10 = arith.constant dense<0.000000e+00> : vector<8xf32>
    %13 = vector.multi_reduction <add>, %12, %cst_10 [1] : vector<8x32xf32> to vector<8xf32>
    %14 = vector.shape_cast %13 : vector<8xf32> to vector<8x1xf32>
    %cst_11 = arith.constant 3.200000e+01 : f32
    %15 = vector.broadcast %cst_11 : f32 to vector<8x1xf32>
    %16 = arith.divf %14, %15 : vector<8x1xf32>
    %cst_12 = arith.constant 9.99999996E-13 : f32
    %17 = vector.broadcast %cst_12 : f32 to vector<8x1xf32>
    %18 = arith.addf %16, %17 : vector<8x1xf32>
    %19 = math.rsqrt %18 : vector<8x1xf32>
    %20 = vector.broadcast %19 : vector<8x1xf32> to vector<8x32xf32>
    %21 = arith.mulf %11, %20 : vector<8x32xf32>
    %22 = vector.broadcast %4 : vector<1x32xf32> to vector<8x32xf32>
    %23 = arith.mulf %21, %22 : vector<8x32xf32>
    %24 = vector.broadcast %5 : vector<1x32xf32> to vector<8x32xf32>
    %25 = arith.addf %23, %24 : vector<8x32xf32>
    %c0_13 = arith.constant 0 : index
    %c0_14 = arith.constant 0 : index
    %c0_15 = arith.constant 0 : index
    %26 = vector.load %arg5[%c0_13, %c0_14, %c0_15] : memref<2x32x96xbf16, #tpu.memory_space<vmem>>, vector<1x32x96xbf16>
    %27 = vector.shape_cast %26 : vector<1x32x96xbf16> to vector<32x96xbf16>
    %c0_16 = arith.constant 0 : index
    %c0_17 = arith.constant 0 : index
    %c0_18 = arith.constant 0 : index
    %28 = vector.load %arg6[%c0_16, %c0_17, %c0_18] : memref<2x1x96xf32, #tpu.memory_space<vmem>>, vector<1x1x96xf32>
    %29 = vector.shape_cast %28 : vector<1x1x96xf32> to vector<1x96xf32>
    %30 = arith.truncf %25 : vector<8x32xf32> to vector<8x32xbf16>
    %cst_19 = arith.constant dense<0.000000e+00> : vector<8x96xf32>
    %31 = tpu.matmul %30, %27, %cst_19 {dimension_numbers = #tpu.dot_dimension_numbers<[1], [0], [0], [1], [0, 0, 1, 1], [], []>} : vector<8x32xbf16>, vector<32x96xbf16>, vector<8x96xf32> -> vector<8x96xf32>
    %32 = vector.broadcast %29 : vector<1x96xf32> to vector<8x96xf32>
    %33 = arith.addf %31, %32 : vector<8x96xf32>
    %34 = vector.extract_strided_slice %33 {offsets = [0, 0], sizes = [8, 16], strides = [1, 1]} : vector<8x96xf32> to vector<8x16xf32>
    %35 = arith.truncf %34 : vector<8x16xf32> to vector<8x16xbf16>
    %36 = vector.extract_strided_slice %33 {offsets = [0, 32], sizes = [8, 16], strides = [1, 1]} : vector<8x96xf32> to vector<8x16xf32>
    %37 = arith.truncf %36 : vector<8x16xf32> to vector<8x16xbf16>
    %38 = vector.extract_strided_slice %33 {offsets = [0, 64], sizes = [8, 16], strides = [1, 1]} : vector<8x96xf32> to vector<8x16xf32>
    %39 = arith.truncf %38 : vector<8x16xf32> to vector<8x16xbf16>
    %cst_20 = arith.constant dense<0.000000e+00> : vector<8x8xf32>
    %40 = tpu.matmul %35, %37, %cst_20 {dimension_numbers = #tpu.dot_dimension_numbers<[1], [1], [0], [0], [0, 0, 1, 0], [], []>} : vector<8x16xbf16>, vector<8x16xbf16>, vector<8x8xf32> -> vector<8x8xf32>
    %cst_21 = arith.constant 2.500000e-01 : f32
    %41 = vector.broadcast %cst_21 : f32 to vector<8x8xf32>
    %42 = arith.mulf %40, %41 : vector<8x8xf32>
    %43 = vector.broadcast %1 : vector<1x8xf32> to vector<8x8xf32>
    %44 = arith.addf %42, %43 : vector<8x8xf32>
    %cst_22 = arith.constant dense<0xFF800000> : vector<8xf32>
    %45 = vector.multi_reduction <maximumf>, %44, %cst_22 [1] : vector<8x8xf32> to vector<8xf32>
    %46 = vector.shape_cast %45 : vector<8xf32> to vector<8x1xf32>
    %47 = vector.broadcast %46 : vector<8x1xf32> to vector<8x8xf32>
    %48 = arith.subf %44, %47 : vector<8x8xf32>
    %49 = math.exp %48 : vector<8x8xf32>
    %cst_23 = arith.constant dense<0.000000e+00> : vector<8xf32>
    %50 = vector.multi_reduction <add>, %49, %cst_23 [1] : vector<8x8xf32> to vector<8xf32>
    %51 = vector.shape_cast %50 : vector<8xf32> to vector<8x1xf32>
    %52 = tpu.reciprocal %51 {approx = true} : vector<8x1xf32> -> vector<8x1xf32>
    %53 = vector.broadcast %52 : vector<8x1xf32> to vector<8x8xf32>
    %54 = arith.mulf %49, %53 : vector<8x8xf32>
    %55 = arith.truncf %54 : vector<8x8xf32> to vector<8x8xbf16>
    %cst_24 = arith.constant dense<0.000000e+00> : vector<8x16xf32>
    %56 = tpu.matmul %55, %39, %cst_24 {dimension_numbers = #tpu.dot_dimension_numbers<[1], [0], [0], [1], [0, 0, 1, 1], [], []>} : vector<8x8xbf16>, vector<8x16xbf16>, vector<8x16xf32> -> vector<8x16xf32>
    %57 = vector.extract_strided_slice %33 {offsets = [0, 16], sizes = [8, 16], strides = [1, 1]} : vector<8x96xf32> to vector<8x16xf32>
    %58 = arith.truncf %57 : vector<8x16xf32> to vector<8x16xbf16>
    %59 = vector.extract_strided_slice %33 {offsets = [0, 48], sizes = [8, 16], strides = [1, 1]} : vector<8x96xf32> to vector<8x16xf32>
    %60 = arith.truncf %59 : vector<8x16xf32> to vector<8x16xbf16>
    %61 = vector.extract_strided_slice %33 {offsets = [0, 80], sizes = [8, 16], strides = [1, 1]} : vector<8x96xf32> to vector<8x16xf32>
    %62 = arith.truncf %61 : vector<8x16xf32> to vector<8x16xbf16>
    %cst_25 = arith.constant dense<0.000000e+00> : vector<8x8xf32>
    %63 = tpu.matmul %58, %60, %cst_25 {dimension_numbers = #tpu.dot_dimension_numbers<[1], [1], [0], [0], [0, 0, 1, 0], [], []>} : vector<8x16xbf16>, vector<8x16xbf16>, vector<8x8xf32> -> vector<8x8xf32>
    %cst_26 = arith.constant 2.500000e-01 : f32
    %64 = vector.broadcast %cst_26 : f32 to vector<8x8xf32>
    %65 = arith.mulf %63, %64 : vector<8x8xf32>
    %66 = vector.broadcast %1 : vector<1x8xf32> to vector<8x8xf32>
    %67 = arith.addf %65, %66 : vector<8x8xf32>
    %cst_27 = arith.constant dense<0xFF800000> : vector<8xf32>
    %68 = vector.multi_reduction <maximumf>, %67, %cst_27 [1] : vector<8x8xf32> to vector<8xf32>
    %69 = vector.shape_cast %68 : vector<8xf32> to vector<8x1xf32>
    %70 = vector.broadcast %69 : vector<8x1xf32> to vector<8x8xf32>
    %71 = arith.subf %67, %70 : vector<8x8xf32>
    %72 = math.exp %71 : vector<8x8xf32>
    %cst_28 = arith.constant dense<0.000000e+00> : vector<8xf32>
    %73 = vector.multi_reduction <add>, %72, %cst_28 [1] : vector<8x8xf32> to vector<8xf32>
    %74 = vector.shape_cast %73 : vector<8xf32> to vector<8x1xf32>
    %75 = tpu.reciprocal %74 {approx = true} : vector<8x1xf32> -> vector<8x1xf32>
    %76 = vector.broadcast %75 : vector<8x1xf32> to vector<8x8xf32>
    %77 = arith.mulf %72, %76 : vector<8x8xf32>
    %78 = arith.truncf %77 : vector<8x8xf32> to vector<8x8xbf16>
    %cst_29 = arith.constant dense<0.000000e+00> : vector<8x16xf32>
    %79 = tpu.matmul %78, %62, %cst_29 {dimension_numbers = #tpu.dot_dimension_numbers<[1], [0], [0], [1], [0, 0, 1, 1], [], []>} : vector<8x8xbf16>, vector<8x16xbf16>, vector<8x16xf32> -> vector<8x16xf32>
    %80 = tpu.concatenate %56, %79 in 1 : vector<8x16xf32>, vector<8x16xf32> -> vector<8x32xf32>
    %c0_30 = arith.constant 0 : index
    %c0_31 = arith.constant 0 : index
    %c0_32 = arith.constant 0 : index
    %81 = vector.load %arg7[%c0_30, %c0_31, %c0_32] : memref<2x32x32xbf16, #tpu.memory_space<vmem>>, vector<1x32x32xbf16>
    %82 = vector.shape_cast %81 : vector<1x32x32xbf16> to vector<32x32xbf16>
    %c0_33 = arith.constant 0 : index
    %c0_34 = arith.constant 0 : index
    %c0_35 = arith.constant 0 : index
    %83 = vector.load %arg8[%c0_33, %c0_34, %c0_35] : memref<2x1x32xf32, #tpu.memory_space<vmem>>, vector<1x1x32xf32>
    %84 = vector.shape_cast %83 : vector<1x1x32xf32> to vector<1x32xf32>
    %85 = arith.truncf %80 : vector<8x32xf32> to vector<8x32xbf16>
    %cst_36 = arith.constant dense<0.000000e+00> : vector<8x32xf32>
    %86 = tpu.matmul %85, %82, %cst_36 {dimension_numbers = #tpu.dot_dimension_numbers<[1], [0], [0], [1], [0, 0, 1, 1], [], []>} : vector<8x32xbf16>, vector<32x32xbf16>, vector<8x32xf32> -> vector<8x32xf32>
    %87 = vector.broadcast %84 : vector<1x32xf32> to vector<8x32xf32>
    %88 = arith.addf %86, %87 : vector<8x32xf32>
    %89 = arith.addf %88, %25 : vector<8x32xf32>
    %c0_37 = arith.constant 0 : index
    %c0_38 = arith.constant 0 : index
    %c0_39 = arith.constant 0 : index
    %90 = vector.load %arg9[%c0_37, %c0_38, %c0_39] : memref<2x1x32xf32, #tpu.memory_space<vmem>>, vector<1x1x32xf32>
    %91 = vector.shape_cast %90 : vector<1x1x32xf32> to vector<1x32xf32>
    %c0_40 = arith.constant 0 : index
    %c0_41 = arith.constant 0 : index
    %c0_42 = arith.constant 0 : index
    %92 = vector.load %arg10[%c0_40, %c0_41, %c0_42] : memref<2x1x32xf32, #tpu.memory_space<vmem>>, vector<1x1x32xf32>
    %93 = vector.shape_cast %92 : vector<1x1x32xf32> to vector<1x32xf32>
    %cst_43 = arith.constant dense<0.000000e+00> : vector<8xf32>
    %94 = vector.multi_reduction <add>, %89, %cst_43 [1] : vector<8x32xf32> to vector<8xf32>
    %95 = vector.shape_cast %94 : vector<8xf32> to vector<8x1xf32>
    %cst_44 = arith.constant 3.200000e+01 : f32
    %96 = vector.broadcast %cst_44 : f32 to vector<8x1xf32>
    %97 = arith.divf %95, %96 : vector<8x1xf32>
    %98 = vector.broadcast %97 : vector<8x1xf32> to vector<8x32xf32>
    %99 = arith.subf %89, %98 : vector<8x32xf32>
    %100 = arith.mulf %99, %99 : vector<8x32xf32>
    %cst_45 = arith.constant dense<0.000000e+00> : vector<8xf32>
    %101 = vector.multi_reduction <add>, %100, %cst_45 [1] : vector<8x32xf32> to vector<8xf32>
    %102 = vector.shape_cast %101 : vector<8xf32> to vector<8x1xf32>
    %cst_46 = arith.constant 3.200000e+01 : f32
    %103 = vector.broadcast %cst_46 : f32 to vector<8x1xf32>
    %104 = arith.divf %102, %103 : vector<8x1xf32>
    %cst_47 = arith.constant 9.99999996E-13 : f32
    %105 = vector.broadcast %cst_47 : f32 to vector<8x1xf32>
    %106 = arith.addf %104, %105 : vector<8x1xf32>
    %107 = math.rsqrt %106 : vector<8x1xf32>
    %108 = vector.broadcast %107 : vector<8x1xf32> to vector<8x32xf32>
    %109 = arith.mulf %99, %108 : vector<8x32xf32>
    %110 = vector.broadcast %91 : vector<1x32xf32> to vector<8x32xf32>
    %111 = arith.mulf %109, %110 : vector<8x32xf32>
    %112 = vector.broadcast %93 : vector<1x32xf32> to vector<8x32xf32>
    %113 = arith.addf %111, %112 : vector<8x32xf32>
    %c0_48 = arith.constant 0 : index
    %c0_49 = arith.constant 0 : index
    %c0_50 = arith.constant 0 : index
    %114 = vector.load %arg11[%c0_48, %c0_49, %c0_50] : memref<2x32x64xbf16, #tpu.memory_space<vmem>>, vector<1x32x64xbf16>
    %115 = vector.shape_cast %114 : vector<1x32x64xbf16> to vector<32x64xbf16>
    %c0_51 = arith.constant 0 : index
    %c0_52 = arith.constant 0 : index
    %c0_53 = arith.constant 0 : index
    %116 = vector.load %arg12[%c0_51, %c0_52, %c0_53] : memref<2x1x64xf32, #tpu.memory_space<vmem>>, vector<1x1x64xf32>
    %117 = vector.shape_cast %116 : vector<1x1x64xf32> to vector<1x64xf32>
    %118 = arith.truncf %113 : vector<8x32xf32> to vector<8x32xbf16>
    %cst_54 = arith.constant dense<0.000000e+00> : vector<8x64xf32>
    %119 = tpu.matmul %118, %115, %cst_54 {dimension_numbers = #tpu.dot_dimension_numbers<[1], [0], [0], [1], [0, 0, 1, 1], [], []>} : vector<8x32xbf16>, vector<32x64xbf16>, vector<8x64xf32> -> vector<8x64xf32>
    %120 = vector.broadcast %117 : vector<1x64xf32> to vector<8x64xf32>
    %121 = arith.addf %119, %120 : vector<8x64xf32>
    %cst_55 = arith.constant 5.000000e-01 : f32
    %122 = vector.broadcast %cst_55 : f32 to vector<8x64xf32>
    %123 = arith.mulf %122, %121 : vector<8x64xf32>
    %cst_56 = arith.constant 4.471500e-02 : f32
    %124 = vector.broadcast %cst_56 : f32 to vector<8x64xf32>
    %125 = arith.mulf %124, %121 : vector<8x64xf32>
    %126 = arith.mulf %125, %121 : vector<8x64xf32>
    %127 = arith.mulf %126, %121 : vector<8x64xf32>
    %128 = arith.addf %121, %127 : vector<8x64xf32>
    %cst_57 = arith.constant 0.797884583 : f32
    %129 = vector.broadcast %cst_57 : f32 to vector<8x64xf32>
    %130 = arith.mulf %129, %128 : vector<8x64xf32>
    %131 = math.tanh %130 : vector<8x64xf32>
    %cst_58 = arith.constant 1.000000e+00 : f32
    %132 = vector.broadcast %cst_58 : f32 to vector<8x64xf32>
    %133 = arith.addf %132, %131 : vector<8x64xf32>
    %134 = arith.mulf %123, %133 : vector<8x64xf32>
    %c0_59 = arith.constant 0 : index
    %c0_60 = arith.constant 0 : index
    %c0_61 = arith.constant 0 : index
    %135 = vector.load %arg13[%c0_59, %c0_60, %c0_61] : memref<2x64x32xbf16, #tpu.memory_space<vmem>>, vector<1x64x32xbf16>
    %136 = vector.shape_cast %135 : vector<1x64x32xbf16> to vector<64x32xbf16>
    %c0_62 = arith.constant 0 : index
    %c0_63 = arith.constant 0 : index
    %c0_64 = arith.constant 0 : index
    %137 = vector.load %arg14[%c0_62, %c0_63, %c0_64] : memref<2x1x32xf32, #tpu.memory_space<vmem>>, vector<1x1x32xf32>
    %138 = vector.shape_cast %137 : vector<1x1x32xf32> to vector<1x32xf32>
    %139 = arith.truncf %134 : vector<8x64xf32> to vector<8x64xbf16>
    %cst_65 = arith.constant dense<0.000000e+00> : vector<8x32xf32>
    %140 = tpu.matmul %139, %136, %cst_65 {dimension_numbers = #tpu.dot_dimension_numbers<[1], [0], [0], [1], [0, 0, 1, 1], [], []>} : vector<8x64xbf16>, vector<64x32xbf16>, vector<8x32xf32> -> vector<8x32xf32>
    %141 = vector.broadcast %138 : vector<1x32xf32> to vector<8x32xf32>
    %142 = arith.addf %140, %141 : vector<8x32xf32>
    %143 = arith.addf %142, %113 : vector<8x32xf32>
    %c0_66 = arith.constant 0 : index
    %c0_67 = arith.constant 0 : index
    %c0_68 = arith.constant 0 : index
    %144 = vector.load %arg15[%c0_66, %c0_67, %c0_68] : memref<2x1x32xf32, #tpu.memory_space<vmem>>, vector<1x1x32xf32>
    %145 = vector.shape_cast %144 : vector<1x1x32xf32> to vector<1x32xf32>
    %c0_69 = arith.constant 0 : index
    %c0_70 = arith.constant 0 : index
    %c0_71 = arith.constant 0 : index
    %146 = vector.load %arg16[%c0_69, %c0_70, %c0_71] : memref<2x1x32xf32, #tpu.memory_space<vmem>>, vector<1x1x32xf32>
    %147 = vector.shape_cast %146 : vector<1x1x32xf32> to vector<1x32xf32>
    %cst_72 = arith.constant dense<0.000000e+00> : vector<8xf32>
    %148 = vector.multi_reduction <add>, %143, %cst_72 [1] : vector<8x32xf32> to vector<8xf32>
    %149 = vector.shape_cast %148 : vector<8xf32> to vector<8x1xf32>
    %cst_73 = arith.constant 3.200000e+01 : f32
    %150 = vector.broadcast %cst_73 : f32 to vector<8x1xf32>
    %151 = arith.divf %149, %150 : vector<8x1xf32>
    %152 = vector.broadcast %151 : vector<8x1xf32> to vector<8x32xf32>
    %153 = arith.subf %143, %152 : vector<8x32xf32>
    %154 = arith.mulf %153, %153 : vector<8x32xf32>
    %cst_74 = arith.constant dense<0.000000e+00> : vector<8xf32>
    %155 = vector.multi_reduction <add>, %154, %cst_74 [1] : vector<8x32xf32> to vector<8xf32>
    %156 = vector.shape_cast %155 : vector<8xf32> to vector<8x1xf32>
    %cst_75 = arith.constant 3.200000e+01 : f32
    %157 = vector.broadcast %cst_75 : f32 to vector<8x1xf32>
    %158 = arith.divf %156, %157 : vector<8x1xf32>
    %cst_76 = arith.constant 9.99999996E-13 : f32
    %159 = vector.broadcast %cst_76 : f32 to vector<8x1xf32>
    %160 = arith.addf %158, %159 : vector<8x1xf32>
    %161 = math.rsqrt %160 : vector<8x1xf32>
    %162 = vector.broadcast %161 : vector<8x1xf32> to vector<8x32xf32>
    %163 = arith.mulf %153, %162 : vector<8x32xf32>
    %164 = vector.broadcast %145 : vector<1x32xf32> to vector<8x32xf32>
    %165 = arith.mulf %163, %164 : vector<8x32xf32>
    %166 = vector.broadcast %147 : vector<1x32xf32> to vector<8x32xf32>
    %167 = arith.addf %165, %166 : vector<8x32xf32>
    %c1 = arith.constant 1 : index
    %c0_77 = arith.constant 0 : index
    %c0_78 = arith.constant 0 : index
    %168 = vector.load %arg5[%c1, %c0_77, %c0_78] : memref<2x32x96xbf16, #tpu.memory_space<vmem>>, vector<1x32x96xbf16>
    %169 = vector.shape_cast %168 : vector<1x32x96xbf16> to vector<32x96xbf16>
    %c1_79 = arith.constant 1 : index
    %c0_80 = arith.constant 0 : index
    %c0_81 = arith.constant 0 : index
    %170 = vector.load %arg6[%c1_79, %c0_80, %c0_81] : memref<2x1x96xf32, #tpu.memory_space<vmem>>, vector<1x1x96xf32>
    %171 = vector.shape_cast %170 : vector<1x1x96xf32> to vector<1x96xf32>
    %172 = arith.truncf %167 : vector<8x32xf32> to vector<8x32xbf16>
    %cst_82 = arith.constant dense<0.000000e+00> : vector<8x96xf32>
    %173 = tpu.matmul %172, %169, %cst_82 {dimension_numbers = #tpu.dot_dimension_numbers<[1], [0], [0], [1], [0, 0, 1, 1], [], []>} : vector<8x32xbf16>, vector<32x96xbf16>, vector<8x96xf32> -> vector<8x96xf32>
    %174 = vector.broadcast %171 : vector<1x96xf32> to vector<8x96xf32>
    %175 = arith.addf %173, %174 : vector<8x96xf32>
    %176 = vector.extract_strided_slice %175 {offsets = [0, 0], sizes = [8, 16], strides = [1, 1]} : vector<8x96xf32> to vector<8x16xf32>
    %177 = arith.truncf %176 : vector<8x16xf32> to vector<8x16xbf16>
    %178 = vector.extract_strided_slice %175 {offsets = [0, 32], sizes = [8, 16], strides = [1, 1]} : vector<8x96xf32> to vector<8x16xf32>
    %179 = arith.truncf %178 : vector<8x16xf32> to vector<8x16xbf16>
    %180 = vector.extract_strided_slice %175 {offsets = [0, 64], sizes = [8, 16], strides = [1, 1]} : vector<8x96xf32> to vector<8x16xf32>
    %181 = arith.truncf %180 : vector<8x16xf32> to vector<8x16xbf16>
    %cst_83 = arith.constant dense<0.000000e+00> : vector<8x8xf32>
    %182 = tpu.matmul %177, %179, %cst_83 {dimension_numbers = #tpu.dot_dimension_numbers<[1], [1], [0], [0], [0, 0, 1, 0], [], []>} : vector<8x16xbf16>, vector<8x16xbf16>, vector<8x8xf32> -> vector<8x8xf32>
    %cst_84 = arith.constant 2.500000e-01 : f32
    %183 = vector.broadcast %cst_84 : f32 to vector<8x8xf32>
    %184 = arith.mulf %182, %183 : vector<8x8xf32>
    %185 = vector.broadcast %1 : vector<1x8xf32> to vector<8x8xf32>
    %186 = arith.addf %184, %185 : vector<8x8xf32>
    %cst_85 = arith.constant dense<0xFF800000> : vector<8xf32>
    %187 = vector.multi_reduction <maximumf>, %186, %cst_85 [1] : vector<8x8xf32> to vector<8xf32>
    %188 = vector.shape_cast %187 : vector<8xf32> to vector<8x1xf32>
    %189 = vector.broadcast %188 : vector<8x1xf32> to vector<8x8xf32>
    %190 = arith.subf %186, %189 : vector<8x8xf32>
    %191 = math.exp %190 : vector<8x8xf32>
    %cst_86 = arith.constant dense<0.000000e+00> : vector<8xf32>
    %192 = vector.multi_reduction <add>, %191, %cst_86 [1] : vector<8x8xf32> to vector<8xf32>
    %193 = vector.shape_cast %192 : vector<8xf32> to vector<8x1xf32>
    %194 = tpu.reciprocal %193 {approx = true} : vector<8x1xf32> -> vector<8x1xf32>
    %195 = vector.broadcast %194 : vector<8x1xf32> to vector<8x8xf32>
    %196 = arith.mulf %191, %195 : vector<8x8xf32>
    %197 = arith.truncf %196 : vector<8x8xf32> to vector<8x8xbf16>
    %cst_87 = arith.constant dense<0.000000e+00> : vector<8x16xf32>
    %198 = tpu.matmul %197, %181, %cst_87 {dimension_numbers = #tpu.dot_dimension_numbers<[1], [0], [0], [1], [0, 0, 1, 1], [], []>} : vector<8x8xbf16>, vector<8x16xbf16>, vector<8x16xf32> -> vector<8x16xf32>
    %199 = vector.extract_strided_slice %175 {offsets = [0, 16], sizes = [8, 16], strides = [1, 1]} : vector<8x96xf32> to vector<8x16xf32>
    %200 = arith.truncf %199 : vector<8x16xf32> to vector<8x16xbf16>
    %201 = vector.extract_strided_slice %175 {offsets = [0, 48], sizes = [8, 16], strides = [1, 1]} : vector<8x96xf32> to vector<8x16xf32>
    %202 = arith.truncf %201 : vector<8x16xf32> to vector<8x16xbf16>
    %203 = vector.extract_strided_slice %175 {offsets = [0, 80], sizes = [8, 16], strides = [1, 1]} : vector<8x96xf32> to vector<8x16xf32>
    %204 = arith.truncf %203 : vector<8x16xf32> to vector<8x16xbf16>
    %cst_88 = arith.constant dense<0.000000e+00> : vector<8x8xf32>
    %205 = tpu.matmul %200, %202, %cst_88 {dimension_numbers = #tpu.dot_dimension_numbers<[1], [1], [0], [0], [0, 0, 1, 0], [], []>} : vector<8x16xbf16>, vector<8x16xbf16>, vector<8x8xf32> -> vector<8x8xf32>
    %cst_89 = arith.constant 2.500000e-01 : f32
    %206 = vector.broadcast %cst_89 : f32 to vector<8x8xf32>
    %207 = arith.mulf %205, %206 : vector<8x8xf32>
    %208 = vector.broadcast %1 : vector<1x8xf32> to vector<8x8xf32>
    %209 = arith.addf %207, %208 : vector<8x8xf32>
    %cst_90 = arith.constant dense<0xFF800000> : vector<8xf32>
    %210 = vector.multi_reduction <maximumf>, %209, %cst_90 [1] : vector<8x8xf32> to vector<8xf32>
    %211 = vector.shape_cast %210 : vector<8xf32> to vector<8x1xf32>
    %212 = vector.broadcast %211 : vector<8x1xf32> to vector<8x8xf32>
    %213 = arith.subf %209, %212 : vector<8x8xf32>
    %214 = math.exp %213 : vector<8x8xf32>
    %cst_91 = arith.constant dense<0.000000e+00> : vector<8xf32>
    %215 = vector.multi_reduction <add>, %214, %cst_91 [1] : vector<8x8xf32> to vector<8xf32>
    %216 = vector.shape_cast %215 : vector<8xf32> to vector<8x1xf32>
    %217 = tpu.reciprocal %216 {approx = true} : vector<8x1xf32> -> vector<8x1xf32>
    %218 = vector.broadcast %217 : vector<8x1xf32> to vector<8x8xf32>
    %219 = arith.mulf %214, %218 : vector<8x8xf32>
    %220 = arith.truncf %219 : vector<8x8xf32> to vector<8x8xbf16>
    %cst_92 = arith.constant dense<0.000000e+00> : vector<8x16xf32>
    %221 = tpu.matmul %220, %204, %cst_92 {dimension_numbers = #tpu.dot_dimension_numbers<[1], [0], [0], [1], [0, 0, 1, 1], [], []>} : vector<8x8xbf16>, vector<8x16xbf16>, vector<8x16xf32> -> vector<8x16xf32>
    %222 = tpu.concatenate %198, %221 in 1 : vector<8x16xf32>, vector<8x16xf32> -> vector<8x32xf32>
    %c1_93 = arith.constant 1 : index
    %c0_94 = arith.constant 0 : index
    %c0_95 = arith.constant 0 : index
    %223 = vector.load %arg7[%c1_93, %c0_94, %c0_95] : memref<2x32x32xbf16, #tpu.memory_space<vmem>>, vector<1x32x32xbf16>
    %224 = vector.shape_cast %223 : vector<1x32x32xbf16> to vector<32x32xbf16>
    %c1_96 = arith.constant 1 : index
    %c0_97 = arith.constant 0 : index
    %c0_98 = arith.constant 0 : index
    %225 = vector.load %arg8[%c1_96, %c0_97, %c0_98] : memref<2x1x32xf32, #tpu.memory_space<vmem>>, vector<1x1x32xf32>
    %226 = vector.shape_cast %225 : vector<1x1x32xf32> to vector<1x32xf32>
    %227 = arith.truncf %222 : vector<8x32xf32> to vector<8x32xbf16>
    %cst_99 = arith.constant dense<0.000000e+00> : vector<8x32xf32>
    %228 = tpu.matmul %227, %224, %cst_99 {dimension_numbers = #tpu.dot_dimension_numbers<[1], [0], [0], [1], [0, 0, 1, 1], [], []>} : vector<8x32xbf16>, vector<32x32xbf16>, vector<8x32xf32> -> vector<8x32xf32>
    %229 = vector.broadcast %226 : vector<1x32xf32> to vector<8x32xf32>
    %230 = arith.addf %228, %229 : vector<8x32xf32>
    %231 = arith.addf %230, %167 : vector<8x32xf32>
    %c1_100 = arith.constant 1 : index
    %c0_101 = arith.constant 0 : index
    %c0_102 = arith.constant 0 : index
    %232 = vector.load %arg9[%c1_100, %c0_101, %c0_102] : memref<2x1x32xf32, #tpu.memory_space<vmem>>, vector<1x1x32xf32>
    %233 = vector.shape_cast %232 : vector<1x1x32xf32> to vector<1x32xf32>
    %c1_103 = arith.constant 1 : index
    %c0_104 = arith.constant 0 : index
    %c0_105 = arith.constant 0 : index
    %234 = vector.load %arg10[%c1_103, %c0_104, %c0_105] : memref<2x1x32xf32, #tpu.memory_space<vmem>>, vector<1x1x32xf32>
    %235 = vector.shape_cast %234 : vector<1x1x32xf32> to vector<1x32xf32>
    %cst_106 = arith.constant dense<0.000000e+00> : vector<8xf32>
    %236 = vector.multi_reduction <add>, %231, %cst_106 [1] : vector<8x32xf32> to vector<8xf32>
    %237 = vector.shape_cast %236 : vector<8xf32> to vector<8x1xf32>
    %cst_107 = arith.constant 3.200000e+01 : f32
    %238 = vector.broadcast %cst_107 : f32 to vector<8x1xf32>
    %239 = arith.divf %237, %238 : vector<8x1xf32>
    %240 = vector.broadcast %239 : vector<8x1xf32> to vector<8x32xf32>
    %241 = arith.subf %231, %240 : vector<8x32xf32>
    %242 = arith.mulf %241, %241 : vector<8x32xf32>
    %cst_108 = arith.constant dense<0.000000e+00> : vector<8xf32>
    %243 = vector.multi_reduction <add>, %242, %cst_108 [1] : vector<8x32xf32> to vector<8xf32>
    %244 = vector.shape_cast %243 : vector<8xf32> to vector<8x1xf32>
    %cst_109 = arith.constant 3.200000e+01 : f32
    %245 = vector.broadcast %cst_109 : f32 to vector<8x1xf32>
    %246 = arith.divf %244, %245 : vector<8x1xf32>
    %cst_110 = arith.constant 9.99999996E-13 : f32
    %247 = vector.broadcast %cst_110 : f32 to vector<8x1xf32>
    %248 = arith.addf %246, %247 : vector<8x1xf32>
    %249 = math.rsqrt %248 : vector<8x1xf32>
    %250 = vector.broadcast %249 : vector<8x1xf32> to vector<8x32xf32>
    %251 = arith.mulf %241, %250 : vector<8x32xf32>
    %252 = vector.broadcast %233 : vector<1x32xf32> to vector<8x32xf32>
    %253 = arith.mulf %251, %252 : vector<8x32xf32>
    %254 = vector.broadcast %235 : vector<1x32xf32> to vector<8x32xf32>
    %255 = arith.addf %253, %254 : vector<8x32xf32>
    %c1_111 = arith.constant 1 : index
    %c0_112 = arith.constant 0 : index
    %c0_113 = arith.constant 0 : index
    %256 = vector.load %arg11[%c1_111, %c0_112, %c0_113] : memref<2x32x64xbf16, #tpu.memory_space<vmem>>, vector<1x32x64xbf16>
    %257 = vector.shape_cast %256 : vector<1x32x64xbf16> to vector<32x64xbf16>
    %c1_114 = arith.constant 1 : index
    %c0_115 = arith.constant 0 : index
    %c0_116 = arith.constant 0 : index
    %258 = vector.load %arg12[%c1_114, %c0_115, %c0_116] : memref<2x1x64xf32, #tpu.memory_space<vmem>>, vector<1x1x64xf32>
    %259 = vector.shape_cast %258 : vector<1x1x64xf32> to vector<1x64xf32>
    %260 = arith.truncf %255 : vector<8x32xf32> to vector<8x32xbf16>
    %cst_117 = arith.constant dense<0.000000e+00> : vector<8x64xf32>
    %261 = tpu.matmul %260, %257, %cst_117 {dimension_numbers = #tpu.dot_dimension_numbers<[1], [0], [0], [1], [0, 0, 1, 1], [], []>} : vector<8x32xbf16>, vector<32x64xbf16>, vector<8x64xf32> -> vector<8x64xf32>
    %262 = vector.broadcast %259 : vector<1x64xf32> to vector<8x64xf32>
    %263 = arith.addf %261, %262 : vector<8x64xf32>
    %cst_118 = arith.constant 5.000000e-01 : f32
    %264 = vector.broadcast %cst_118 : f32 to vector<8x64xf32>
    %265 = arith.mulf %264, %263 : vector<8x64xf32>
    %cst_119 = arith.constant 4.471500e-02 : f32
    %266 = vector.broadcast %cst_119 : f32 to vector<8x64xf32>
    %267 = arith.mulf %266, %263 : vector<8x64xf32>
    %268 = arith.mulf %267, %263 : vector<8x64xf32>
    %269 = arith.mulf %268, %263 : vector<8x64xf32>
    %270 = arith.addf %263, %269 : vector<8x64xf32>
    %cst_120 = arith.constant 0.797884583 : f32
    %271 = vector.broadcast %cst_120 : f32 to vector<8x64xf32>
    %272 = arith.mulf %271, %270 : vector<8x64xf32>
    %273 = math.tanh %272 : vector<8x64xf32>
    %cst_121 = arith.constant 1.000000e+00 : f32
    %274 = vector.broadcast %cst_121 : f32 to vector<8x64xf32>
    %275 = arith.addf %274, %273 : vector<8x64xf32>
    %276 = arith.mulf %265, %275 : vector<8x64xf32>
    %c1_122 = arith.constant 1 : index
    %c0_123 = arith.constant 0 : index
    %c0_124 = arith.constant 0 : index
    %277 = vector.load %arg13[%c1_122, %c0_123, %c0_124] : memref<2x64x32xbf16, #tpu.memory_space<vmem>>, vector<1x64x32xbf16>
    %278 = vector.shape_cast %277 : vector<1x64x32xbf16> to vector<64x32xbf16>
    %c1_125 = arith.constant 1 : index
    %c0_126 = arith.constant 0 : index
    %c0_127 = arith.constant 0 : index
    %279 = vector.load %arg14[%c1_125, %c0_126, %c0_127] : memref<2x1x32xf32, #tpu.memory_space<vmem>>, vector<1x1x32xf32>
    %280 = vector.shape_cast %279 : vector<1x1x32xf32> to vector<1x32xf32>
    %281 = arith.truncf %276 : vector<8x64xf32> to vector<8x64xbf16>
    %cst_128 = arith.constant dense<0.000000e+00> : vector<8x32xf32>
    %282 = tpu.matmul %281, %278, %cst_128 {dimension_numbers = #tpu.dot_dimension_numbers<[1], [0], [0], [1], [0, 0, 1, 1], [], []>} : vector<8x64xbf16>, vector<64x32xbf16>, vector<8x32xf32> -> vector<8x32xf32>
    %283 = vector.broadcast %280 : vector<1x32xf32> to vector<8x32xf32>
    %284 = arith.addf %282, %283 : vector<8x32xf32>
    %285 = arith.addf %284, %255 : vector<8x32xf32>
    %c1_129 = arith.constant 1 : index
    %c0_130 = arith.constant 0 : index
    %c0_131 = arith.constant 0 : index
    %286 = vector.load %arg15[%c1_129, %c0_130, %c0_131] : memref<2x1x32xf32, #tpu.memory_space<vmem>>, vector<1x1x32xf32>
    %287 = vector.shape_cast %286 : vector<1x1x32xf32> to vector<1x32xf32>
    %c1_132 = arith.constant 1 : index
    %c0_133 = arith.constant 0 : index
    %c0_134 = arith.constant 0 : index
    %288 = vector.load %arg16[%c1_132, %c0_133, %c0_134] : memref<2x1x32xf32, #tpu.memory_space<vmem>>, vector<1x1x32xf32>
    %289 = vector.shape_cast %288 : vector<1x1x32xf32> to vector<1x32xf32>
    %cst_135 = arith.constant dense<0.000000e+00> : vector<8xf32>
    %290 = vector.multi_reduction <add>, %285, %cst_135 [1] : vector<8x32xf32> to vector<8xf32>
    %291 = vector.shape_cast %290 : vector<8xf32> to vector<8x1xf32>
    %cst_136 = arith.constant 3.200000e+01 : f32
    %292 = vector.broadcast %cst_136 : f32 to vector<8x1xf32>
    %293 = arith.divf %291, %292 : vector<8x1xf32>
    %294 = vector.broadcast %293 : vector<8x1xf32> to vector<8x32xf32>
    %295 = arith.subf %285, %294 : vector<8x32xf32>
    %296 = arith.mulf %295, %295 : vector<8x32xf32>
    %cst_137 = arith.constant dense<0.000000e+00> : vector<8xf32>
    %297 = vector.multi_reduction <add>, %296, %cst_137 [1] : vector<8x32xf32> to vector<8xf32>
    %298 = vector.shape_cast %297 : vector<8xf32> to vector<8x1xf32>
    %cst_138 = arith.constant 3.200000e+01 : f32
    %299 = vector.broadcast %cst_138 : f32 to vector<8x1xf32>
    %300 = arith.divf %298, %299 : vector<8x1xf32>
    %cst_139 = arith.constant 9.99999996E-13 : f32
    %301 = vector.broadcast %cst_139 : f32 to vector<8x1xf32>
    %302 = arith.addf %300, %301 : vector<8x1xf32>
    %303 = math.rsqrt %302 : vector<8x1xf32>
    %304 = vector.broadcast %303 : vector<8x1xf32> to vector<8x32xf32>
    %305 = arith.mulf %295, %304 : vector<8x32xf32>
    %306 = vector.broadcast %287 : vector<1x32xf32> to vector<8x32xf32>
    %307 = arith.mulf %305, %306 : vector<8x32xf32>
    %308 = vector.broadcast %289 : vector<1x32xf32> to vector<8x32xf32>
    %309 = arith.addf %307, %308 : vector<8x32xf32>
    %c0_140 = arith.constant 0 : index
    %c0_141 = arith.constant 0 : index
    %310 = vector.load %arg17[%c0_140, %c0_141] : memref<32x8xbf16, #tpu.memory_space<vmem>>, vector<32x8xbf16>
    %c0_142 = arith.constant 0 : index
    %c0_143 = arith.constant 0 : index
    %311 = vector.load %arg18[%c0_142, %c0_143] : memref<1x8xf32, #tpu.memory_space<vmem>>, vector<1x8xf32>
    %312 = arith.truncf %309 : vector<8x32xf32> to vector<8x32xbf16>
    %cst_144 = arith.constant dense<0.000000e+00> : vector<8x8xf32>
    %313 = tpu.matmul %312, %310, %cst_144 {dimension_numbers = #tpu.dot_dimension_numbers<[1], [0], [0], [1], [0, 0, 1, 1], [], []>} : vector<8x32xbf16>, vector<32x8xbf16>, vector<8x8xf32> -> vector<8x8xf32>
    %314 = vector.broadcast %311 : vector<1x8xf32> to vector<8x8xf32>
    %315 = arith.addf %313, %314 : vector<8x8xf32>
    %c0_145 = arith.constant 0 : index
    %c0_146 = arith.constant 0 : index
    %c0_147 = arith.constant 0 : index
    %316 = vector.load %arg19[%c0_145, %c0_146, %c0_147] : memref<1x8x8xf32, #tpu.memory_space<vmem>>, vector<1x8x8xf32>
    %317 = vector.shape_cast %316 : vector<1x8x8xf32> to vector<8x8xf32>
    %318 = vector.shape_cast %315 : vector<8x8xf32> to vector<1x8x8xf32>
    tpu.vector_store %arg19[%c0_145, %c0_146, %c0_147], %318 {strides = array<i32>} : memref<1x8x8xf32, #tpu.memory_space<vmem>>, vector<1x8x8xf32>,
    return
  }
  func.func @transform_0(%arg0: i32) -> (i32, i32, i32) {
    %c0_i32 = arith.constant 0 : i32
    %c0_i32_0 = arith.constant 0 : i32
    %c0_i32_1 = arith.constant 0 : i32
    return %arg0, %c0_i32, %c0_i32_0 : i32, i32, i32
  }
  func.func @transform_1(%arg0: i32) -> (i32, i32, i32) {
    %c0_i32 = arith.constant 0 : i32
    %c0_i32_0 = arith.constant 0 : i32
    %c0_i32_1 = arith.constant 0 : i32
    return %arg0, %c0_i32, %c0_i32_0 : i32, i32, i32
  }
  func.func @transform_2(%arg0: i32) -> (i32, i32) {
    %c0_i32 = arith.constant 0 : i32
    %c0_i32_0 = arith.constant 0 : i32
    %c0_i32_1 = arith.constant 0 : i32
    return %c0_i32, %c0_i32_0 : i32, i32
  }
  func.func @transform_3(%arg0: i32) -> (i32, i32) {
    %c0_i32 = arith.constant 0 : i32
    %c0_i32_0 = arith.constant 0 : i32
    %c0_i32_1 = arith.constant 0 : i32
    return %c0_i32, %c0_i32_0 : i32, i32
  }
  func.func @transform_4(%arg0: i32) -> (i32, i32, i32) {
    %c0_i32 = arith.constant 0 : i32
    %c0_i32_0 = arith.constant 0 : i32
    %c0_i32_1 = arith.constant 0 : i32
    %c0_i32_2 = arith.constant 0 : i32
    return %c0_i32, %c0_i32_0, %c0_i32_1 : i32, i32, i32
  }
  func.func @transform_5(%arg0: i32) -> (i32, i32, i32) {
    %c0_i32 = arith.constant 0 : i32
    %c0_i32_0 = arith.constant 0 : i32
    %c0_i32_1 = arith.constant 0 : i32
    %c0_i32_2 = arith.constant 0 : i32
    return %c0_i32, %c0_i32_0, %c0_i32_1 : i32, i32, i32
  }
  func.func @transform_6(%arg0: i32) -> (i32, i32, i32) {
    %c0_i32 = arith.constant 0 : i32
    %c0_i32_0 = arith.constant 0 : i32
    %c0_i32_1 = arith.constant 0 : i32
    %c0_i32_2 = arith.constant 0 : i32
    return %c0_i32, %c0_i32_0, %c0_i32_1 : i32, i32, i32
  }
  func.func @transform_7(%arg0: i32) -> (i32, i32, i32) {
    %c0_i32 = arith.constant 0 : i32
    %c0_i32_0 = arith.constant 0 : i32
    %c0_i32_1 = arith.constant 0 : i32
    %c0_i32_2 = arith.constant 0 : i32
    return %c0_i32, %c0_i32_0, %c0_i32_1 : i32, i32, i32
  }
  func.func @transform_8(%arg0: i32) -> (i32, i32, i32) {
    %c0_i32 = arith.constant 0 : i32
    %c0_i32_0 = arith.constant 0 : i32
    %c0_i32_1 = arith.constant 0 : i32
    %c0_i32_2 = arith.constant 0 : i32
    return %c0_i32, %c0_i32_0, %c0_i32_1 : i32, i32, i32
  }
  func.func @transform_9(%arg0: i32) -> (i32, i32, i32) {
    %c0_i32 = arith.constant 0 : i32
    %c0_i32_0 = arith.constant 0 : i32
    %c0_i32_1 = arith.constant 0 : i32
    %c0_i32_2 = arith.constant 0 : i32
    return %c0_i32, %c0_i32_0, %c0_i32_1 : i32, i32, i32
  }
  func.func @transform_10(%arg0: i32) -> (i32, i32, i32) {
    %c0_i32 = arith.constant 0 : i32
    %c0_i32_0 = arith.constant 0 : i32
    %c0_i32_1 = arith.constant 0 : i32
    %c0_i32_2 = arith.constant 0 : i32
    return %c0_i32, %c0_i32_0, %c0_i32_1 : i32, i32, i32
  }
  func.func @transform_11(%arg0: i32) -> (i32, i32, i32) {
    %c0_i32 = arith.constant 0 : i32
    %c0_i32_0 = arith.constant 0 : i32
    %c0_i32_1 = arith.constant 0 : i32
    %c0_i32_2 = arith.constant 0 : i32
    return %c0_i32, %c0_i32_0, %c0_i32_1 : i32, i32, i32
  }
  func.func @transform_12(%arg0: i32) -> (i32, i32, i32) {
    %c0_i32 = arith.constant 0 : i32
    %c0_i32_0 = arith.constant 0 : i32
    %c0_i32_1 = arith.constant 0 : i32
    %c0_i32_2 = arith.constant 0 : i32
    return %c0_i32, %c0_i32_0, %c0_i32_1 : i32, i32, i32
  }
  func.func @transform_13(%arg0: i32) -> (i32, i32, i32) {
    %c0_i32 = arith.constant 0 : i32
    %c0_i32_0 = arith.constant 0 : i32
    %c0_i32_1 = arith.constant 0 : i32
    %c0_i32_2 = arith.constant 0 : i32
    return %c0_i32, %c0_i32_0, %c0_i32_1 : i32, i32, i32
  }
  func.func @transform_14(%arg0: i32) -> (i32, i32, i32) {
    %c0_i32 = arith.constant 0 : i32
    %c0_i32_0 = arith.constant 0 : i32
    %c0_i32_1 = arith.constant 0 : i32
    %c0_i32_2 = arith.constant 0 : i32
    return %c0_i32, %c0_i32_0, %c0_i32_1 : i32, i32, i32
  }
  func.func @transform_15(%arg0: i32) -> (i32, i32, i32) {
    %c0_i32 = arith.constant 0 : i32
    %c0_i32_0 = arith.constant 0 : i32
    %c0_i32_1 = arith.constant 0 : i32
    %c0_i32_2 = arith.constant 0 : i32
    return %c0_i32, %c0_i32_0, %c0_i32_1 : i32, i32, i32
  }
  func.func @transform_16(%arg0: i32) -> (i32, i32) {
    %c0_i32 = arith.constant 0 : i32
    %c0_i32_0 = arith.constant 0 : i32
    %c0_i32_1 = arith.constant 0 : i32
    return %c0_i32, %c0_i32_0 : i32, i32
  }
  func.func @transform_17(%arg0: i32) -> (i32, i32) {
    %c0_i32 = arith.constant 0 : i32
    %c0_i32_0 = arith.constant 0 : i32
    %c0_i32_1 = arith.constant 0 : i32
    return %c0_i32, %c0_i32_0 : i32, i32
  }
  func.func @transform_18(%arg0: i32) -> (i32, i32, i32) {
    %c0_i32 = arith.constant 0 : i32
    %c0_i32_0 = arith.constant 0 : i32
    %c0_i32_1 = arith.constant 0 : i32
    return %arg0, %c0_i32, %c0_i32_0 : i32, i32, i32
  }
}

</mosaic_0001>

<llo_original>
// kernel: bert_crf_forward.3
$region0: #{bert_crf_forward.3}
  #allocation0 [shape = 'u32[]', space=smem, size = 0x4, offset = 0x4, fixed_abs, tag = 'smem constant byte address 0x4 - core index']
  #allocation1 [shape = 'u32[72,128]{1,0:T(1,128)}', space=vmem, size = 0x9000, scoped, tag = 'internal scratch']
  %s0 = inlined_call_operand.vmem [shape: f32[2,8,8], index: 0, kind: input, shape index: {}]
  %s1 = inlined_call_operand.vmem [shape: s32[2,8], index: 1, kind: input, shape index: {}]
  %s2 = inlined_call_operand.vmem [shape: f32[2,8], index: 2, kind: input, shape index: {}]
  %s3 = inlined_call_operand.vmem [shape: f32[1,8], index: 3, kind: input, shape index: {}]
  %s4 = inlined_call_operand.vmem [shape: f32[8,8], index: 4, kind: input, shape index: {}]
  %s5 = inlined_call_operand.vmem [shape: f32[1,8], index: 5, kind: input, shape index: {}]
  %s6 = inlined_call_operand.vmem [shape: f32[2,1], index: 6, kind: output, shape index: {}]
  %s7 = sld [smem:[#allocation0]]
  $region34: #{bert_crf_forward.3} parent=0
    _
  %s9 = ssub.s32 1, %s7
  %s10 = scalar_select 0, %s9, %s7
  // Predicated region
  $region2: #{bert_crf_forward.3} parent=0 // pred_check
    _
  $region3: #{bert_crf_forward.3} parent=0 // pred_check_branch
    %12 = sbr.rel (0) target = $region5
  $region4: #{bert_crf_forward.3} parent=0 // pred_region
    _
  $region5: #{bert_crf_forward.3} parent=0 // pred_fallthru
    _
  // Predicated region
  $region6: #{bert_crf_forward.3} parent=0 // pred_check
    _
  $region7: #{bert_crf_forward.3} parent=0 // pred_check_branch
    %14 = sbr.rel (0) target = $region9
  $region8: #{bert_crf_forward.3} parent=0 // pred_region
    _
  $region9: #{bert_crf_forward.3} parent=0 // pred_fallthru
    _
  // Predicated region
  $region10: #{bert_crf_forward.3} parent=0 // pred_check
    _
  $region11: #{bert_crf_forward.3} parent=0 // pred_check_branch
    %16 = sbr.rel (0) target = $region13
  $region12: #{bert_crf_forward.3} parent=0 // pred_region
    _
  $region13: #{bert_crf_forward.3} parent=0 // pred_fallthru
    _
  // Predicated region
  $region14: #{bert_crf_forward.3} parent=0 // pred_check
    _
  $region15: #{bert_crf_forward.3} parent=0 // pred_check_branch
    %18 = sbr.rel (0) target = $region17
  $region16: #{bert_crf_forward.3} parent=0 // pred_region
    _
  $region17: #{bert_crf_forward.3} parent=0 // pred_fallthru
    _
  // Predicated region
  $region18: #{bert_crf_forward.3} parent=0 // pred_check
    _
  $region19: #{bert_crf_forward.3} parent=0 // pred_check_branch
    %20 = sbr.rel (0) target = $region21
  $region20: #{bert_crf_forward.3} parent=0 // pred_region
    _
  $region21: #{bert_crf_forward.3} parent=0 // pred_fallthru
    _
  // Predicated region
  $region22: #{bert_crf_forward.3} parent=0 // pred_check
    _
  $region23: #{bert_crf_forward.3} parent=0 // pred_check_branch
    %22 = sbr.rel (0) target = $region25
  $region24: #{bert_crf_forward.3} parent=0 // pred_region
    _
  $region25: #{bert_crf_forward.3} parent=0 // pred_fallthru
    _
  %v23 = vld [vmem:[%s3] sm:$0x1]
  %v24 = vld [vmem:[%s4] sm:$0xff]
  %v25 = vld [vmem:[%s5] sm:$0x1]
  %v26 = vlaneseq
  %v27 = vand.u32 %v26, 127
  %v28 = vld [vmem:[%s0] sm:$0x1]
  %v29 = vld [vmem:[%s0 + $0x8] sm:$0x1]
  %v30 = vld [vmem:[%s1] sm:$0x3]
  %31 = vset.pattern.permute.xlu0 0
  %32 = vperm.xlu0 %31, %v30
  %v33 = vpop.permute.xlu0 %32
  %vm34 = vcmp.eq.s32.totalorder %v27, %v33
  %v35 = vsel %vm34, 1, 0
  %v36 = vcvt.s32.f32 %v35
  %v38 = vperm.slane %v23, 0
  %v42 = vrot.slane %v29, 7
  %vm43 = vcmask 1041409
  %v44 = vsel %vm43, %v42, %v28
  %v46 = vadd.f32 %v38, %v44
  %v47 = vmul.f32 %v46, %v36
  %vm48 = vcmask 58368
  %v49 = vsel %vm48, %v47, 0.0
  %50 = vadd.xlane.f32.xlu0 %v49
  %v51 = vpop.xlane.xlu0 %50
  %v52 = vld [vmem:[%s0 + $0x1] sm:$0x1]
  %v53 = vld [vmem:[%s0 + $0x9] sm:$0x1]
  %54 = vset.pattern.permute.xlu0 1
  %55 = vperm.xlu0 %54, %v30
  %v56 = vpop.permute.xlu0 %55
  %vm57 = vcmp.eq.s32.totalorder %v27, %v56
  %v58 = vsel %vm57, 1, 0
  %v59 = vcvt.s32.f32 %v58
  %v60 = vld [vmem:[%s2] sm:$0x3]
  %vm61 = vcmask 64512
  %v63 = vsel %vm61, %v36, 0
  %65 = vmatpush.msra.mxu0 0.0
  %66 = vmatpush.msra.mxu0 0.0
  %67 = vmatpush.msra.mxu0 0.0
  %68 = vmatpush.msra.mxu0 0.0
  %69 = vmatpush.msra.mxu0 0.0
  %70 = vmatpush.msra.mxu0 0.0
  %71 = vmatpush.msra.mxu0 0.0
  %72 = vmatpush.msra.mxu0 0.0
  %73 = vmatpush.msra.mxu0 0.0
  %74 = vmatpush.msra.mxu0 0.0
  %75 = vmatpush.msra.mxu0 0.0
  %76 = vmatpush.msra.mxu0 0.0
  %77 = vmatpush.msra.mxu0 0.0
  %78 = vmatpush.msra.mxu0 0.0
  %79 = vmatpush.msra.mxu0 0.0
  %80 = vmatpush.msra.mxu0 %v24
  %81 = vmatmul.f32.gmra.mxu0 %v63
  %v82 = vpop.f32.mrf.mxu0
  %v83 = vadd.f32 0.0, %v82
  %84 = vdwg.mxu0
  %v85 = vmul.f32 %v83, %v59
  %v86 = vsel %vm48, %v85, 0.0
  %87 = vadd.xlane.f32.xlu0 %v86
  %v88 = vpop.xlane.xlu0 %87
  %v90 = vrot.slane %v59, 1
  %v93 = vmul.f32 %v52, %v59
  %v94 = vmul.f32 %v53, %v90
  %v97 = vrot.slane %v94, 7
  %v98 = vsel %vm43, %v97, %v93
  %v100 = vsel %vm48, %v98, 0.0
  %101 = vadd.xlane.f32.xlu0 %v100
  %v102 = vpop.xlane.xlu0 %101
  %v103 = vadd.f32 %v88, %v102
  %v104 = vmul.f32 %v103, %v60
  %v105 = vadd.f32 %v51, %v104
  %v106 = vperm.slane %v46, 0
  %v107 = vlaneseq
  %v108 = vshrl.u32 %v107, 7
  %110 = vset.pattern.permute.xlu0 %v108
  %111 = vperm.xlu0 %110, %v106
  %v112 = vpop.permute.xlu0 %111
  %v113 = vperm.slane %v46, 1
  %v114 = vlaneseq
  %v115 = vshrl.u32 %v114, 7
  %117 = vset.pattern.permute.xlu0 %v115
  %118 = vperm.xlu0 %117, %v113
  %v119 = vpop.permute.xlu0 %118
  %v120 = vadd.f32 %v112, %v24
  %v121 = vadd.f32 %v119, %v24
  %v122 = vperm.slane %v52, 0
  %v123 = vperm.slane %v53, 0
  %v124 = vadd.f32 %v120, %v122
  %v125 = vadd.f32 %v121, %v123
  %v126 = vsel %vm61, %v124, -inf
  %v127 = vrot.slane %v126, 4
  %v128 = vmax.f32 %v126, %v127
  %v129 = vrot.slane %v128, 2
  %v130 = vmax.f32 %v128, %v129
  %v131 = vrot.slane %v130, 1
  %v132 = vmax.f32 %v130, %v131
  %v133 = vsel %vm61, %v125, -inf
  %v134 = vrot.slane %v133, 4
  %v135 = vmax.f32 %v133, %v134
  %v136 = vrot.slane %v135, 2
  %v137 = vmax.f32 %v135, %v136
  %v138 = vrot.slane %v137, 1
  %v139 = vmax.f32 %v137, %v138
  %v140 = vsub.f32 %v124, %v132
  %v141 = vsub.f32 %v125, %v139
  %v142 = vmul.f32 %v140, 1.442695
  %v143 = vpow.pop %v142
  %v144 = vmul.f32 %v141, 1.442695
  %v145 = vpow.pop %v144
  %v146 = vsel %vm61, %v143, 0.0
  %v147 = vrot.slane %v146, 4
  %v148 = vadd.f32 %v146, %v147
  %v149 = vrot.slane %v148, 2
  %v150 = vadd.f32 %v148, %v149
  %v151 = vrot.slane %v150, 1
  %v152 = vadd.f32 %v150, %v151
  %v153 = vsel %vm61, %v145, 0.0
  %v154 = vrot.slane %v153, 4
  %v155 = vadd.f32 %v153, %v154
  %v156 = vrot.slane %v155, 2
  %v157 = vadd.f32 %v155, %v156
  %v158 = vrot.slane %v157, 1
  %v159 = vadd.f32 %v157, %v158
  %v160 = vlog2.pop %v152
  %v161 = vmul.f32 %v160, 0.6931472
  %v162 = vlog2.pop %v159
  %v163 = vmul.f32 %v162, 0.6931472
  %v164 = vadd.f32 %v161, %v132
  %v165 = vadd.f32 %v163, %v139
  %vm166 = vcmp.gt.f32.partialorder %v60, 0.0
  %v167 = vsel %vm166, 1, 0
  %168 = vset.pattern.permute.xlu0 1
  %169 = vperm.xlu0 %168, %v167
  %v170 = vpop.permute.xlu0 %169
  %vm171 = vcmp.eq.s32.totalorder %v170, 1
  %v174 = vsel %vm43, %v165, %v164
  %v176 = vsel %vm171, %v174, %v46
  %v177 = vld [vmem:[%s0 + $0x2] sm:$0x1]
  %v178 = vld [vmem:[%s0 + $0xa] sm:$0x1]
  %179 = vset.pattern.permute.xlu0 2
  %180 = vperm.xlu0 %179, %v30
  %v181 = vpop.permute.xlu0 %180
  %vm182 = vcmp.eq.s32.totalorder %v27, %v181
  %v183 = vsel %vm182, 1, 0
  %v184 = vcvt.s32.f32 %v183
  %v185 = vsel %vm61, %v59, 0
  %187 = vmatpush.msra.mxu0 0.0
  %188 = vmatpush.msra.mxu0 0.0
  %189 = vmatpush.msra.mxu0 0.0
  %190 = vmatpush.msra.mxu0 0.0
  %191 = vmatpush.msra.mxu0 0.0
  %192 = vmatpush.msra.mxu0 0.0
  %193 = vmatpush.msra.mxu0 0.0
  %194 = vmatpush.msra.mxu0 0.0
  %195 = vmatpush.msra.mxu0 0.0
  %196 = vmatpush.msra.mxu0 0.0
  %197 = vmatpush.msra.mxu0 0.0
  %198 = vmatpush.msra.mxu0 0.0
  %199 = vmatpush.msra.mxu0 0.0
  %200 = vmatpush.msra.mxu0 0.0
  %201 = vmatpush.msra.mxu0 0.0
  %202 = vmatpush.msra.mxu0 %v24
  %203 = vmatmul.f32.gmra.mxu0 %v185
  %v204 = vpop.f32.mrf.mxu0
  %v205 = vadd.f32 0.0, %v204
  %206 = vdwg.mxu0
  %v207 = vmul.f32 %v205, %v184
  %v208 = vsel %vm48, %v207, 0.0
  %209 = vadd.xlane.f32.xlu0 %v208
  %v210 = vpop.xlane.xlu0 %209
  %v212 = vrot.slane %v184, 1
  %v215 = vmul.f32 %v177, %v184
  %v216 = vmul.f32 %v178, %v212
  %v219 = vrot.slane %v216, 7
  %v220 = vsel %vm43, %v219, %v215
  %v222 = vsel %vm48, %v220, 0.0
  %223 = vadd.xlane.f32.xlu0 %v222
  %v224 = vpop.xlane.xlu0 %223
  %v225 = vadd.f32 %v210, %v224
  %v226 = vmul.f32 %v225, %v60
  %228 = vrot.lane.b32.xlu0 %v226, 127
  %v229 = vpop.permute.xlu0 %228
  %v231 = vadd.f32 %v105, %v229
  %v232 = vperm.slane %v176, 0
  %v233 = vlaneseq
  %v234 = vshrl.u32 %v233, 7
  %236 = vset.pattern.permute.xlu0 %v234
  %237 = vperm.xlu0 %236, %v232
  %v238 = vpop.permute.xlu0 %237
  %v239 = vperm.slane %v176, 1
  %v240 = vlaneseq
  %v241 = vshrl.u32 %v240, 7
  %243 = vset.pattern.permute.xlu0 %v241
  %244 = vperm.xlu0 %243, %v239
  %v245 = vpop.permute.xlu0 %244
  %v246 = vadd.f32 %v238, %v24
  %v247 = vadd.f32 %v245, %v24
  %v248 = vperm.slane %v177, 0
  %v249 = vperm.slane %v178, 0
  %v250 = vadd.f32 %v246, %v248
  %v251 = vadd.f32 %v247, %v249
  %v252 = vsel %vm61, %v250, -inf
  %v253 = vrot.slane %v252, 4
  %v254 = vmax.f32 %v252, %v253
  %v255 = vrot.slane %v254, 2
  %v256 = vmax.f32 %v254, %v255
  %v257 = vrot.slane %v256, 1
  %v258 = vmax.f32 %v256, %v257
  %v259 = vsel %vm61, %v251, -inf
  %v260 = vrot.slane %v259, 4
  %v261 = vmax.f32 %v259, %v260
  %v262 = vrot.slane %v261, 2
  %v263 = vmax.f32 %v261, %v262
  %v264 = vrot.slane %v263, 1
  %v265 = vmax.f32 %v263, %v264
  %v266 = vsub.f32 %v250, %v258
  %v267 = vsub.f32 %v251, %v265
  %v268 = vmul.f32 %v266, 1.442695
  %v269 = vpow.pop %v268
  %v270 = vmul.f32 %v267, 1.442695
  %v271 = vpow.pop %v270
  %v272 = vsel %vm61, %v269, 0.0
  %v273 = vrot.slane %v272, 4
  %v274 = vadd.f32 %v272, %v273
  %v275 = vrot.slane %v274, 2
  %v276 = vadd.f32 %v274, %v275
  %v277 = vrot.slane %v276, 1
  %v278 = vadd.f32 %v276, %v277
  %v279 = vsel %vm61, %v271, 0.0
  %v280 = vrot.slane %v279, 4
  %v281 = vadd.f32 %v279, %v280
  %v282 = vrot.slane %v281, 2
  %v283 = vadd.f32 %v281, %v282
  %v284 = vrot.slane %v283, 1
  %v285 = vadd.f32 %v283, %v284
  %v286 = vlog2.pop %v278
  %v287 = vmul.f32 %v286, 0.6931472
  %v288 = vlog2.pop %v285
  %v289 = vmul.f32 %v288, 0.6931472
  %v290 = vadd.f32 %v287, %v258
  %v291 = vadd.f32 %v289, %v265
  %292 = vset.pattern.permute.xlu0 2
  %293 = vperm.xlu0 %292, %v167
  %v294 = vpop.permute.xlu0 %293
  %vm295 = vcmp.eq.s32.totalorder %v294, 1
  %v298 = vsel %vm43, %v291, %v290
  %v300 = vsel %vm295, %v298, %v176
  %v301 = vld [vmem:[%s0 + $0x3] sm:$0x1]
  %v302 = vld [vmem:[%s0 + $0xb] sm:$0x1]
  %303 = vset.pattern.permute.xlu0 3
  %304 = vperm.xlu0 %303, %v30
  %v305 = vpop.permute.xlu0 %304
  %vm306 = vcmp.eq.s32.totalorder %v27, %v305
  %v307 = vsel %vm306, 1, 0
  %v308 = vcvt.s32.f32 %v307
  %v309 = vsel %vm61, %v184, 0
  %311 = vmatpush.msra.mxu0 0.0
  %312 = vmatpush.msra.mxu0 0.0
  %313 = vmatpush.msra.mxu0 0.0
  %314 = vmatpush.msra.mxu0 0.0
  %315 = vmatpush.msra.mxu0 0.0
  %316 = vmatpush.msra.mxu0 0.0
  %317 = vmatpush.msra.mxu0 0.0
  %318 = vmatpush.msra.mxu0 0.0
  %319 = vmatpush.msra.mxu0 0.0
  %320 = vmatpush.msra.mxu0 0.0
  %321 = vmatpush.msra.mxu0 0.0
  %322 = vmatpush.msra.mxu0 0.0
  %323 = vmatpush.msra.mxu0 0.0
  %324 = vmatpush.msra.mxu0 0.0
  %325 = vmatpush.msra.mxu0 0.0
  %326 = vmatpush.msra.mxu0 %v24
  %327 = vmatmul.f32.gmra.mxu0 %v309
  %v328 = vpop.f32.mrf.mxu0
  %v329 = vadd.f32 0.0, %v328
  %330 = vdwg.mxu0
  %v331 = vmul.f32 %v329, %v308
  %v332 = vsel %vm48, %v331, 0.0
  %333 = vadd.xlane.f32.xlu0 %v332
  %v334 = vpop.xlane.xlu0 %333
  %v336 = vrot.slane %v308, 1
  %v339 = vmul.f32 %v301, %v308
  %v340 = vmul.f32 %v302, %v336
  %v343 = vrot.slane %v340, 7
  %v344 = vsel %vm43, %v343, %v339
  %v346 = vsel %vm48, %v344, 0.0
  %347 = vadd.xlane.f32.xlu0 %v346
  %v348 = vpop.xlane.xlu0 %347
  %v349 = vadd.f32 %v334, %v348
  %v350 = vmul.f32 %v349, %v60
  %352 = vrot.lane.b32.xlu0 %v350, 126
  %v353 = vpop.permute.xlu0 %352
  %v355 = vadd.f32 %v231, %v353
  %v356 = vperm.slane %v300, 0
  %v357 = vlaneseq
  %v358 = vshrl.u32 %v357, 7
  %360 = vset.pattern.permute.xlu0 %v358
  %361 = vperm.xlu0 %360, %v356
  %v362 = vpop.permute.xlu0 %361
  %v363 = vperm.slane %v300, 1
  %v364 = vlaneseq
  %v365 = vshrl.u32 %v364, 7
  %367 = vset.pattern.permute.xlu0 %v365
  %368 = vperm.xlu0 %367, %v363
  %v369 = vpop.permute.xlu0 %368
  %v370 = vadd.f32 %v362, %v24
  %v371 = vadd.f32 %v369, %v24
  %v372 = vperm.slane %v301, 0
  %v373 = vperm.slane %v302, 0
  %v374 = vadd.f32 %v370, %v372
  %v375 = vadd.f32 %v371, %v373
  %v376 = vsel %vm61, %v374, -inf
  %v377 = vrot.slane %v376, 4
  %v378 = vmax.f32 %v376, %v377
  %v379 = vrot.slane %v378, 2
  %v380 = vmax.f32 %v378, %v379
  %v381 = vrot.slane %v380, 1
  %v382 = vmax.f32 %v380, %v381
  %v383 = vsel %vm61, %v375, -inf
  %v384 = vrot.slane %v383, 4
  %v385 = vmax.f32 %v383, %v384
  %v386 = vrot.slane %v385, 2
  %v387 = vmax.f32 %v385, %v386
  %v388 = vrot.slane %v387, 1
  %v389 = vmax.f32 %v387, %v388
  %v390 = vsub.f32 %v374, %v382
  %v391 = vsub.f32 %v375, %v389
  %v392 = vmul.f32 %v390, 1.442695
  %v393 = vpow.pop %v392
  %v394 = vmul.f32 %v391, 1.442695
  %v395 = vpow.pop %v394
  %v396 = vsel %vm61, %v393, 0.0
  %v397 = vrot.slane %v396, 4
  %v398 = vadd.f32 %v396, %v397
  %v399 = vrot.slane %v398, 2
  %v400 = vadd.f32 %v398, %v399
  %v401 = vrot.slane %v400, 1
  %v402 = vadd.f32 %v400, %v401
  %v403 = vsel %vm61, %v395, 0.0
  %v404 = vrot.slane %v403, 4
  %v405 = vadd.f32 %v403, %v404
  %v406 = vrot.slane %v405, 2
  %v407 = vadd.f32 %v405, %v406
  %v408 = vrot.slane %v407, 1
  %v409 = vadd.f32 %v407, %v408
  %v410 = vlog2.pop %v402
  %v411 = vmul.f32 %v410, 0.6931472
  %v412 = vlog2.pop %v409
  %v413 = vmul.f32 %v412, 0.6931472
  %v414 = vadd.f32 %v411, %v382
  %v415 = vadd.f32 %v413, %v389
  %416 = vset.pattern.permute.xlu0 3
  %417 = vperm.xlu0 %416, %v167
  %v418 = vpop.permute.xlu0 %417
  %vm419 = vcmp.eq.s32.totalorder %v418, 1
  %v422 = vsel %vm43, %v415, %v414
  %v424 = vsel %vm419, %v422, %v300
  %v425 = vld [vmem:[%s0 + $0x4] sm:$0x1]
  %v426 = vld [vmem:[%s0 + $0xc] sm:$0x1]
  %427 = vset.pattern.permute.xlu0 4
  %428 = vperm.xlu0 %427, %v30
  %v429 = vpop.permute.xlu0 %428
  %vm430 = vcmp.eq.s32.totalorder %v27, %v429
  %v431 = vsel %vm430, 1, 0
  %v432 = vcvt.s32.f32 %v431
  %v433 = vsel %vm61, %v308, 0
  %435 = vmatpush.msra.mxu0 0.0
  %436 = vmatpush.msra.mxu0 0.0
  %437 = vmatpush.msra.mxu0 0.0
  %438 = vmatpush.msra.mxu0 0.0
  %439 = vmatpush.msra.mxu0 0.0
  %440 = vmatpush.msra.mxu0 0.0
  %441 = vmatpush.msra.mxu0 0.0
  %442 = vmatpush.msra.mxu0 0.0
  %443 = vmatpush.msra.mxu0 0.0
  %444 = vmatpush.msra.mxu0 0.0
  %445 = vmatpush.msra.mxu0 0.0
  %446 = vmatpush.msra.mxu0 0.0
  %447 = vmatpush.msra.mxu0 0.0
  %448 = vmatpush.msra.mxu0 0.0
  %449 = vmatpush.msra.mxu0 0.0
  %450 = vmatpush.msra.mxu0 %v24
  %451 = vmatmul.f32.gmra.mxu0 %v433
  %v452 = vpop.f32.mrf.mxu0
  %v453 = vadd.f32 0.0, %v452
  %454 = vdwg.mxu0
  %v455 = vmul.f32 %v453, %v432
  %v456 = vsel %vm48, %v455, 0.0
  %457 = vadd.xlane.f32.xlu0 %v456
  %v458 = vpop.xlane.xlu0 %457
  %v460 = vrot.slane %v432, 1
  %v463 = vmul.f32 %v425, %v432
  %v464 = vmul.f32 %v426, %v460
  %v467 = vrot.slane %v464, 7
  %v468 = vsel %vm43, %v467, %v463
  %v470 = vsel %vm48, %v468, 0.0
  %471 = vadd.xlane.f32.xlu0 %v470
  %v472 = vpop.xlane.xlu0 %471
  %v473 = vadd.f32 %v458, %v472
  %v474 = vmul.f32 %v473, %v60
  %476 = vrot.lane.b32.xlu0 %v474, 125
  %v477 = vpop.permute.xlu0 %476
  %v479 = vadd.f32 %v355, %v477
  %v480 = vperm.slane %v424, 0
  %v481 = vlaneseq
  %v482 = vshrl.u32 %v481, 7
  %484 = vset.pattern.permute.xlu0 %v482
  %485 = vperm.xlu0 %484, %v480
  %v486 = vpop.permute.xlu0 %485
  %v487 = vperm.slane %v424, 1
  %v488 = vlaneseq
  %v489 = vshrl.u32 %v488, 7
  %491 = vset.pattern.permute.xlu0 %v489
  %492 = vperm.xlu0 %491, %v487
  %v493 = vpop.permute.xlu0 %492
  %v494 = vadd.f32 %v486, %v24
  %v495 = vadd.f32 %v493, %v24
  %v496 = vperm.slane %v425, 0
  %v497 = vperm.slane %v426, 0
  %v498 = vadd.f32 %v494, %v496
  %v499 = vadd.f32 %v495, %v497
  %v500 = vsel %vm61, %v498, -inf
  %v501 = vrot.slane %v500, 4
  %v502 = vmax.f32 %v500, %v501
  %v503 = vrot.slane %v502, 2
  %v504 = vmax.f32 %v502, %v503
  %v505 = vrot.slane %v504, 1
  %v506 = vmax.f32 %v504, %v505
  %v507 = vsel %vm61, %v499, -inf
  %v508 = vrot.slane %v507, 4
  %v509 = vmax.f32 %v507, %v508
  %v510 = vrot.slane %v509, 2
  %v511 = vmax.f32 %v509, %v510
  %v512 = vrot.slane %v511, 1
  %v513 = vmax.f32 %v511, %v512
  %v514 = vsub.f32 %v498, %v506
  %v515 = vsub.f32 %v499, %v513
  %v516 = vmul.f32 %v514, 1.442695
  %v517 = vpow.pop %v516
  %v518 = vmul.f32 %v515, 1.442695
  %v519 = vpow.pop %v518
  %v520 = vsel %vm61, %v517, 0.0
  %v521 = vrot.slane %v520, 4
  %v522 = vadd.f32 %v520, %v521
  %v523 = vrot.slane %v522, 2
  %v524 = vadd.f32 %v522, %v523
  %v525 = vrot.slane %v524, 1
  %v526 = vadd.f32 %v524, %v525
  %v527 = vsel %vm61, %v519, 0.0
  %v528 = vrot.slane %v527, 4
  %v529 = vadd.f32 %v527, %v528
  %v530 = vrot.slane %v529, 2
  %v531 = vadd.f32 %v529, %v530
  %v532 = vrot.slane %v531, 1
  %v533 = vadd.f32 %v531, %v532
  %v534 = vlog2.pop %v526
  %v535 = vmul.f32 %v534, 0.6931472
  %v536 = vlog2.pop %v533
  %v537 = vmul.f32 %v536, 0.6931472
  %v538 = vadd.f32 %v535, %v506
  %v539 = vadd.f32 %v537, %v513
  %540 = vset.pattern.permute.xlu0 4
  %541 = vperm.xlu0 %540, %v167
  %v542 = vpop.permute.xlu0 %541
  %vm543 = vcmp.eq.s32.totalorder %v542, 1
  %v546 = vsel %vm43, %v539, %v538
  %v548 = vsel %vm543, %v546, %v424
  %v549 = vld [vmem:[%s0 + $0x5] sm:$0x1]
  %v550 = vld [vmem:[%s0 + $0xd] sm:$0x1]
  %551 = vset.pattern.permute.xlu0 5
  %552 = vperm.xlu0 %551, %v30
  %v553 = vpop.permute.xlu0 %552
  %vm554 = vcmp.eq.s32.totalorder %v27, %v553
  %v555 = vsel %vm554, 1, 0
  %v556 = vcvt.s32.f32 %v555
  %v557 = vsel %vm61, %v432, 0
  %559 = vmatpush.msra.mxu0 0.0
  %560 = vmatpush.msra.mxu0 0.0
  %561 = vmatpush.msra.mxu0 0.0
  %562 = vmatpush.msra.mxu0 0.0
  %563 = vmatpush.msra.mxu0 0.0
  %564 = vmatpush.msra.mxu0 0.0
  %565 = vmatpush.msra.mxu0 0.0
  %566 = vmatpush.msra.mxu0 0.0
  %567 = vmatpush.msra.mxu0 0.0
  %568 = vmatpush.msra.mxu0 0.0
  %569 = vmatpush.msra.mxu0 0.0
  %570 = vmatpush.msra.mxu0 0.0
  %571 = vmatpush.msra.mxu0 0.0
  %572 = vmatpush.msra.mxu0 0.0
  %573 = vmatpush.msra.mxu0 0.0
  %574 = vmatpush.msra.mxu0 %v24
  %575 = vmatmul.f32.gmra.mxu0 %v557
  %v576 = vpop.f32.mrf.mxu0
  %v577 = vadd.f32 0.0, %v576
  %578 = vdwg.mxu0
  %v579 = vmul.f32 %v577, %v556
  %v580 = vsel %vm48, %v579, 0.0
  %581 = vadd.xlane.f32.xlu0 %v580
  %v582 = vpop.xlane.xlu0 %581
  %v584 = vrot.slane %v556, 1
  %v587 = vmul.f32 %v549, %v556
  %v588 = vmul.f32 %v550, %v584
  %v591 = vrot.slane %v588, 7
  %v592 = vsel %vm43, %v591, %v587
  %v594 = vsel %vm48, %v592, 0.0
  %595 = vadd.xlane.f32.xlu0 %v594
  %v596 = vpop.xlane.xlu0 %595
  %v597 = vadd.f32 %v582, %v596
  %v598 = vmul.f32 %v597, %v60
  %600 = vrot.lane.b32.xlu0 %v598, 124
  %v601 = vpop.permute.xlu0 %600
  %v603 = vadd.f32 %v479, %v601
  %v604 = vperm.slane %v548, 0
  %v605 = vlaneseq
  %v606 = vshrl.u32 %v605, 7
  %608 = vset.pattern.permute.xlu0 %v606
  %609 = vperm.xlu0 %608, %v604
  %v610 = vpop.permute.xlu0 %609
  %v611 = vperm.slane %v548, 1
  %v612 = vlaneseq
  %v613 = vshrl.u32 %v612, 7
  %615 = vset.pattern.permute.xlu0 %v613
  %616 = vperm.xlu0 %615, %v611
  %v617 = vpop.permute.xlu0 %616
  %v618 = vadd.f32 %v610, %v24
  %v619 = vadd.f32 %v617, %v24
  %v620 = vperm.slane %v549, 0
  %v621 = vperm.slane %v550, 0
  %v622 = vadd.f32 %v618, %v620
  %v623 = vadd.f32 %v619, %v621
  %v624 = vsel %vm61, %v622, -inf
  %v625 = vrot.slane %v624, 4
  %v626 = vmax.f32 %v624, %v625
  %v627 = vrot.slane %v626, 2
  %v628 = vmax.f32 %v626, %v627
  %v629 = vrot.slane %v628, 1
  %v630 = vmax.f32 %v628, %v629
  %v631 = vsel %vm61, %v623, -inf
  %v632 = vrot.slane %v631, 4
  %v633 = vmax.f32 %v631, %v632
  %v634 = vrot.slane %v633, 2
  %v635 = vmax.f32 %v633, %v634
  %v636 = vrot.slane %v635, 1
  %v637 = vmax.f32 %v635, %v636
  %v638 = vsub.f32 %v622, %v630
  %v639 = vsub.f32 %v623, %v637
  %v640 = vmul.f32 %v638, 1.442695
  %v641 = vpow.pop %v640
  %v642 = vmul.f32 %v639, 1.442695
  %v643 = vpow.pop %v642
  %v644 = vsel %vm61, %v641, 0.0
  %v645 = vrot.slane %v644, 4
  %v646 = vadd.f32 %v644, %v645
  %v647 = vrot.slane %v646, 2
  %v648 = vadd.f32 %v646, %v647
  %v649 = vrot.slane %v648, 1
  %v650 = vadd.f32 %v648, %v649
  %v651 = vsel %vm61, %v643, 0.0
  %v652 = vrot.slane %v651, 4
  %v653 = vadd.f32 %v651, %v652
  %v654 = vrot.slane %v653, 2
  %v655 = vadd.f32 %v653, %v654
  %v656 = vrot.slane %v655, 1
  %v657 = vadd.f32 %v655, %v656
  %v658 = vlog2.pop %v650
  %v659 = vmul.f32 %v658, 0.6931472
  %v660 = vlog2.pop %v657
  %v661 = vmul.f32 %v660, 0.6931472
  %v662 = vadd.f32 %v659, %v630
  %v663 = vadd.f32 %v661, %v637
  %664 = vset.pattern.permute.xlu0 5
  %665 = vperm.xlu0 %664, %v167
  %v666 = vpop.permute.xlu0 %665
  %vm667 = vcmp.eq.s32.totalorder %v666, 1
  %v670 = vsel %vm43, %v663, %v662
  %v672 = vsel %vm667, %v670, %v548
  %v673 = vld [vmem:[%s0 + $0x6] sm:$0x1]
  %v674 = vld [vmem:[%s0 + $0xe] sm:$0x1]
  %675 = vset.pattern.permute.xlu0 6
  %676 = vperm.xlu0 %675, %v30
  %v677 = vpop.permute.xlu0 %676
  %vm678 = vcmp.eq.s32.totalorder %v27, %v677
  %v679 = vsel %vm678, 1, 0
  %v680 = vcvt.s32.f32 %v679
  %v681 = vsel %vm61, %v556, 0
  %683 = vmatpush.msra.mxu0 0.0
  %684 = vmatpush.msra.mxu0 0.0
  %685 = vmatpush.msra.mxu0 0.0
  %686 = vmatpush.msra.mxu0 0.0
  %687 = vmatpush.msra.mxu0 0.0
  %688 = vmatpush.msra.mxu0 0.0
  %689 = vmatpush.msra.mxu0 0.0
  %690 = vmatpush.msra.mxu0 0.0
  %691 = vmatpush.msra.mxu0 0.0
  %692 = vmatpush.msra.mxu0 0.0
  %693 = vmatpush.msra.mxu0 0.0
  %694 = vmatpush.msra.mxu0 0.0
  %695 = vmatpush.msra.mxu0 0.0
  %696 = vmatpush.msra.mxu0 0.0
  %697 = vmatpush.msra.mxu0 0.0
  %698 = vmatpush.msra.mxu0 %v24
  %699 = vmatmul.f32.gmra.mxu0 %v681
  %v700 = vpop.f32.mrf.mxu0
  %v701 = vadd.f32 0.0, %v700
  %702 = vdwg.mxu0
  %v703 = vmul.f32 %v701, %v680
  %v704 = vsel %vm48, %v703, 0.0
  %705 = vadd.xlane.f32.xlu0 %v704
  %v706 = vpop.xlane.xlu0 %705
  %v708 = vrot.slane %v680, 1
  %v711 = vmul.f32 %v673, %v680
  %v712 = vmul.f32 %v674, %v708
  %v715 = vrot.slane %v712, 7
  %v716 = vsel %vm43, %v715, %v711
  %v718 = vsel %vm48, %v716, 0.0
  %719 = vadd.xlane.f32.xlu0 %v718
  %v720 = vpop.xlane.xlu0 %719
  %v721 = vadd.f32 %v706, %v720
  %v722 = vmul.f32 %v721, %v60
  %724 = vrot.lane.b32.xlu0 %v722, 123
  %v725 = vpop.permute.xlu0 %724
  %v727 = vadd.f32 %v603, %v725
  %v728 = vperm.slane %v672, 0
  %v729 = vlaneseq
  %v730 = vshrl.u32 %v729, 7
  %732 = vset.pattern.permute.xlu0 %v730
  %733 = vperm.xlu0 %732, %v728
  %v734 = vpop.permute.xlu0 %733
  %v735 = vperm.slane %v672, 1
  %v736 = vlaneseq
  %v737 = vshrl.u32 %v736, 7
  %739 = vset.pattern.permute.xlu0 %v737
  %740 = vperm.xlu0 %739, %v735
  %v741 = vpop.permute.xlu0 %740
  %v742 = vadd.f32 %v734, %v24
  %v743 = vadd.f32 %v741, %v24
  %v744 = vperm.slane %v673, 0
  %v745 = vperm.slane %v674, 0
  %v746 = vadd.f32 %v742, %v744
  %v747 = vadd.f32 %v743, %v745
  %v748 = vsel %vm61, %v746, -inf
  %v749 = vrot.slane %v748, 4
  %v750 = vmax.f32 %v748, %v749
  %v751 = vrot.slane %v750, 2
  %v752 = vmax.f32 %v750, %v751
  %v753 = vrot.slane %v752, 1
  %v754 = vmax.f32 %v752, %v753
  %v755 = vsel %vm61, %v747, -inf
  %v756 = vrot.slane %v755, 4
  %v757 = vmax.f32 %v755, %v756
  %v758 = vrot.slane %v757, 2
  %v759 = vmax.f32 %v757, %v758
  %v760 = vrot.slane %v759, 1
  %v761 = vmax.f32 %v759, %v760
  %v762 = vsub.f32 %v746, %v754
  %v763 = vsub.f32 %v747, %v761
  %v764 = vmul.f32 %v762, 1.442695
  %v765 = vpow.pop %v764
  %v766 = vmul.f32 %v763, 1.442695
  %v767 = vpow.pop %v766
  %v768 = vsel %vm61, %v765, 0.0
  %v769 = vrot.slane %v768, 4
  %v770 = vadd.f32 %v768, %v769
  %v771 = vrot.slane %v770, 2
  %v772 = vadd.f32 %v770, %v771
  %v773 = vrot.slane %v772, 1
  %v774 = vadd.f32 %v772, %v773
  %v775 = vsel %vm61, %v767, 0.0
  %v776 = vrot.slane %v775, 4
  %v777 = vadd.f32 %v775, %v776
  %v778 = vrot.slane %v777, 2
  %v779 = vadd.f32 %v777, %v778
  %v780 = vrot.slane %v779, 1
  %v781 = vadd.f32 %v779, %v780
  %v782 = vlog2.pop %v774
  %v783 = vmul.f32 %v782, 0.6931472
  %v784 = vlog2.pop %v781
  %v785 = vmul.f32 %v784, 0.6931472
  %v786 = vadd.f32 %v783, %v754
  %v787 = vadd.f32 %v785, %v761
  %788 = vset.pattern.permute.xlu0 6
  %789 = vperm.xlu0 %788, %v167
  %v790 = vpop.permute.xlu0 %789
  %vm791 = vcmp.eq.s32.totalorder %v790, 1
  %v794 = vsel %vm43, %v787, %v786
  %v796 = vsel %vm791, %v794, %v672
  %v797 = vld [vmem:[%s0 + $0x7] sm:$0x1]
  %v798 = vld [vmem:[%s0 + $0xf] sm:$0x1]
  %799 = vset.pattern.permute.xlu0 7
  %800 = vperm.xlu0 %799, %v30
  %v801 = vpop.permute.xlu0 %800
  %vm802 = vcmp.eq.s32.totalorder %v27, %v801
  %v803 = vsel %vm802, 1, 0
  %v804 = vcvt.s32.f32 %v803
  %v805 = vsel %vm61, %v680, 0
  %807 = vmatpush.msra.mxu0 0.0
  %808 = vmatpush.msra.mxu0 0.0
  %809 = vmatpush.msra.mxu0 0.0
  %810 = vmatpush.msra.mxu0 0.0
  %811 = vmatpush.msra.mxu0 0.0
  %812 = vmatpush.msra.mxu0 0.0
  %813 = vmatpush.msra.mxu0 0.0
  %814 = vmatpush.msra.mxu0 0.0
  %815 = vmatpush.msra.mxu0 0.0
  %816 = vmatpush.msra.mxu0 0.0
  %817 = vmatpush.msra.mxu0 0.0
  %818 = vmatpush.msra.mxu0 0.0
  %819 = vmatpush.msra.mxu0 0.0
  %820 = vmatpush.msra.mxu0 0.0
  %821 = vmatpush.msra.mxu0 0.0
  %822 = vmatpush.msra.mxu0 %v24
  %823 = vmatmul.f32.gmra.mxu0 %v805
  %v824 = vpop.f32.mrf.mxu0
  %v825 = vadd.f32 0.0, %v824
  %826 = vdwg.mxu0
  %v827 = vmul.f32 %v825, %v804
  %v828 = vsel %vm48, %v827, 0.0
  %829 = vadd.xlane.f32.xlu0 %v828
  %v830 = vpop.xlane.xlu0 %829
  %v832 = vrot.slane %v804, 1
  %v835 = vmul.f32 %v797, %v804
  %v836 = vmul.f32 %v798, %v832
  %v839 = vrot.slane %v836, 7
  %v840 = vsel %vm43, %v839, %v835
  %v842 = vsel %vm48, %v840, 0.0
  %843 = vadd.xlane.f32.xlu0 %v842
  %v844 = vpop.xlane.xlu0 %843
  %v845 = vadd.f32 %v830, %v844
  %v846 = vmul.f32 %v845, %v60
  %848 = vrot.lane.b32.xlu0 %v846, 122
  %v849 = vpop.permute.xlu0 %848
  %v851 = vadd.f32 %v727, %v849
  %v852 = vperm.slane %v796, 0
  %v853 = vlaneseq
  %v854 = vshrl.u32 %v853, 7
  %856 = vset.pattern.permute.xlu0 %v854
  %857 = vperm.xlu0 %856, %v852
  %v858 = vpop.permute.xlu0 %857
  %v859 = vperm.slane %v796, 1
  %v860 = vlaneseq
  %v861 = vshrl.u32 %v860, 7
  %863 = vset.pattern.permute.xlu0 %v861
  %864 = vperm.xlu0 %863, %v859
  %v865 = vpop.permute.xlu0 %864
  %v866 = vadd.f32 %v858, %v24
  %v867 = vadd.f32 %v865, %v24
  %v868 = vperm.slane %v797, 0
  %v869 = vperm.slane %v798, 0
  %v870 = vadd.f32 %v866, %v868
  %v871 = vadd.f32 %v867, %v869
  %v872 = vsel %vm61, %v870, -inf
  %v873 = vrot.slane %v872, 4
  %v874 = vmax.f32 %v872, %v873
  %v875 = vrot.slane %v874, 2
  %v876 = vmax.f32 %v874, %v875
  %v877 = vrot.slane %v876, 1
  %v878 = vmax.f32 %v876, %v877
  %v879 = vsel %vm61, %v871, -inf
  %v880 = vrot.slane %v879, 4
  %v881 = vmax.f32 %v879, %v880
  %v882 = vrot.slane %v881, 2
  %v883 = vmax.f32 %v881, %v882
  %v884 = vrot.slane %v883, 1
  %v885 = vmax.f32 %v883, %v884
  %v886 = vsub.f32 %v870, %v878
  %v887 = vsub.f32 %v871, %v885
  %v888 = vmul.f32 %v886, 1.442695
  %v889 = vpow.pop %v888
  %v890 = vmul.f32 %v887, 1.442695
  %v891 = vpow.pop %v890
  %v892 = vsel %vm61, %v889, 0.0
  %v893 = vrot.slane %v892, 4
  %v894 = vadd.f32 %v892, %v893
  %v895 = vrot.slane %v894, 2
  %v896 = vadd.f32 %v894, %v895
  %v897 = vrot.slane %v896, 1
  %v898 = vadd.f32 %v896, %v897
  %v899 = vsel %vm61, %v891, 0.0
  %v900 = vrot.slane %v899, 4
  %v901 = vadd.f32 %v899, %v900
  %v902 = vrot.slane %v901, 2
  %v903 = vadd.f32 %v901, %v902
  %v904 = vrot.slane %v903, 1
  %v905 = vadd.f32 %v903, %v904
  %v906 = vlog2.pop %v898
  %v907 = vmul.f32 %v906, 0.6931472
  %v908 = vlog2.pop %v905
  %v909 = vmul.f32 %v908, 0.6931472
  %v910 = vadd.f32 %v907, %v878
  %v911 = vadd.f32 %v909, %v885
  %912 = vset.pattern.permute.xlu0 7
  %913 = vperm.xlu0 %912, %v167
  %v914 = vpop.permute.xlu0 %913
  %vm915 = vcmp.eq.s32.totalorder %v914, 1
  %v918 = vsel %vm43, %v911, %v910
  %v920 = vsel %vm915, %v918, %v796
  %v921 = vsel %vm48, %v60, 0.0
  %922 = vadd.xlane.f32.xlu0 %v921
  %v923 = vpop.xlane.xlu0 %922
  %v924 = vsub.f32 %v923, 1.0
  %v925 = vcvt.f32.s32.to.zero.pseudo %v924
  %vm926 = vcmp.eq.s32.totalorder %v27, %v925
  %v927 = vsel %vm926, 1, 0
  %v928 = vmul.u32 %v30, %v927
  %v929 = vsel %vm48, %v928, 0
  %v930 = vand.u32 %v929, 65535
  %v931 = vshrl.u32 %v929, 16
  %v932 = vcvt.s32.f32 %v930
  %v933 = vcvt.s32.f32 %v931
  %934 = vadd.xlane.f32.xlu0 %v932
  %v935 = vpop.xlane.xlu0 %934
  %936 = vadd.xlane.f32.xlu0 %v933
  %v937 = vpop.xlane.xlu0 %936
  %v938 = vcvt.f32.s32 %v935
  %v939 = vcvt.f32.s32 %v937
  %v940 = vshll.u32 %v939, 16
  %v941 = vadd.s32 %v940, %v938
  %vm942 = vcmp.eq.s32.totalorder %v27, %v941
  %v943 = vsel %vm942, 1, 0
  %v944 = vcvt.s32.f32 %v943
  %v946 = vperm.slane %v25, 0
  %v948 = vmul.f32 %v946, %v944
  %v949 = vsel %vm48, %v948, 0.0
  %950 = vadd.xlane.f32.xlu0 %v949
  %v951 = vpop.xlane.xlu0 %950
  %v952 = vadd.f32 %v851, %v951
  %v953 = vadd.f32 %v920, %v946
  %v954 = vsel %vm48, %v953, -inf
  %955 = vmax.xlane.f32.xlu0 %v954
  %v956 = vpop.xlane.xlu0 %955
  %v957 = vsub.f32 %v953, %v956
  %v958 = vmul.f32 %v957, 1.442695
  %v959 = vpow.pop %v958
  %v960 = vsel %vm48, %v959, 0.0
  %961 = vadd.xlane.f32.xlu0 %v960
  %v962 = vpop.xlane.xlu0 %961
  %v963 = vlog2.pop %v962
  %v964 = vmul.f32 %v963, 0.6931472
  %v965 = vadd.f32 %v964, %v956
  %v966 = vsub.f32 %v952, %v965
  %968 = vrot.lane.b32.xlu0 %v966, 127
  %v969 = vpop.permute.xlu0 %968
  %vm971 = vcmask 1024
  %972 = vst.msk [vmem:[%s6] sm:$0x3] %vm971, %v969
  // Predicated region
  $region26: #{bert_crf_forward.3} parent=0 // pred_check
    _
  $region27: #{bert_crf_forward.3} parent=0 // pred_check_branch
    %974 = sbr.rel (0) target = $region29
  $region28: #{bert_crf_forward.3} parent=0 // pred_region
    _
  $region29: #{bert_crf_forward.3} parent=0 // pred_fallthru
    _
  // Predicated region
  $region30: #{bert_crf_forward.3} parent=0 // pred_check
    _
  $region31: #{bert_crf_forward.3} parent=0 // pred_check_branch
    %976 = sbr.rel (0) target = $region33
  $region32: #{bert_crf_forward.3} parent=0 // pred_region
    _
  $region33: #{bert_crf_forward.3} parent=0 // pred_fallthru
    _

// kernel: bert_crf_forward.2
$region0: #{bert_crf_forward.2}
  #allocation0 [shape = 'u32[]', space=smem, size = 0x4, offset = 0x4, fixed_abs, tag = 'smem constant byte address 0x4 - core index']
  #allocation1 [shape = 'u32[72,128]{1,0:T(1,128)}', space=vmem, size = 0x9000, scoped, tag = 'internal scratch']
  %s0 = inlined_call_operand.vmem [shape: f32[2,8,32], index: 0, kind: input, shape index: {}]
  %s1 = inlined_call_operand.vmem [shape: f32[2,1,8], index: 1, kind: input, shape index: {}]
  %s2 = inlined_call_operand.vmem [shape: f32[1,32], index: 2, kind: input, shape index: {}]
  %s3 = inlined_call_operand.vmem [shape: f32[1,32], index: 3, kind: input, shape index: {}]
  %s4 = inlined_call_operand.vmem [shape: bf16[2,32,96], index: 4, kind: input, shape index: {}]
  %s5 = inlined_call_operand.vmem [shape: f32[2,1,96], index: 5, kind: input, shape index: {}]
  %s6 = inlined_call_operand.vmem [shape: bf16[2,32,32], index: 6, kind: input, shape index: {}]
  %s7 = inlined_call_operand.vmem [shape: f32[2,1,32], index: 7, kind: input, shape index: {}]
  %s8 = inlined_call_operand.vmem [shape: f32[2,1,32], index: 8, kind: input, shape index: {}]
  %s9 = inlined_call_operand.vmem [shape: f32[2,1,32], index: 9, kind: input, shape index: {}]
  %s10 = inlined_call_operand.vmem [shape: bf16[2,32,64], index: 10, kind: input, shape index: {}]
  %s11 = inlined_call_operand.vmem [shape: f32[2,1,64], index: 11, kind: input, shape index: {}]
  %s12 = inlined_call_operand.vmem [shape: bf16[2,64,32], index: 12, kind: input, shape index: {}]
  %s13 = inlined_call_operand.vmem [shape: f32[2,1,32], index: 13, kind: input, shape index: {}]
  %s14 = inlined_call_operand.vmem [shape: f32[2,1,32], index: 14, kind: input, shape index: {}]
  %s15 = inlined_call_operand.vmem [shape: f32[2,1,32], index: 15, kind: input, shape index: {}]
  %s16 = inlined_call_operand.vmem [shape: bf16[32,8], index: 16, kind: input, shape index: {}]
  %s17 = inlined_call_operand.vmem [shape: f32[1,8], index: 17, kind: input, shape index: {}]
  %s18 = inlined_call_operand.vmem [shape: f32[2,8,8], index: 18, kind: output, shape index: {}]
  %s19 = sld [smem:[#allocation0]]
  $region105: #{bert_crf_forward.2} parent=0
    _
  %s21 = ssub.s32 1, %s19
  %s22 = scalar_select 0, %s21, %s19
  loop: start=0, step=1, limit=4
  $region2: #{bert_crf_forward.2} parent=0 // loop_pre_header
    _
  $region3: #{bert_crf_forward.2} parent=0 // loop_header
    %s24 = sphi 0, %s28
    %p25 = scmp.ge.s32.totalorder %s24, 4
    %s34 = sphi 0, %s36
    %s37 = sphi 0, %s34
    %s38 = sphi 0, %s37
    %s54 = sphi 0, %s38
    %s60 = sphi 0, %s62
    %s63 = sphi 0, %s60
    %s64 = sphi 0, %s63
    %s80 = sphi 0, %s64
    %s84 = sphi 0, %s84
    %s86 = sphi 0, %s84
    %s87 = sphi 0, %s86
    %s101 = sphi 0, %s87
    %s105 = sphi 0, %s105
    %s107 = sphi 0, %s105
    %s108 = sphi 0, %s107
    %s122 = sphi 0, %s108
    %s126 = sphi 0, %s126
    %s128 = sphi 0, %s126
    %s129 = sphi 0, %s128
    %s143 = sphi 0, %s129
    %s147 = sphi 0, %s147
    %s149 = sphi 0, %s147
    %s150 = sphi 0, %s149
    %s164 = sphi 0, %s150
    %s168 = sphi 0, %s168
    %s170 = sphi 0, %s168
    %s171 = sphi 0, %s170
    %s185 = sphi 0, %s171
    %s189 = sphi 0, %s189
    %s191 = sphi 0, %s189
    %s192 = sphi 0, %s191
    %s206 = sphi 0, %s192
    %s210 = sphi 0, %s210
    %s212 = sphi 0, %s210
    %s213 = sphi 0, %s212
    %s227 = sphi 0, %s213
    %s231 = sphi 0, %s231
    %s233 = sphi 0, %s231
    %s234 = sphi 0, %s233
    %s248 = sphi 0, %s234
    %s252 = sphi 0, %s252
    %s254 = sphi 0, %s252
    %s255 = sphi 0, %s254
    %s269 = sphi 0, %s255
    %s273 = sphi 0, %s273
    %s275 = sphi 0, %s273
    %s276 = sphi 0, %s275
    %s290 = sphi 0, %s276
    %s294 = sphi 0, %s294
    %s296 = sphi 0, %s294
    %s297 = sphi 0, %s296
    %s311 = sphi 0, %s297
    %s315 = sphi 0, %s315
    %s317 = sphi 0, %s315
    %s318 = sphi 0, %s317
    %s332 = sphi 0, %s318
    %s336 = sphi 0, %s336
    %s338 = sphi 0, %s336
    %s339 = sphi 0, %s338
    %s353 = sphi 0, %s339
    %s357 = sphi 0, %s357
    %s359 = sphi 0, %s357
    %s360 = sphi 0, %s359
    %s374 = sphi 0, %s360
    %s378 = sphi 0, %s378
    %s380 = sphi 0, %s378
    %s381 = sphi 0, %s380
    %s395 = sphi 0, %s381
    %s399 = sphi 0, %s399
    %s401 = sphi 0, %s399
    %s402 = sphi 0, %s401
    %s416 = sphi 0, %s402
    %s422 = sphi 0, %s424
    %s425 = sphi 0, %s422
    %s426 = sphi 0, %s425
    %s442 = sphi 0, %s426
  $region4: #{bert_crf_forward.2} parent=0 // loop_header_branch
    %27 = sbr.rel (%p25) target = $region8
  $region5: #{bert_crf_forward.2} parent=0 // loop_body
    %s29 = ssub.s32 %s24, 1
    %s30 = ssub.s32 %s24, 2
    %s31 = sadd.s32 %s24, 1
    %s32 = ssub.s32 %s24, %s31
    %p33 = scmp.eq.s32.totalorder %s32, 0
    %s35 = sadd.s32 %s34, 1
    %s36 = scalar_select %p33, %s34, %s35
    %p39 = pneg %p33
    %p40 = scmp.eq.s32.totalorder %s24, 1
    %p41 = por %p39, %p40
    %p42 = scmp.ne.s32.totalorder %s34, %s37
    %p43 = scmp.eq.s32.totalorder %s24, 0
    %p44 = por %p42, %p43
    %p45 = scmp.ne.s32.totalorder %s34, %s37
    %p46 = scmp.eq.s32.totalorder %s29, 1
    %p47 = por %p45, %p46
    %p48 = scmp.ne.s32.totalorder %s37, %s38
    %p49 = scmp.eq.s32.totalorder %s29, 0
    %p50 = por %p48, %p49
    %p51 = scmp.ne.s32.totalorder %s37, %s38
    %p52 = scmp.eq.s32.totalorder %s30, 1
    %p53 = por %p51, %p52
    %p55 = scmp.ne.s32.totalorder %s38, %s54
    %p56 = scmp.eq.s32.totalorder %s30, 0
    %p57 = por %p55, %p56
    %s58 = ssub.s32 %s24, %s31
    %p59 = scmp.eq.s32.totalorder %s58, 0
    %s61 = sadd.s32 %s60, 1
    %s62 = scalar_select %p59, %s60, %s61
    %p65 = pneg %p59
    %p66 = scmp.eq.s32.totalorder %s24, 1
    %p67 = por %p65, %p66
    %p68 = scmp.ne.s32.totalorder %s60, %s63
    %p69 = scmp.eq.s32.totalorder %s24, 0
    %p70 = por %p68, %p69
    %p71 = scmp.ne.s32.totalorder %s60, %s63
    %p72 = scmp.eq.s32.totalorder %s29, 1
    %p73 = por %p71, %p72
    %p74 = scmp.ne.s32.totalorder %s63, %s64
    %p75 = scmp.eq.s32.totalorder %s29, 0
    %p76 = por %p74, %p75
    %p77 = scmp.ne.s32.totalorder %s63, %s64
    %p78 = scmp.eq.s32.totalorder %s30, 1
    %p79 = por %p77, %p78
    %p81 = scmp.ne.s32.totalorder %s64, %s80
    %p82 = scmp.eq.s32.totalorder %s30, 0
    %p83 = por %p81, %p82
    %s85 = sadd.s32 %s84, 1
    %p88 = scmp.eq.s32.totalorder %s24, 1
    %p89 = scmp.ne.s32.totalorder %s84, %s86
    %p90 = scmp.eq.s32.totalorder %s24, 0
    %p91 = por %p89, %p90
    %p92 = scmp.ne.s32.totalorder %s84, %s86
    %p93 = scmp.eq.s32.totalorder %s29, 1
    %p94 = por %p92, %p93
    %p95 = scmp.ne.s32.totalorder %s86, %s87
    %p96 = scmp.eq.s32.totalorder %s29, 0
    %p97 = por %p95, %p96
    %p98 = scmp.ne.s32.totalorder %s86, %s87
    %p99 = scmp.eq.s32.totalorder %s30, 1
    %p100 = por %p98, %p99
    %p102 = scmp.ne.s32.totalorder %s87, %s101
    %p103 = scmp.eq.s32.totalorder %s30, 0
    %p104 = por %p102, %p103
    %s106 = sadd.s32 %s105, 1
    %p109 = scmp.eq.s32.totalorder %s24, 1
    %p110 = scmp.ne.s32.totalorder %s105, %s107
    %p111 = scmp.eq.s32.totalorder %s24, 0
    %p112 = por %p110, %p111
    %p113 = scmp.ne.s32.totalorder %s105, %s107
    %p114 = scmp.eq.s32.totalorder %s29, 1
    %p115 = por %p113, %p114
    %p116 = scmp.ne.s32.totalorder %s107, %s108
    %p117 = scmp.eq.s32.totalorder %s29, 0
    %p118 = por %p116, %p117
    %p119 = scmp.ne.s32.totalorder %s107, %s108
    %p120 = scmp.eq.s32.totalorder %s30, 1
    %p121 = por %p119, %p120
    %p123 = scmp.ne.s32.totalorder %s108, %s122
    %p124 = scmp.eq.s32.totalorder %s30, 0
    %p125 = por %p123, %p124
    %s127 = sadd.s32 %s126, 1
    %p130 = scmp.eq.s32.totalorder %s24, 1
    %p131 = scmp.ne.s32.totalorder %s126, %s128
    %p132 = scmp.eq.s32.totalorder %s24, 0
    %p133 = por %p131, %p132
    %p134 = scmp.ne.s32.totalorder %s126, %s128
    %p135 = scmp.eq.s32.totalorder %s29, 1
    %p136 = por %p134, %p135
    %p137 = scmp.ne.s32.totalorder %s128, %s129
    %p138 = scmp.eq.s32.totalorder %s29, 0
    %p139 = por %p137, %p138
    %p140 = scmp.ne.s32.totalorder %s128, %s129
    %p141 = scmp.eq.s32.totalorder %s30, 1
    %p142 = por %p140, %p141
    %p144 = scmp.ne.s32.totalorder %s129, %s143
    %p145 = scmp.eq.s32.totalorder %s30, 0
    %p146 = por %p144, %p145
    %s148 = sadd.s32 %s147, 1
    %p151 = scmp.eq.s32.totalorder %s24, 1
    %p152 = scmp.ne.s32.totalorder %s147, %s149
    %p153 = scmp.eq.s32.totalorder %s24, 0
    %p154 = por %p152, %p153
    %p155 = scmp.ne.s32.totalorder %s147, %s149
    %p156 = scmp.eq.s32.totalorder %s29, 1
    %p157 = por %p155, %p156
    %p158 = scmp.ne.s32.totalorder %s149, %s150
    %p159 = scmp.eq.s32.totalorder %s29, 0
    %p160 = por %p158, %p159
    %p161 = scmp.ne.s32.totalorder %s149, %s150
    %p162 = scmp.eq.s32.totalorder %s30, 1
    %p163 = por %p161, %p162
    %p165 = scmp.ne.s32.totalorder %s150, %s164
    %p166 = scmp.eq.s32.totalorder %s30, 0
    %p167 = por %p165, %p166
    %s169 = sadd.s32 %s168, 1
    %p172 = scmp.eq.s32.totalorder %s24, 1
    %p173 = scmp.ne.s32.totalorder %s168, %s170
    %p174 = scmp.eq.s32.totalorder %s24, 0
    %p175 = por %p173, %p174
    %p176 = scmp.ne.s32.totalorder %s168, %s170
    %p177 = scmp.eq.s32.totalorder %s29, 1
    %p178 = por %p176, %p177
    %p179 = scmp.ne.s32.totalorder %s170, %s171
    %p180 = scmp.eq.s32.totalorder %s29, 0
    %p181 = por %p179, %p180
    %p182 = scmp.ne.s32.totalorder %s170, %s171
    %p183 = scmp.eq.s32.totalorder %s30, 1
    %p184 = por %p182, %p183
    %p186 = scmp.ne.s32.totalorder %s171, %s185
    %p187 = scmp.eq.s32.totalorder %s30, 0
    %p188 = por %p186, %p187
    %s190 = sadd.s32 %s189, 1
    %p193 = scmp.eq.s32.totalorder %s24, 1
    %p194 = scmp.ne.s32.totalorder %s189, %s191
    %p195 = scmp.eq.s32.totalorder %s24, 0
    %p196 = por %p194, %p195
    %p197 = scmp.ne.s32.totalorder %s189, %s191
    %p198 = scmp.eq.s32.totalorder %s29, 1
    %p199 = por %p197, %p198
    %p200 = scmp.ne.s32.totalorder %s191, %s192
    %p201 = scmp.eq.s32.totalorder %s29, 0
    %p202 = por %p200, %p201
    %p203 = scmp.ne.s32.totalorder %s191, %s192
    %p204 = scmp.eq.s32.totalorder %s30, 1
    %p205 = por %p203, %p204
    %p207 = scmp.ne.s32.totalorder %s192, %s206
    %p208 = scmp.eq.s32.totalorder %s30, 0
    %p209 = por %p207, %p208
    %s211 = sadd.s32 %s210, 1
    %p214 = scmp.eq.s32.totalorder %s24, 1
    %p215 = scmp.ne.s32.totalorder %s210, %s212
    %p216 = scmp.eq.s32.totalorder %s24, 0
    %p217 = por %p215, %p216
    %p218 = scmp.ne.s32.totalorder %s210, %s212
    %p219 = scmp.eq.s32.totalorder %s29, 1
    %p220 = por %p218, %p219
    %p221 = scmp.ne.s32.totalorder %s212, %s213
    %p222 = scmp.eq.s32.totalorder %s29, 0
    %p223 = por %p221, %p222
    %p224 = scmp.ne.s32.totalorder %s212, %s213
    %p225 = scmp.eq.s32.totalorder %s30, 1
    %p226 = por %p224, %p225
    %p228 = scmp.ne.s32.totalorder %s213, %s227
    %p229 = scmp.eq.s32.totalorder %s30, 0
    %p230 = por %p228, %p229
    %s232 = sadd.s32 %s231, 1
    %p235 = scmp.eq.s32.totalorder %s24, 1
    %p236 = scmp.ne.s32.totalorder %s231, %s233
    %p237 = scmp.eq.s32.totalorder %s24, 0
    %p238 = por %p236, %p237
    %p239 = scmp.ne.s32.totalorder %s231, %s233
    %p240 = scmp.eq.s32.totalorder %s29, 1
    %p241 = por %p239, %p240
    %p242 = scmp.ne.s32.totalorder %s233, %s234
    %p243 = scmp.eq.s32.totalorder %s29, 0
    %p244 = por %p242, %p243
    %p245 = scmp.ne.s32.totalorder %s233, %s234
    %p246 = scmp.eq.s32.totalorder %s30, 1
    %p247 = por %p245, %p246
    %p249 = scmp.ne.s32.totalorder %s234, %s248
    %p250 = scmp.eq.s32.totalorder %s30, 0
    %p251 = por %p249, %p250
    %s253 = sadd.s32 %s252, 1
    %p256 = scmp.eq.s32.totalorder %s24, 1
    %p257 = scmp.ne.s32.totalorder %s252, %s254
    %p258 = scmp.eq.s32.totalorder %s24, 0
    %p259 = por %p257, %p258
    %p260 = scmp.ne.s32.totalorder %s252, %s254
    %p261 = scmp.eq.s32.totalorder %s29, 1
    %p262 = por %p260, %p261
    %p263 = scmp.ne.s32.totalorder %s254, %s255
    %p264 = scmp.eq.s32.totalorder %s29, 0
    %p265 = por %p263, %p264
    %p266 = scmp.ne.s32.totalorder %s254, %s255
    %p267 = scmp.eq.s32.totalorder %s30, 1
    %p268 = por %p266, %p267
    %p270 = scmp.ne.s32.totalorder %s255, %s269
    %p271 = scmp.eq.s32.totalorder %s30, 0
    %p272 = por %p270, %p271
    %s274 = sadd.s32 %s273, 1
    %p277 = scmp.eq.s32.totalorder %s24, 1
    %p278 = scmp.ne.s32.totalorder %s273, %s275
    %p279 = scmp.eq.s32.totalorder %s24, 0
    %p280 = por %p278, %p279
    %p281 = scmp.ne.s32.totalorder %s273, %s275
    %p282 = scmp.eq.s32.totalorder %s29, 1
    %p283 = por %p281, %p282
    %p284 = scmp.ne.s32.totalorder %s275, %s276
    %p285 = scmp.eq.s32.totalorder %s29, 0
    %p286 = por %p284, %p285
    %p287 = scmp.ne.s32.totalorder %s275, %s276
    %p288 = scmp.eq.s32.totalorder %s30, 1
    %p289 = por %p287, %p288
    %p291 = scmp.ne.s32.totalorder %s276, %s290
    %p292 = scmp.eq.s32.totalorder %s30, 0
    %p293 = por %p291, %p292
    %s295 = sadd.s32 %s294, 1
    %p298 = scmp.eq.s32.totalorder %s24, 1
    %p299 = scmp.ne.s32.totalorder %s294, %s296
    %p300 = scmp.eq.s32.totalorder %s24, 0
    %p301 = por %p299, %p300
    %p302 = scmp.ne.s32.totalorder %s294, %s296
    %p303 = scmp.eq.s32.totalorder %s29, 1
    %p304 = por %p302, %p303
    %p305 = scmp.ne.s32.totalorder %s296, %s297
    %p306 = scmp.eq.s32.totalorder %s29, 0
    %p307 = por %p305, %p306
    %p308 = scmp.ne.s32.totalorder %s296, %s297
    %p309 = scmp.eq.s32.totalorder %s30, 1
    %p310 = por %p308, %p309
    %p312 = scmp.ne.s32.totalorder %s297, %s311
    %p313 = scmp.eq.s32.totalorder %s30, 0
    %p314 = por %p312, %p313
    %s316 = sadd.s32 %s315, 1
    %p319 = scmp.eq.s32.totalorder %s24, 1
    %p320 = scmp.ne.s32.totalorder %s315, %s317
    %p321 = scmp.eq.s32.totalorder %s24, 0
    %p322 = por %p320, %p321
    %p323 = scmp.ne.s32.totalorder %s315, %s317
    %p324 = scmp.eq.s32.totalorder %s29, 1
    %p325 = por %p323, %p324
    %p326 = scmp.ne.s32.totalorder %s317, %s318
    %p327 = scmp.eq.s32.totalorder %s29, 0
    %p328 = por %p326, %p327
    %p329 = scmp.ne.s32.totalorder %s317, %s318
    %p330 = scmp.eq.s32.totalorder %s30, 1
    %p331 = por %p329, %p330
    %p333 = scmp.ne.s32.totalorder %s318, %s332
    %p334 = scmp.eq.s32.totalorder %s30, 0
    %p335 = por %p333, %p334
    %s337 = sadd.s32 %s336, 1
    %p340 = scmp.eq.s32.totalorder %s24, 1
    %p341 = scmp.ne.s32.totalorder %s336, %s338
    %p342 = scmp.eq.s32.totalorder %s24, 0
    %p343 = por %p341, %p342
    %p344 = scmp.ne.s32.totalorder %s336, %s338
    %p345 = scmp.eq.s32.totalorder %s29, 1
    %p346 = por %p344, %p345
    %p347 = scmp.ne.s32.totalorder %s338, %s339
    %p348 = scmp.eq.s32.totalorder %s29, 0
    %p349 = por %p347, %p348
    %p350 = scmp.ne.s32.totalorder %s338, %s339
    %p351 = scmp.eq.s32.totalorder %s30, 1
    %p352 = por %p350, %p351
    %p354 = scmp.ne.s32.totalorder %s339, %s353
    %p355 = scmp.eq.s32.totalorder %s30, 0
    %p356 = por %p354, %p355
    %s358 = sadd.s32 %s357, 1
    %p361 = scmp.eq.s32.totalorder %s24, 1
    %p362 = scmp.ne.s32.totalorder %s357, %s359
    %p363 = scmp.eq.s32.totalorder %s24, 0
    %p364 = por %p362, %p363
    %p365 = scmp.ne.s32.totalorder %s357, %s359
    %p366 = scmp.eq.s32.totalorder %s29, 1
    %p367 = por %p365, %p366
    %p368 = scmp.ne.s32.totalorder %s359, %s360
    %p369 = scmp.eq.s32.totalorder %s29, 0
    %p370 = por %p368, %p369
    %p371 = scmp.ne.s32.totalorder %s359, %s360
    %p372 = scmp.eq.s32.totalorder %s30, 1
    %p373 = por %p371, %p372
    %p375 = scmp.ne.s32.totalorder %s360, %s374
    %p376 = scmp.eq.s32.totalorder %s30, 0
    %p377 = por %p375, %p376
    %s379 = sadd.s32 %s378, 1
    %p382 = scmp.eq.s32.totalorder %s24, 1
    %p383 = scmp.ne.s32.totalorder %s378, %s380
    %p384 = scmp.eq.s32.totalorder %s24, 0
    %p385 = por %p383, %p384
    %p386 = scmp.ne.s32.totalorder %s378, %s380
    %p387 = scmp.eq.s32.totalorder %s29, 1
    %p388 = por %p386, %p387
    %p389 = scmp.ne.s32.totalorder %s380, %s381
    %p390 = scmp.eq.s32.totalorder %s29, 0
    %p391 = por %p389, %p390
    %p392 = scmp.ne.s32.totalorder %s380, %s381
    %p393 = scmp.eq.s32.totalorder %s30, 1
    %p394 = por %p392, %p393
    %p396 = scmp.ne.s32.totalorder %s381, %s395
    %p397 = scmp.eq.s32.totalorder %s30, 0
    %p398 = por %p396, %p397
    %s400 = sadd.s32 %s399, 1
    %p403 = scmp.eq.s32.totalorder %s24, 1
    %p404 = scmp.ne.s32.totalorder %s399, %s401
    %p405 = scmp.eq.s32.totalorder %s24, 0
    %p406 = por %p404, %p405
    %p407 = scmp.ne.s32.totalorder %s399, %s401
    %p408 = scmp.eq.s32.totalorder %s29, 1
    %p409 = por %p407, %p408
    %p410 = scmp.ne.s32.totalorder %s401, %s402
    %p411 = scmp.eq.s32.totalorder %s29, 0
    %p412 = por %p410, %p411
    %p413 = scmp.ne.s32.totalorder %s401, %s402
    %p414 = scmp.eq.s32.totalorder %s30, 1
    %p415 = por %p413, %p414
    %p417 = scmp.ne.s32.totalorder %s402, %s416
    %p418 = scmp.eq.s32.totalorder %s30, 0
    %p419 = por %p417, %p418
    %s420 = ssub.s32 %s24, %s31
    %p421 = scmp.eq.s32.totalorder %s420, 0
    %s423 = sadd.s32 %s422, 1
    %s424 = scalar_select %p421, %s422, %s423
    %p427 = pneg %p421
    %p428 = scmp.eq.s32.totalorder %s24, 1
    %p429 = por %p427, %p428
    %p430 = scmp.ne.s32.totalorder %s422, %s425
    %p431 = scmp.eq.s32.totalorder %s24, 0
    %p432 = por %p430, %p431
    %p433 = scmp.ne.s32.totalorder %s422, %s425
    %p434 = scmp.eq.s32.totalorder %s29, 1
    %p435 = por %p433, %p434
    %p436 = scmp.ne.s32.totalorder %s425, %s426
    %p437 = scmp.eq.s32.totalorder %s29, 0
    %p438 = por %p436, %p437
    %p439 = scmp.ne.s32.totalorder %s425, %s426
    %p440 = scmp.eq.s32.totalorder %s30, 1
    %p441 = por %p439, %p440
    %p443 = scmp.ne.s32.totalorder %s426, %s442
    %p444 = scmp.eq.s32.totalorder %s30, 0
    %p445 = por %p443, %p444
    %p446 = scmp.le.s32.totalorder 1, %s24
    %p447 = scmp.lt.s32.totalorder %s24, 3
    %p448 = pnand %p446, %p447
    %p449 = pneg %p448
    // Predicated region
    $region9: #{bert_crf_forward.2} parent=5 // pred_check
      _
    $region10: #{bert_crf_forward.2} parent=5 // pred_check_branch
      %451 = sbr.rel (%p448) target = $region12
    $region11: #{bert_crf_forward.2} parent=5 // pred_region
      %s452 = ssub.s32 %s24, 1
      // Predicated region
      $region13: #{bert_crf_forward.2} parent=11 // pred_check
        %p453 = pneg %p97
      $region14: #{bert_crf_forward.2} parent=11 // pred_check_branch
        %455 = sbr.rel (%p453) target = $region16
      $region15: #{bert_crf_forward.2} parent=11 // pred_region
        _
      $region16: #{bert_crf_forward.2} parent=11 // pred_fallthru
        _
      // Predicated region
      $region17: #{bert_crf_forward.2} parent=11 // pred_check
        %p456 = pneg %p118
      $region18: #{bert_crf_forward.2} parent=11 // pred_check_branch
        %458 = sbr.rel (%p456) target = $region20
      $region19: #{bert_crf_forward.2} parent=11 // pred_region
        _
      $region20: #{bert_crf_forward.2} parent=11 // pred_fallthru
        _
      // Predicated region
      $region21: #{bert_crf_forward.2} parent=11 // pred_check
        %p459 = pneg %p139
      $region22: #{bert_crf_forward.2} parent=11 // pred_check_branch
        %461 = sbr.rel (%p459) target = $region24
      $region23: #{bert_crf_forward.2} parent=11 // pred_region
        _
      $region24: #{bert_crf_forward.2} parent=11 // pred_fallthru
        _
      // Predicated region
      $region25: #{bert_crf_forward.2} parent=11 // pred_check
        %p462 = pneg %p160
      $region26: #{bert_crf_forward.2} parent=11 // pred_check_branch
        %464 = sbr.rel (%p462) target = $region28
      $region27: #{bert_crf_forward.2} parent=11 // pred_region
        _
      $region28: #{bert_crf_forward.2} parent=11 // pred_fallthru
        _
      // Predicated region
      $region29: #{bert_crf_forward.2} parent=11 // pred_check
        %p465 = pneg %p181
      $region30: #{bert_crf_forward.2} parent=11 // pred_check_branch
        %467 = sbr.rel (%p465) target = $region32
      $region31: #{bert_crf_forward.2} parent=11 // pred_region
        _
      $region32: #{bert_crf_forward.2} parent=11 // pred_fallthru
        _
      // Predicated region
      $region33: #{bert_crf_forward.2} parent=11 // pred_check
        %p468 = pneg %p202
      $region34: #{bert_crf_forward.2} parent=11 // pred_check_branch
        %470 = sbr.rel (%p468) target = $region36
      $region35: #{bert_crf_forward.2} parent=11 // pred_region
        _
      $region36: #{bert_crf_forward.2} parent=11 // pred_fallthru
        _
      // Predicated region
      $region37: #{bert_crf_forward.2} parent=11 // pred_check
        %p471 = pneg %p223
      $region38: #{bert_crf_forward.2} parent=11 // pred_check_branch
        %473 = sbr.rel (%p471) target = $region40
      $region39: #{bert_crf_forward.2} parent=11 // pred_region
        _
      $region40: #{bert_crf_forward.2} parent=11 // pred_fallthru
        _
      // Predicated region
      $region41: #{bert_crf_forward.2} parent=11 // pred_check
        %p474 = pneg %p244
      $region42: #{bert_crf_forward.2} parent=11 // pred_check_branch
        %476 = sbr.rel (%p474) target = $region44
      $region43: #{bert_crf_forward.2} parent=11 // pred_region
        _
      $region44: #{bert_crf_forward.2} parent=11 // pred_fallthru
        _
      // Predicated region
      $region45: #{bert_crf_forward.2} parent=11 // pred_check
        %p477 = pneg %p265
      $region46: #{bert_crf_forward.2} parent=11 // pred_check_branch
        %479 = sbr.rel (%p477) target = $region48
      $region47: #{bert_crf_forward.2} parent=11 // pred_region
        _
      $region48: #{bert_crf_forward.2} parent=11 // pred_fallthru
        _
      // Predicated region
      $region49: #{bert_crf_forward.2} parent=11 // pred_check
        %p480 = pneg %p286
      $region50: #{bert_crf_forward.2} parent=11 // pred_check_branch
        %482 = sbr.rel (%p480) target = $region52
      $region51: #{bert_crf_forward.2} parent=11 // pred_region
        _
      $region52: #{bert_crf_forward.2} parent=11 // pred_fallthru
        _
      // Predicated region
      $region53: #{bert_crf_forward.2} parent=11 // pred_check
        %p483 = pneg %p307
      $region54: #{bert_crf_forward.2} parent=11 // pred_check_branch
        %485 = sbr.rel (%p483) target = $region56
      $region55: #{bert_crf_forward.2} parent=11 // pred_region
        _
      $region56: #{bert_crf_forward.2} parent=11 // pred_fallthru
        _
      // Predicated region
      $region57: #{bert_crf_forward.2} parent=11 // pred_check
        %p486 = pneg %p328
      $region58: #{bert_crf_forward.2} parent=11 // pred_check_branch
        %488 = sbr.rel (%p486) target = $region60
      $region59: #{bert_crf_forward.2} parent=11 // pred_region
        _
      $region60: #{bert_crf_forward.2} parent=11 // pred_fallthru
        _
      // Predicated region
      $region61: #{bert_crf_forward.2} parent=11 // pred_check
        %p489 = pneg %p349
      $region62: #{bert_crf_forward.2} parent=11 // pred_check_branch
        %491 = sbr.rel (%p489) target = $region64
      $region63: #{bert_crf_forward.2} parent=11 // pred_region
        _
      $region64: #{bert_crf_forward.2} parent=11 // pred_fallthru
        _
      // Predicated region
      $region65: #{bert_crf_forward.2} parent=11 // pred_check
        %p492 = pneg %p370
      $region66: #{bert_crf_forward.2} parent=11 // pred_check_branch
        %494 = sbr.rel (%p492) target = $region68
      $region67: #{bert_crf_forward.2} parent=11 // pred_region
        _
      $region68: #{bert_crf_forward.2} parent=11 // pred_fallthru
        _
      // Predicated region
      $region69: #{bert_crf_forward.2} parent=11 // pred_check
        %p495 = pneg %p391
      $region70: #{bert_crf_forward.2} parent=11 // pred_check_branch
        %497 = sbr.rel (%p495) target = $region72
      $region71: #{bert_crf_forward.2} parent=11 // pred_region
        _
      $region72: #{bert_crf_forward.2} parent=11 // pred_fallthru
        _
      // Predicated region
      $region73: #{bert_crf_forward.2} parent=11 // pred_check
        %p498 = pneg %p412
      $region74: #{bert_crf_forward.2} parent=11 // pred_check_branch
        %500 = sbr.rel (%p498) target = $region76
      $region75: #{bert_crf_forward.2} parent=11 // pred_region
        _
      $region76: #{bert_crf_forward.2} parent=11 // pred_fallthru
        _
    $region12: #{bert_crf_forward.2} parent=5 // pred_fallthru
      _
    %p501 = scmp.lt.s32.totalorder %s24, 2
    // Predicated region
    $region77: #{bert_crf_forward.2} parent=5 // pred_check
      %p502 = pneg %p501
    $region78: #{bert_crf_forward.2} parent=5 // pred_check_branch
      %504 = sbr.rel (%p502) target = $region80
    $region79: #{bert_crf_forward.2} parent=5 // pred_region
      // Predicated region
      $region81: #{bert_crf_forward.2} parent=79 // pred_check
        %p505 = pneg %p44
      $region82: #{bert_crf_forward.2} parent=79 // pred_check_branch
        %507 = sbr.rel (%p505) target = $region84
      $region83: #{bert_crf_forward.2} parent=79 // pred_region
        %p508 = scmp.lt.s32.totalorder %s24, 1
        %s509 = scalar_select %p508, %s24, 1
        %s510 = smul.addr %s509, 8
        %s511 = scalar_lea.vmem %s0, %s510
      $region84: #{bert_crf_forward.2} parent=79 // pred_fallthru
        _
      // Predicated region
      $region85: #{bert_crf_forward.2} parent=79 // pred_check
        %p512 = pneg %p70
      $region86: #{bert_crf_forward.2} parent=79 // pred_check_branch
        %514 = sbr.rel (%p512) target = $region88
      $region87: #{bert_crf_forward.2} parent=79 // pred_region
        %p515 = scmp.lt.s32.totalorder %s24, 1
        %s516 = scalar_select %p515, %s24, 1
        %s517 = scalar_lea.vmem %s1, %s516
      $region88: #{bert_crf_forward.2} parent=79 // pred_fallthru
        _
    $region80: #{bert_crf_forward.2} parent=5 // pred_fallthru
      _
    %p518 = scmp.le.s32.totalorder 1, %s24
    %p519 = scmp.lt.s32.totalorder %s24, 3
    %p520 = pnand %p518, %p519
    %p521 = pneg %p520
    // Predicated region
    $region89: #{bert_crf_forward.2} parent=5 // pred_check
      _
    $region90: #{bert_crf_forward.2} parent=5 // pred_check_branch
      %523 = sbr.rel (%p520) target = $region92
    $region91: #{bert_crf_forward.2} parent=5 // pred_region
      %s524 = ssub.s32 %s24, 1
      %p525 = scmp.lt.s32.totalorder %s29, 1
      %s526 = scalar_select %p525, %s29, 1
      %s527 = smul.addr %s526, 8
      %s528 = scalar_lea.vmem %s0, %s527
      %p529 = pneg %p50
      %p530 = pneg %p47
      %p531 = scmp.lt.s32.totalorder %s29, 1
      %s532 = scalar_select %p531, %s29, 1
      %s533 = scalar_lea.vmem %s1, %s532
      %p534 = pneg %p76
      %p535 = pneg %p73
      %p536 = pneg %p97
      %p537 = pneg %p94
      %p538 = pneg %p118
      %p539 = pneg %p115
      %p540 = pneg %p139
      %p541 = pneg %p136
      %p542 = pneg %p160
      %p543 = pneg %p157
      %p544 = pneg %p181
      %p545 = pneg %p178
      %p546 = pneg %p202
      %p547 = pneg %p199
      %p548 = pneg %p223
      %p549 = pneg %p220
      %p550 = pneg %p244
      %p551 = pneg %p241
      %p552 = pneg %p265
      %p553 = pneg %p262
      %p554 = pneg %p286
      %p555 = pneg %p283
      %p556 = pneg %p307
      %p557 = pneg %p304
      %p558 = pneg %p328
      %p559 = pneg %p325
      %p560 = pneg %p349
      %p561 = pneg %p346
      %p562 = pneg %p370
      %p563 = pneg %p367
      %p564 = pneg %p391
      %p565 = pneg %p388
      %p566 = pneg %p412
      %p567 = pneg %p409
      %p568 = pneg %p438
      %p569 = pneg %p435
      %p570 = scmp.lt.s32.totalorder %s29, 1
      %s571 = scalar_select %p570, %s29, 1
      %s572 = smul.addr %s571, 8
      %s573 = scalar_lea.vmem %s18, %s572
      %p574 = scmp.lt.s32.totalorder %s29, 1
      %s575 = scalar_select %p574, %s29, 1
      %s576 = smul.addr %s575, 8
      %s577 = scalar_lea.vmem %s0, %s576
      %p578 = scmp.lt.s32.totalorder %s29, 1
      %s579 = scalar_select %p578, %s29, 1
      %s580 = scalar_lea.vmem %s1, %s579
      %p581 = scmp.lt.s32.totalorder %s29, 1
      %s582 = scalar_select %p581, %s29, 1
      %s583 = smul.addr %s582, 8
      %s584 = scalar_lea.vmem %s18, %s583
      %v586 = vld [vmem:[%s580] sm:$0x1]
      %v587 = vld [vmem:[%s577] sm:$0xff]
      %v588 = vld [vmem:[%s2] sm:$0x1]
      %v589 = vld [vmem:[%s3] sm:$0x1]
      %vm590 = vcmask 261120
      %v591 = vsel %vm590, %v587, 0.0
      %592 = vadd.xlane.f32.xlu0 %v591
      %v593 = vpop.xlane.xlu0 %592
      %v594 = vrcp.pop 32.0
      %v595 = vmul.f32 32.0, %v594
      %v596 = vsub.f32 1.0, %v595
      %v597 = vmul.f32 %v594, %v596
      %v598 = vadd.f32 %v594, %v597
      %vm599 = vweird.f32 %v594
      %v600 = vsel %vm599, %v594, %v598
      %v601 = vmul.f32 %v593, %v600
      %v602 = vsub.f32 %v587, %v601
      %v603 = vmul.f32 %v602, %v602
      %v604 = vsel %vm590, %v603, 0.0
      %605 = vadd.xlane.f32.xlu0 %v604
      %v606 = vpop.xlane.xlu0 %605
      %v607 = vmul.f32 %v606, %v600
      %v608 = vadd.f32 %v607, 1e-12
      %v609 = vrsqrt.pop %v608
      %v610 = vmul.f32 %v609, %v608
      %v611 = vmul.f32 %v610, %v609
      %v612 = vmul.f32 0.5, %v611
      %v613 = vsub.f32 1.5, %v612
      %v614 = vmul.f32 %v609, %v613
      %vm615 = vweird.f32 %v608
      %vm616 = vweird.f32 %v609
      %vm617 = vmor %vm615, %vm616
      %v618 = vsel %vm617, %v609, %v614
      %v619 = vmul.f32 %v602, %v618
      %v621 = vperm.slane %v588, 0
      %v623 = vmul.f32 %v619, %v621
      %v625 = vperm.slane %v589, 0
      %v627 = vadd.f32 %v623, %v625
      %v628 = vld [vmem:[%s4] sm:$0xf]
      %v629 = vld [vmem:[%s4 + $0x4] sm:$0xf]
      %v630 = vld [vmem:[%s4 + $0x8] sm:$0xf]
      %v631 = vld [vmem:[%s4 + $0xc] sm:$0xf]
      %v632 = vld [vmem:[%s5] sm:$0x1]
      %v633 = vpack.c.bf16 %v627, %v627
      %v635 = vperm.slane %v632, 0
      %v641 = vunpack.c.l.b16 %v628
      %v642 = vunpack.c.l.b16 %v629
      %v643 = vunpack.c.l.b16 %v630
      %v644 = vunpack.c.l.b16 %v631
      %v645 = vpack.c.b16 %v642, %v641
      %v646 = vpack.c.b16 %v644, %v643
      %v650 = vsel %vm590, %v633, 0
      %652 = vmatpush.bf16.msra.mxu0 0
      %653 = vmatpush.bf16.msra.mxu0 0
      %654 = vmatpush.bf16.msra.mxu0 0
      %655 = vmatpush.bf16.msra.mxu0 0
      %656 = vmatpush.bf16.msra.mxu0 0
      %657 = vmatpush.bf16.msra.mxu0 0
      %658 = vmatpush.bf16.msra.mxu0 %v646
      %659 = vmatpush.bf16.msra.mxu0 %v645
      %660 = vmatmul.bf16.gmra.mxu0 %v650
      %v661 = vpop.f32.mrf.mxu0
      %v662 = vadd.f32 %v635, %v661
      %v663 = vpop.f32.mrf.mxu0
      %664 = vdwg.mxu0
      %v665 = vpack.c.bf16 %v662, %v662
      %667 = vrot.lane.b32.xlu0 %v665, 96
      %v668 = vpop.permute.xlu0 %667
      %vm669 = vcmask 130048
      %v671 = vsel %vm669, %v665, 0
      %v674 = vsel %vm669, %v668, 0
      %676 = vmatpush.bf16.xpose.msra.mxu0 0
      %677 = vmatpush.bf16.xpose.msra.mxu0 0
      %678 = vmatpush.bf16.xpose.msra.mxu0 0
      %679 = vmatpush.bf16.xpose.msra.mxu0 0
      %680 = vmatpush.bf16.xpose.msra.mxu0 0
      %681 = vmatpush.bf16.xpose.msra.mxu0 0
      %682 = vmatpush.bf16.xpose.msra.mxu0 0
      %683 = vmatpush.bf16.xpose.msra.mxu0 %v674
      %684 = vmatmul.bf16.gmra.mxu0 %v671
      %v685 = vpop.f32.mrf.mxu0
      %v686 = vadd.f32 0.0, %v685
      %v687 = vpop.f32.mrf.mxu0
      %688 = vdwg.mxu0
      %v689 = vmul.f32 %v686, 0.25
      %v691 = vperm.slane %v586, 0
      %v693 = vadd.f32 %v689, %v691
      %vm694 = vcmask 64512
      %v695 = vsel %vm694, %v693, -inf
      %696 = vmax.xlane.f32.xlu0 %v695
      %v697 = vpop.xlane.xlu0 %696
      %v698 = vsub.f32 %v693, %v697
      %v699 = vmul.f32 %v698, 1.442695
      %v700 = vpow.pop %v699
      %v701 = vsel %vm694, %v700, 0.0
      %702 = vadd.xlane.f32.xlu0 %v701
      %v703 = vpop.xlane.xlu0 %702
      %v704 = vrcp.pop %v703
      %v705 = vmul.f32 %v700, %v704
      %v706 = vpack.c.bf16 %v705, %v705
      %707 = vrot.lane.b32.xlu0 %v665, 64
      %v708 = vpop.permute.xlu0 %707
      %v710 = vsel %vm694, %v706, 0
      %vm712 = vcmask 1043456
      %v714 = vsel %vm712, %v708, 0
      %716 = vmatpush.bf16.msra.mxu0 0
      %717 = vmatpush.bf16.msra.mxu0 0
      %718 = vmatpush.bf16.msra.mxu0 0
      %719 = vmatpush.bf16.msra.mxu0 0
      %720 = vmatpush.bf16.msra.mxu0 0
      %721 = vmatpush.bf16.msra.mxu0 0
      %722 = vmatpush.bf16.msra.mxu0 0
      %723 = vmatpush.bf16.msra.mxu0 %v714
      %724 = vmatmul.bf16.gmra.mxu0 %v710
      %v725 = vpop.f32.mrf.mxu0
      %v726 = vadd.f32 0.0, %v725
      %v727 = vpop.f32.mrf.mxu0
      %728 = vdwg.mxu0
      %729 = vrot.lane.b32.xlu0 %v665, 112
      %v730 = vpop.permute.xlu0 %729
      %731 = vrot.lane.b32.xlu0 %v665, 80
      %v732 = vpop.permute.xlu0 %731
      %v734 = vsel %vm669, %v730, 0
      %v737 = vsel %vm669, %v732, 0
      %739 = vmatpush.bf16.xpose.msra.mxu0 0
      %740 = vmatpush.bf16.xpose.msra.mxu0 0
      %741 = vmatpush.bf16.xpose.msra.mxu0 0
      %742 = vmatpush.bf16.xpose.msra.mxu0 0
      %743 = vmatpush.bf16.xpose.msra.mxu0 0
      %744 = vmatpush.bf16.xpose.msra.mxu0 0
      %745 = vmatpush.bf16.xpose.msra.mxu0 0
      %746 = vmatpush.bf16.xpose.msra.mxu0 %v737
      %747 = vmatmul.bf16.gmra.mxu0 %v734
      %v748 = vpop.f32.mrf.mxu0
      %v749 = vadd.f32 0.0, %v748
      %v750 = vpop.f32.mrf.mxu0
      %751 = vdwg.mxu0
      %v752 = vmul.f32 %v749, 0.25
      %v753 = vadd.f32 %v752, %v691
      %v754 = vsel %vm694, %v753, -inf
      %755 = vmax.xlane.f32.xlu0 %v754
      %v756 = vpop.xlane.xlu0 %755
      %v757 = vsub.f32 %v753, %v756
      %v758 = vmul.f32 %v757, 1.442695
      %v759 = vpow.pop %v758
      %v760 = vsel %vm694, %v759, 0.0
      %761 = vadd.xlane.f32.xlu0 %v760
      %v762 = vpop.xlane.xlu0 %761
      %v763 = vrcp.pop %v762
      %v764 = vmul.f32 %v759, %v763
      %v765 = vpack.c.bf16 %v764, %v764
      %766 = vrot.lane.b32.xlu0 %v665, 48
      %v767 = vpop.permute.xlu0 %766
      %v769 = vsel %vm694, %v765, 0
      %v772 = vsel %vm712, %v767, 0
      %774 = vmatpush.bf16.msra.mxu0 0
      %775 = vmatpush.bf16.msra.mxu0 0
      %776 = vmatpush.bf16.msra.mxu0 0
      %777 = vmatpush.bf16.msra.mxu0 0
      %778 = vmatpush.bf16.msra.mxu0 0
      %779 = vmatpush.bf16.msra.mxu0 0
      %780 = vmatpush.bf16.msra.mxu0 0
      %781 = vmatpush.bf16.msra.mxu0 %v772
      %782 = vmatmul.bf16.gmra.mxu0 %v769
      %v783 = vpop.f32.mrf.mxu0
      %v784 = vadd.f32 0.0, %v783
      %v785 = vpop.f32.mrf.mxu0
      %786 = vdwg.mxu0
      %788 = vrot.lane.b32.xlu0 %v784, 16
      %v789 = vpop.permute.xlu0 %788
      %v791 = vsel %vm669, %v726, %v789
      %v792 = vld [vmem:[%s6] sm:$0xf]
      %v793 = vld [vmem:[%s6 + $0x4] sm:$0xf]
      %v794 = vld [vmem:[%s6 + $0x8] sm:$0xf]
      %v795 = vld [vmem:[%s6 + $0xc] sm:$0xf]
      %v796 = vld [vmem:[%s7] sm:$0x1]
      %v797 = vpack.c.bf16 %v791, %v791
      %v799 = vperm.slane %v796, 0
      %v805 = vunpack.c.l.b16 %v792
      %v806 = vunpack.c.l.b16 %v793
      %v807 = vunpack.c.l.b16 %v794
      %v808 = vunpack.c.l.b16 %v795
      %v809 = vpack.c.b16 %v806, %v805
      %v810 = vpack.c.b16 %v808, %v807
      %v814 = vsel %vm590, %v797, 0
      %816 = vmatpush.bf16.msra.mxu0 0
      %817 = vmatpush.bf16.msra.mxu0 0
      %818 = vmatpush.bf16.msra.mxu0 0
      %819 = vmatpush.bf16.msra.mxu0 0
      %820 = vmatpush.bf16.msra.mxu0 0
      %821 = vmatpush.bf16.msra.mxu0 0
      %822 = vmatpush.bf16.msra.mxu0 %v810
      %823 = vmatpush.bf16.msra.mxu0 %v809
      %824 = vmatmul.bf16.gmra.mxu0 %v814
      %v825 = vpop.f32.mrf.mxu0
      %v826 = vadd.f32 %v799, %v825
      %v827 = vpop.f32.mrf.mxu0
      %828 = vdwg.mxu0
      %v829 = vadd.f32 %v826, %v627
      %v830 = vld [vmem:[%s8] sm:$0x1]
      %v831 = vld [vmem:[%s9] sm:$0x1]
      %v832 = vsel %vm590, %v829, 0.0
      %833 = vadd.xlane.f32.xlu0 %v832
      %v834 = vpop.xlane.xlu0 %833
      %v835 = vmul.f32 %v834, %v600
      %v836 = vsub.f32 %v829, %v835
      %v837 = vmul.f32 %v836, %v836
      %v838 = vsel %vm590, %v837, 0.0
      %839 = vadd.xlane.f32.xlu0 %v838
      %v840 = vpop.xlane.xlu0 %839
      %v841 = vmul.f32 %v840, %v600
      %v842 = vadd.f32 %v841, 1e-12
      %v843 = vrsqrt.pop %v842
      %v844 = vmul.f32 %v843, %v842
      %v845 = vmul.f32 %v844, %v843
      %v846 = vmul.f32 0.5, %v845
      %v847 = vsub.f32 1.5, %v846
      %v848 = vmul.f32 %v843, %v847
      %vm849 = vweird.f32 %v842
      %vm850 = vweird.f32 %v843
      %vm851 = vmor %vm849, %vm850
      %v852 = vsel %vm851, %v843, %v848
      %v853 = vmul.f32 %v836, %v852
      %v855 = vperm.slane %v830, 0
      %v857 = vmul.f32 %v853, %v855
      %v859 = vperm.slane %v831, 0
      %v861 = vadd.f32 %v857, %v859
      %v862 = vld [vmem:[%s10] sm:$0xf]
      %v863 = vld [vmem:[%s10 + $0x4] sm:$0xf]
      %v864 = vld [vmem:[%s10 + $0x8] sm:$0xf]
      %v865 = vld [vmem:[%s10 + $0xc] sm:$0xf]
      %v866 = vld [vmem:[%s11] sm:$0x1]
      %v867 = vpack.c.bf16 %v861, %v861
      %v869 = vperm.slane %v866, 0
      %v875 = vunpack.c.l.b16 %v862
      %v876 = vunpack.c.l.b16 %v863
      %v877 = vunpack.c.l.b16 %v864
      %v878 = vunpack.c.l.b16 %v865
      %v879 = vpack.c.b16 %v876, %v875
      %v880 = vpack.c.b16 %v878, %v877
      %v884 = vsel %vm590, %v867, 0
      %886 = vmatpush.bf16.msra.mxu0 0
      %887 = vmatpush.bf16.msra.mxu0 0
      %888 = vmatpush.bf16.msra.mxu0 0
      %889 = vmatpush.bf16.msra.mxu0 0
      %890 = vmatpush.bf16.msra.mxu0 0
      %891 = vmatpush.bf16.msra.mxu0 0
      %892 = vmatpush.bf16.msra.mxu0 %v880
      %893 = vmatpush.bf16.msra.mxu0 %v879
      %894 = vmatmul.bf16.gmra.mxu0 %v884
      %v895 = vpop.f32.mrf.mxu0
      %v896 = vadd.f32 %v869, %v895
      %v897 = vpop.f32.mrf.mxu0
      %898 = vdwg.mxu0
      %v899 = vmul.f32 %v896, 0.5
      %v900 = vmul.f32 %v896, 0.044715
      %v901 = vmul.f32 %v900, %v896
      %v902 = vmul.f32 %v901, %v896
      %v903 = vadd.f32 %v896, %v902
      %v904 = vmul.f32 %v903, 0.7978846
      %v905 = vtanh.pop %v904
      %v906 = vadd.f32 %v905, 1.0
      %v907 = vmul.f32 %v899, %v906
      %v908 = vld [vmem:[%s12] sm:$0xf]
      %v909 = vld [vmem:[%s12 + $0x4] sm:$0xf]
      %v910 = vld [vmem:[%s12 + $0x8] sm:$0xf]
      %v911 = vld [vmem:[%s12 + $0xc] sm:$0xf]
      %v912 = vld [vmem:[%s12 + $0x10] sm:$0xf]
      %v913 = vld [vmem:[%s12 + $0x14] sm:$0xf]
      %v914 = vld [vmem:[%s12 + $0x18] sm:$0xf]
      %v915 = vld [vmem:[%s12 + $0x1c] sm:$0xf]
      %v916 = vld [vmem:[%s13] sm:$0x1]
      %v917 = vpack.c.bf16 %v907, %v907
      %v919 = vperm.slane %v916, 0
      %v929 = vunpack.c.l.b16 %v908
      %v930 = vunpack.c.l.b16 %v909
      %v931 = vunpack.c.l.b16 %v910
      %v932 = vunpack.c.l.b16 %v911
      %v933 = vunpack.c.l.b16 %v912
      %v934 = vunpack.c.l.b16 %v913
      %v935 = vunpack.c.l.b16 %v914
      %v936 = vunpack.c.l.b16 %v915
      %v937 = vpack.c.b16 %v930, %v929
      %v938 = vpack.c.b16 %v932, %v931
      %v939 = vpack.c.b16 %v934, %v933
      %v940 = vpack.c.b16 %v936, %v935
      %vm945 = vcmask 523264
      %v947 = vsel %vm945, %v917, 0
      %949 = vmatpush.bf16.msra.mxu0 0
      %950 = vmatpush.bf16.msra.mxu0 0
      %951 = vmatpush.bf16.msra.mxu0 0
      %952 = vmatpush.bf16.msra.mxu0 0
      %953 = vmatpush.bf16.msra.mxu0 %v940
      %954 = vmatpush.bf16.msra.mxu0 %v939
      %955 = vmatpush.bf16.msra.mxu0 %v938
      %956 = vmatpush.bf16.msra.mxu0 %v937
      %957 = vmatmul.bf16.gmra.mxu0 %v947
      %v958 = vpop.f32.mrf.mxu0
      %v959 = vadd.f32 %v919, %v958
      %v960 = vpop.f32.mrf.mxu0
      %961 = vdwg.mxu0
      %v962 = vadd.f32 %v959, %v861
      %v963 = vld [vmem:[%s14] sm:$0x1]
      %v964 = vld [vmem:[%s15] sm:$0x1]
      %v965 = vsel %vm590, %v962, 0.0
      %966 = vadd.xlane.f32.xlu0 %v965
      %v967 = vpop.xlane.xlu0 %966
      %v968 = vmul.f32 %v967, %v600
      %v969 = vsub.f32 %v962, %v968
      %v970 = vmul.f32 %v969, %v969
      %v971 = vsel %vm590, %v970, 0.0
      %972 = vadd.xlane.f32.xlu0 %v971
      %v973 = vpop.xlane.xlu0 %972
      %v974 = vmul.f32 %v973, %v600
      %v975 = vadd.f32 %v974, 1e-12
      %v976 = vrsqrt.pop %v975
      %v977 = vmul.f32 %v976, %v975
      %v978 = vmul.f32 %v977, %v976
      %v979 = vmul.f32 0.5, %v978
      %v980 = vsub.f32 1.5, %v979
      %v981 = vmul.f32 %v976, %v980
      %vm982 = vweird.f32 %v975
      %vm983 = vweird.f32 %v976
      %vm984 = vmor %vm982, %vm983
      %v985 = vsel %vm984, %v976, %v981
      %v986 = vmul.f32 %v969, %v985
      %v988 = vperm.slane %v963, 0
      %v990 = vmul.f32 %v986, %v988
      %v992 = vperm.slane %v964, 0
      %v994 = vadd.f32 %v990, %v992
      %s995 = scalar_lea.vmem %s4, 16
      %v996 = vld [vmem:[%s995] sm:$0xf]
      %v997 = vld [vmem:[%s995 + $0x4] sm:$0xf]
      %v998 = vld [vmem:[%s995 + $0x8] sm:$0xf]
      %v999 = vld [vmem:[%s995 + $0xc] sm:$0xf]
      %s1000 = scalar_lea.vmem %s5, 1
      %v1001 = vld [vmem:[%s1000] sm:$0x1]
      %v1002 = vpack.c.bf16 %v994, %v994
      %v1004 = vperm.slane %v1001, 0
      %v1010 = vunpack.c.l.b16 %v996
      %v1011 = vunpack.c.l.b16 %v997
      %v1012 = vunpack.c.l.b16 %v998
      %v1013 = vunpack.c.l.b16 %v999
      %v1014 = vpack.c.b16 %v1011, %v1010
      %v1015 = vpack.c.b16 %v1013, %v1012
      %v1019 = vsel %vm590, %v1002, 0
      %1021 = vmatpush.bf16.msra.mxu0 0
      %1022 = vmatpush.bf16.msra.mxu0 0
      %1023 = vmatpush.bf16.msra.mxu0 0
      %1024 = vmatpush.bf16.msra.mxu0 0
      %1025 = vmatpush.bf16.msra.mxu0 0
      %1026 = vmatpush.bf16.msra.mxu0 0
      %1027 = vmatpush.bf16.msra.mxu0 %v1015
      %1028 = vmatpush.bf16.msra.mxu0 %v1014
      %1029 = vmatmul.bf16.gmra.mxu0 %v1019
      %v1030 = vpop.f32.mrf.mxu0
      %v1031 = vadd.f32 %v1004, %v1030
      %v1032 = vpop.f32.mrf.mxu0
      %1033 = vdwg.mxu0
      %v1034 = vpack.c.bf16 %v1031, %v1031
      %1036 = vrot.lane.b32.xlu0 %v1034, 96
      %v1037 = vpop.permute.xlu0 %1036
      %v1039 = vsel %vm669, %v1034, 0
      %v1042 = vsel %vm669, %v1037, 0
      %1044 = vmatpush.bf16.xpose.msra.mxu0 0
      %1045 = vmatpush.bf16.xpose.msra.mxu0 0
      %1046 = vmatpush.bf16.xpose.msra.mxu0 0
      %1047 = vmatpush.bf16.xpose.msra.mxu0 0
      %1048 = vmatpush.bf16.xpose.msra.mxu0 0
      %1049 = vmatpush.bf16.xpose.msra.mxu0 0
      %1050 = vmatpush.bf16.xpose.msra.mxu0 0
      %1051 = vmatpush.bf16.xpose.msra.mxu0 %v1042
      %1052 = vmatmul.bf16.gmra.mxu0 %v1039
      %v1053 = vpop.f32.mrf.mxu0
      %v1054 = vadd.f32 0.0, %v1053
      %v1055 = vpop.f32.mrf.mxu0
      %1056 = vdwg.mxu0
      %v1057 = vmul.f32 %v1054, 0.25
      %v1058 = vadd.f32 %v1057, %v691
      %v1059 = vsel %vm694, %v1058, -inf
      %1060 = vmax.xlane.f32.xlu0 %v1059
      %v1061 = vpop.xlane.xlu0 %1060
      %v1062 = vsub.f32 %v1058, %v1061
      %v1063 = vmul.f32 %v1062, 1.442695
      %v1064 = vpow.pop %v1063
      %v1065 = vsel %vm694, %v1064, 0.0
      %1066 = vadd.xlane.f32.xlu0 %v1065
      %v1067 = vpop.xlane.xlu0 %1066
      %v1068 = vrcp.pop %v1067
      %v1069 = vmul.f32 %v1064, %v1068
      %v1070 = vpack.c.bf16 %v1069, %v1069
      %1071 = vrot.lane.b32.xlu0 %v1034, 64
      %v1072 = vpop.permute.xlu0 %1071
      %v1074 = vsel %vm694, %v1070, 0
      %v1077 = vsel %vm712, %v1072, 0
      %1079 = vmatpush.bf16.msra.mxu0 0
      %1080 = vmatpush.bf16.msra.mxu0 0
      %1081 = vmatpush.bf16.msra.mxu0 0
      %1082 = vmatpush.bf16.msra.mxu0 0
      %1083 = vmatpush.bf16.msra.mxu0 0
      %1084 = vmatpush.bf16.msra.mxu0 0
      %1085 = vmatpush.bf16.msra.mxu0 0
      %1086 = vmatpush.bf16.msra.mxu0 %v1077
      %1087 = vmatmul.bf16.gmra.mxu0 %v1074
      %v1088 = vpop.f32.mrf.mxu0
      %v1089 = vadd.f32 0.0, %v1088
      %v1090 = vpop.f32.mrf.mxu0
      %1091 = vdwg.mxu0
      %1092 = vrot.lane.b32.xlu0 %v1034, 112
      %v1093 = vpop.permute.xlu0 %1092
      %1094 = vrot.lane.b32.xlu0 %v1034, 80
      %v1095 = vpop.permute.xlu0 %1094
      %v1097 = vsel %vm669, %v1093, 0
      %v1100 = vsel %vm669, %v1095, 0
      %1102 = vmatpush.bf16.xpose.msra.mxu0 0
      %1103 = vmatpush.bf16.xpose.msra.mxu0 0
      %1104 = vmatpush.bf16.xpose.msra.mxu0 0
      %1105 = vmatpush.bf16.xpose.msra.mxu0 0
      %1106 = vmatpush.bf16.xpose.msra.mxu0 0
      %1107 = vmatpush.bf16.xpose.msra.mxu0 0
      %1108 = vmatpush.bf16.xpose.msra.mxu0 0
      %1109 = vmatpush.bf16.xpose.msra.mxu0 %v1100
      %1110 = vmatmul.bf16.gmra.mxu0 %v1097
      %v1111 = vpop.f32.mrf.mxu0
      %v1112 = vadd.f32 0.0, %v1111
      %v1113 = vpop.f32.mrf.mxu0
      %1114 = vdwg.mxu0
      %v1115 = vmul.f32 %v1112, 0.25
      %v1116 = vadd.f32 %v1115, %v691
      %v1117 = vsel %vm694, %v1116, -inf
      %1118 = vmax.xlane.f32.xlu0 %v1117
      %v1119 = vpop.xlane.xlu0 %1118
      %v1120 = vsub.f32 %v1116, %v1119
      %v1121 = vmul.f32 %v1120, 1.442695
      %v1122 = vpow.pop %v1121
      %v1123 = vsel %vm694, %v1122, 0.0
      %1124 = vadd.xlane.f32.xlu0 %v1123
      %v1125 = vpop.xlane.xlu0 %1124
      %v1126 = vrcp.pop %v1125
      %v1127 = vmul.f32 %v1122, %v1126
      %v1128 = vpack.c.bf16 %v1127, %v1127
      %1129 = vrot.lane.b32.xlu0 %v1034, 48
      %v1130 = vpop.permute.xlu0 %1129
      %v1132 = vsel %vm694, %v1128, 0
      %v1135 = vsel %vm712, %v1130, 0
      %1137 = vmatpush.bf16.msra.mxu0 0
      %1138 = vmatpush.bf16.msra.mxu0 0
      %1139 = vmatpush.bf16.msra.mxu0 0
      %1140 = vmatpush.bf16.msra.mxu0 0
      %1141 = vmatpush.bf16.msra.mxu0 0
      %1142 = vmatpush.bf16.msra.mxu0 0
      %1143 = vmatpush.bf16.msra.mxu0 0
      %1144 = vmatpush.bf16.msra.mxu0 %v1135
      %1145 = vmatmul.bf16.gmra.mxu0 %v1132
      %v1146 = vpop.f32.mrf.mxu0
      %v1147 = vadd.f32 0.0, %v1146
      %v1148 = vpop.f32.mrf.mxu0
      %1149 = vdwg.mxu0
      %1151 = vrot.lane.b32.xlu0 %v1147, 16
      %v1152 = vpop.permute.xlu0 %1151
      %v1154 = vsel %vm669, %v1089, %v1152
      %s1155 = scalar_lea.vmem %s6, 16
      %v1156 = vld [vmem:[%s1155] sm:$0xf]
      %v1157 = vld [vmem:[%s1155 + $0x4] sm:$0xf]
      %v1158 = vld [vmem:[%s1155 + $0x8] sm:$0xf]
      %v1159 = vld [vmem:[%s1155 + $0xc] sm:$0xf]
      %s1160 = scalar_lea.vmem %s7, 1
      %v1161 = vld [vmem:[%s1160] sm:$0x1]
      %v1162 = vpack.c.bf16 %v1154, %v1154
      %v1164 = vperm.slane %v1161, 0
      %v1170 = vunpack.c.l.b16 %v1156
      %v1171 = vunpack.c.l.b16 %v1157
      %v1172 = vunpack.c.l.b16 %v1158
      %v1173 = vunpack.c.l.b16 %v1159
      %v1174 = vpack.c.b16 %v1171, %v1170
      %v1175 = vpack.c.b16 %v1173, %v1172
      %v1179 = vsel %vm590, %v1162, 0
      %1181 = vmatpush.bf16.msra.mxu0 0
      %1182 = vmatpush.bf16.msra.mxu0 0
      %1183 = vmatpush.bf16.msra.mxu0 0
      %1184 = vmatpush.bf16.msra.mxu0 0
      %1185 = vmatpush.bf16.msra.mxu0 0
      %1186 = vmatpush.bf16.msra.mxu0 0
      %1187 = vmatpush.bf16.msra.mxu0 %v1175
      %1188 = vmatpush.bf16.msra.mxu0 %v1174
      %1189 = vmatmul.bf16.gmra.mxu0 %v1179
      %v1190 = vpop.f32.mrf.mxu0
      %v1191 = vadd.f32 %v1164, %v1190
      %v1192 = vpop.f32.mrf.mxu0
      %1193 = vdwg.mxu0
      %v1194 = vadd.f32 %v1191, %v994
      %s1195 = scalar_lea.vmem %s8, 1
      %v1196 = vld [vmem:[%s1195] sm:$0x1]
      %s1197 = scalar_lea.vmem %s9, 1
      %v1198 = vld [vmem:[%s1197] sm:$0x1]
      %v1199 = vsel %vm590, %v1194, 0.0
      %1200 = vadd.xlane.f32.xlu0 %v1199
      %v1201 = vpop.xlane.xlu0 %1200
      %v1202 = vmul.f32 %v1201, %v600
      %v1203 = vsub.f32 %v1194, %v1202
      %v1204 = vmul.f32 %v1203, %v1203
      %v1205 = vsel %vm590, %v1204, 0.0
      %1206 = vadd.xlane.f32.xlu0 %v1205
      %v1207 = vpop.xlane.xlu0 %1206
      %v1208 = vmul.f32 %v1207, %v600
      %v1209 = vadd.f32 %v1208, 1e-12
      %v1210 = vrsqrt.pop %v1209
      %v1211 = vmul.f32 %v1210, %v1209
      %v1212 = vmul.f32 %v1211, %v1210
      %v1213 = vmul.f32 0.5, %v1212
      %v1214 = vsub.f32 1.5, %v1213
      %v1215 = vmul.f32 %v1210, %v1214
      %vm1216 = vweird.f32 %v1209
      %vm1217 = vweird.f32 %v1210
      %vm1218 = vmor %vm1216, %vm1217
      %v1219 = vsel %vm1218, %v1210, %v1215
      %v1220 = vmul.f32 %v1203, %v1219
      %v1222 = vperm.slane %v1196, 0
      %v1224 = vmul.f32 %v1220, %v1222
      %v1226 = vperm.slane %v1198, 0
      %v1228 = vadd.f32 %v1224, %v1226
      %s1229 = scalar_lea.vmem %s10, 16
      %v1230 = vld [vmem:[%s1229] sm:$0xf]
      %v1231 = vld [vmem:[%s1229 + $0x4] sm:$0xf]
      %v1232 = vld [vmem:[%s1229 + $0x8] sm:$0xf]
      %v1233 = vld [vmem:[%s1229 + $0xc] sm:$0xf]
      %s1234 = scalar_lea.vmem %s11, 1
      %v1235 = vld [vmem:[%s1234] sm:$0x1]
      %v1236 = vpack.c.bf16 %v1228, %v1228
      %v1238 = vperm.slane %v1235, 0
      %v1244 = vunpack.c.l.b16 %v1230
      %v1245 = vunpack.c.l.b16 %v1231
      %v1246 = vunpack.c.l.b16 %v1232
      %v1247 = vunpack.c.l.b16 %v1233
      %v1248 = vpack.c.b16 %v1245, %v1244
      %v1249 = vpack.c.b16 %v1247, %v1246
      %v1253 = vsel %vm590, %v1236, 0
      %1255 = vmatpush.bf16.msra.mxu0 0
      %1256 = vmatpush.bf16.msra.mxu0 0
      %1257 = vmatpush.bf16.msra.mxu0 0
      %1258 = vmatpush.bf16.msra.mxu0 0
      %1259 = vmatpush.bf16.msra.mxu0 0
      %1260 = vmatpush.bf16.msra.mxu0 0
      %1261 = vmatpush.bf16.msra.mxu0 %v1249
      %1262 = vmatpush.bf16.msra.mxu0 %v1248
      %1263 = vmatmul.bf16.gmra.mxu0 %v1253
      %v1264 = vpop.f32.mrf.mxu0
      %v1265 = vadd.f32 %v1238, %v1264
      %v1266 = vpop.f32.mrf.mxu0
      %1267 = vdwg.mxu0
      %v1268 = vmul.f32 %v1265, 0.5
      %v1269 = vmul.f32 %v1265, 0.044715
      %v1270 = vmul.f32 %v1269, %v1265
      %v1271 = vmul.f32 %v1270, %v1265
      %v1272 = vadd.f32 %v1265, %v1271
      %v1273 = vmul.f32 %v1272, 0.7978846
      %v1274 = vtanh.pop %v1273
      %v1275 = vadd.f32 %v1274, 1.0
      %v1276 = vmul.f32 %v1268, %v1275
      %s1277 = scalar_lea.vmem %s12, 32
      %v1278 = vld [vmem:[%s1277] sm:$0xf]
      %v1279 = vld [vmem:[%s1277 + $0x4] sm:$0xf]
      %v1280 = vld [vmem:[%s1277 + $0x8] sm:$0xf]
      %v1281 = vld [vmem:[%s1277 + $0xc] sm:$0xf]
      %v1282 = vld [vmem:[%s1277 + $0x10] sm:$0xf]
      %v1283 = vld [vmem:[%s1277 + $0x14] sm:$0xf]
      %v1284 = vld [vmem:[%s1277 + $0x18] sm:$0xf]
      %v1285 = vld [vmem:[%s1277 + $0x1c] sm:$0xf]
      %s1286 = scalar_lea.vmem %s13, 1
      %v1287 = vld [vmem:[%s1286] sm:$0x1]
      %v1288 = vpack.c.bf16 %v1276, %v1276
      %v1290 = vperm.slane %v1287, 0
      %v1300 = vunpack.c.l.b16 %v1278
      %v1301 = vunpack.c.l.b16 %v1279
      %v1302 = vunpack.c.l.b16 %v1280
      %v1303 = vunpack.c.l.b16 %v1281
      %v1304 = vunpack.c.l.b16 %v1282
      %v1305 = vunpack.c.l.b16 %v1283
      %v1306 = vunpack.c.l.b16 %v1284
      %v1307 = vunpack.c.l.b16 %v1285
      %v1308 = vpack.c.b16 %v1301, %v1300
      %v1309 = vpack.c.b16 %v1303, %v1302
      %v1310 = vpack.c.b16 %v1305, %v1304
      %v1311 = vpack.c.b16 %v1307, %v1306
      %v1317 = vsel %vm945, %v1288, 0
      %1319 = vmatpush.bf16.msra.mxu0 0
      %1320 = vmatpush.bf16.msra.mxu0 0
      %1321 = vmatpush.bf16.msra.mxu0 0
      %1322 = vmatpush.bf16.msra.mxu0 0
      %1323 = vmatpush.bf16.msra.mxu0 %v1311
      %1324 = vmatpush.bf16.msra.mxu0 %v1310
      %1325 = vmatpush.bf16.msra.mxu0 %v1309
      %1326 = vmatpush.bf16.msra.mxu0 %v1308
      %1327 = vmatmul.bf16.gmra.mxu0 %v1317
      %v1328 = vpop.f32.mrf.mxu0
      %v1329 = vadd.f32 %v1290, %v1328
      %v1330 = vpop.f32.mrf.mxu0
      %1331 = vdwg.mxu0
      %v1332 = vadd.f32 %v1329, %v1228
      %s1333 = scalar_lea.vmem %s14, 1
      %v1334 = vld [vmem:[%s1333] sm:$0x1]
      %s1335 = scalar_lea.vmem %s15, 1
      %v1336 = vld [vmem:[%s1335] sm:$0x1]
      %v1337 = vsel %vm590, %v1332, 0.0
      %1338 = vadd.xlane.f32.xlu0 %v1337
      %v1339 = vpop.xlane.xlu0 %1338
      %v1340 = vmul.f32 %v1339, %v600
      %v1341 = vsub.f32 %v1332, %v1340
      %v1342 = vmul.f32 %v1341, %v1341
      %v1343 = vsel %vm590, %v1342, 0.0
      %1344 = vadd.xlane.f32.xlu0 %v1343
      %v1345 = vpop.xlane.xlu0 %1344
      %v1346 = vmul.f32 %v1345, %v600
      %v1347 = vadd.f32 %v1346, 1e-12
      %v1348 = vrsqrt.pop %v1347
      %v1349 = vmul.f32 %v1348, %v1347
      %v1350 = vmul.f32 %v1349, %v1348
      %v1351 = vmul.f32 0.5, %v1350
      %v1352 = vsub.f32 1.5, %v1351
      %v1353 = vmul.f32 %v1348, %v1352
      %vm1354 = vweird.f32 %v1347
      %vm1355 = vweird.f32 %v1348
      %vm1356 = vmor %vm1354, %vm1355
      %v1357 = vsel %vm1356, %v1348, %v1353
      %v1358 = vmul.f32 %v1341, %v1357
      %v1360 = vperm.slane %v1334, 0
      %v1362 = vmul.f32 %v1358, %v1360
      %v1364 = vperm.slane %v1336, 0
      %v1366 = vadd.f32 %v1362, %v1364
      %v1367 = vld [vmem:[%s16] sm:$0xf]
      %v1368 = vld [vmem:[%s16 + $0x4] sm:$0xf]
      %v1369 = vld [vmem:[%s16 + $0x8] sm:$0xf]
      %v1370 = vld [vmem:[%s16 + $0xc] sm:$0xf]
      %v1371 = vld [vmem:[%s17] sm:$0x1]
      %v1372 = vpack.c.bf16 %v1366, %v1366
      %v1374 = vperm.slane %v1371, 0
      %v1380 = vunpack.c.l.b16 %v1367
      %v1381 = vunpack.c.l.b16 %v1368
      %v1382 = vunpack.c.l.b16 %v1369
      %v1383 = vunpack.c.l.b16 %v1370
      %v1384 = vpack.c.b16 %v1381, %v1380
      %v1385 = vpack.c.b16 %v1383, %v1382
      %v1389 = vsel %vm590, %v1372, 0
      %1391 = vmatpush.bf16.msra.mxu0 0
      %1392 = vmatpush.bf16.msra.mxu0 0
      %1393 = vmatpush.bf16.msra.mxu0 0
      %1394 = vmatpush.bf16.msra.mxu0 0
      %1395 = vmatpush.bf16.msra.mxu0 0
      %1396 = vmatpush.bf16.msra.mxu0 0
      %1397 = vmatpush.bf16.msra.mxu0 %v1385
      %1398 = vmatpush.bf16.msra.mxu0 %v1384
      %1399 = vmatmul.bf16.gmra.mxu0 %v1389
      %v1400 = vpop.f32.mrf.mxu0
      %v1401 = vadd.f32 %v1374, %v1400
      %v1402 = vpop.f32.mrf.mxu0
      %1403 = vdwg.mxu0
      %1404 = vst.msk [vmem:[%s584] sm:$0xff] %vm694, %v1401
      %p1405 = scmp.lt.s32.totalorder %s29, 1
      %s1406 = scalar_select %p1405, %s29, 1
      %s1407 = smul.addr %s1406, 8
      %s1408 = scalar_lea.vmem %s18, %s1407
      // Predicated region
      $region93: #{bert_crf_forward.2} parent=91 // pred_check
        %p1409 = pneg %p435
      $region94: #{bert_crf_forward.2} parent=91 // pred_check_branch
        %1411 = sbr.rel (%p1409) target = $region96
      $region95: #{bert_crf_forward.2} parent=91 // pred_region
        _
      $region96: #{bert_crf_forward.2} parent=91 // pred_fallthru
        _
    $region92: #{bert_crf_forward.2} parent=5 // pred_fallthru
      _
    %p1412 = scmp.le.s32.totalorder 2, %s24
    // Predicated region
    $region97: #{bert_crf_forward.2} parent=5 // pred_check
      %p1413 = pneg %p1412
    $region98: #{bert_crf_forward.2} parent=5 // pred_check_branch
      %1415 = sbr.rel (%p1413) target = $region100
    $region99: #{bert_crf_forward.2} parent=5 // pred_region
      %s1416 = ssub.s32 %s24, 2
      // Predicated region
      $region101: #{bert_crf_forward.2} parent=99 // pred_check
        %p1417 = pneg %p441
      $region102: #{bert_crf_forward.2} parent=99 // pred_check_branch
        %1419 = sbr.rel (%p1417) target = $region104
      $region103: #{bert_crf_forward.2} parent=99 // pred_region
        %p1420 = scmp.lt.s32.totalorder %s30, 1
        %s1421 = scalar_select %p1420, %s30, 1
        %s1422 = smul.addr %s1421, 8
        %s1423 = scalar_lea.vmem %s18, %s1422
      $region104: #{bert_crf_forward.2} parent=99 // pred_fallthru
        _
    $region100: #{bert_crf_forward.2} parent=5 // pred_fallthru
      _
  $region6: #{bert_crf_forward.2} parent=0 // loop_footer
    %s28 = sadd.s32 1, %s24
  $region7: #{bert_crf_forward.2} parent=0 // loop_footer_branch
    %23 = sbr.rel target = $region3
  $region8: #{bert_crf_forward.2} parent=0 // loop_exit
    _

</llo_original>
